<compile_context>
chip_gen: v7x
topology: tpu7x:2x2x1
jax: 0.10.0
libtpu: 0.0.40
codegen_flags: <defaults>
</compile_context>

<pallas_src>
import functools

import jax
import jax.numpy as jnp
from jax import lax
from jax.experimental import pallas as pl
from jax.experimental.pallas import tpu as pltpu


def _mha_kernel(x_ref, wqkvt_ref, wpt_ref, bp_ref, o_ref, acc_ref, *,
                num_heads):
    # x_ref block: (Bt, N, C). Pre-transposed weights resident in VMEM.
    Bt, N, C = x_ref.shape
    H = num_heads
    Dh = C // H
    M = Bt * N
    in_dt = x_ref.dtype

    # Fused QKV projection over all rows of this block: (M, C) @ (C, 3C).
    # Native-dtype operands, f32 accumulation.
    x = x_ref[...].reshape(M, C)
    qkv = jnp.dot(x, wqkvt_ref[...],
                  preferred_element_type=jnp.float32)               # (M, 3C) f32

    # Per-(batch, head) attention with static lane slices; no transposes.
    # The softmax scale is already folded into the Q weight columns, so q
    # arrives pre-scaled from the matmul above.
    for b in range(Bt):
        r0 = b * N
        qkv_b = qkv[r0:r0 + N, :]                                   # (N, 3C)
        for h in range(H):
            c0 = h * Dh
            q = qkv_b[:, c0:c0 + Dh].astype(in_dt)                  # (N, Dh), scaled
            k = qkv_b[:, C + c0:C + c0 + Dh].astype(in_dt)          # (N, Dh)
            v = qkv_b[:, 2 * C + c0:2 * C + c0 + Dh].astype(in_dt)  # (N, Dh)

            # scores = q @ k^T  (contract dim 1 of both -> no transpose op)
            s = lax.dot_general(q, k, (((1,), (1,)), ((), ())),
                                preferred_element_type=jnp.float32)  # (N, N)

            # Numerically stable softmax; divide via EUP approx reciprocal.
            m = jnp.max(s, axis=-1, keepdims=True)
            p = jnp.exp(s - m)
            denom = jnp.sum(p, axis=-1, keepdims=True)
            p = p * pl.reciprocal(denom, approx=True)

            # attn @ v -> write straight into the merged (M, C) scratch at
            # lane offset h*Dh (replaces transpose(1, 2).reshape(B, N, C)).
            av = jnp.dot(p.astype(in_dt), v,
                         preferred_element_type=jnp.float32)         # (N, Dh)
            acc_ref[r0:r0 + N, c0:c0 + Dh] = av.astype(acc_ref.dtype)

    # Output projection (pre-transposed weight) + bias over all M rows at once.
    y = jnp.dot(acc_ref[...], wpt_ref[...],
                preferred_element_type=jnp.float32)
    y = y + bp_ref[0].astype(jnp.float32)
    o_ref[...] = y.reshape(Bt, N, C).astype(o_ref.dtype)


def _pick_block_b(B, N, C, itemsize, budget_bytes=40 * 1024 * 1024):
    """Largest divisor of B (<= 8) whose per-step VMEM footprint fits budget."""
    best = 1
    for cand in range(1, min(B, 8) + 1):
        if B % cand:
            continue
        act = cand * N * C * itemsize                      # one activation block
        weights = (C * 3 * C + C * C + C) * itemsize * 2   # (double-buffered)
        f32_interm = cand * N * 3 * C * 4 + 3 * N * N * 4  # qkv value + scores
        total = 2 * act + 2 * act + act + weights + f32_interm
        if total <= budget_bytes:
            best = cand
    return best


def multi_head_attention(x, wqkv, wp, bp, *, num_heads, qk_scale=None,
                         block_b=None):
    """x: (B, N, C); wqkv: (3C, C); wp: (C, C); bp: (C,)  (torch Linear layout)."""
    B, N, C = x.shape
    head_dim = C // num_heads
    scale = qk_scale if qk_scale is not None else head_dim ** (-0.5)

    # One-time weight prep outside the kernel (per call under jit, O(C^2)):
    #   * fold the softmax scale into the Q rows of the qkv weight,
    #   * pre-transpose so the kernel does plain row-major matmuls with no
    #     in-kernel .T / XLU relayout.
    wqkv_scaled = wqkv.at[:C, :].multiply(jnp.asarray(scale, wqkv.dtype))
    wqkv_t = jnp.transpose(wqkv_scaled)   # (C, 3C)
    wp_t = jnp.transpose(wp)              # (C, C)
    bp2 = bp.reshape(1, C)

    if block_b is None:
        block_b = _pick_block_b(B, N, C, jnp.dtype(x.dtype).itemsize)
    grid = (B // block_b,)

    kernel = functools.partial(_mha_kernel, num_heads=num_heads)

    return pl.pallas_call(
        kernel,
        out_shape=jax.ShapeDtypeStruct((B, N, C), x.dtype),
        grid_spec=pltpu.PrefetchScalarGridSpec(
            num_scalar_prefetch=0,
            grid=grid,
            in_specs=[
                pl.BlockSpec((block_b, N, C), lambda b: (b, 0, 0)),
                pl.BlockSpec((C, 3 * C), lambda b: (0, 0)),
                pl.BlockSpec((C, C), lambda b: (0, 0)),
                pl.BlockSpec((1, C), lambda b: (0, 0)),
            ],
            out_specs=pl.BlockSpec((block_b, N, C), lambda b: (b, 0, 0)),
            scratch_shapes=[pltpu.VMEM((block_b * N, C), x.dtype)],
        ),
        compiler_params=pltpu.CompilerParams(
            dimension_semantics=("parallel",),
            vmem_limit_bytes=64 * 1024 * 1024,
        ),
    )(x, wqkv_t, wp_t, bp2)


def _reference(x, wqkv, wp, bp, *, num_heads, qk_scale=None):
    """Pure-JAX replica of the PyTorch forward (for verification)."""
    B, N, C = x.shape
    H = num_heads
    Dh = C // H
    scale = qk_scale if qk_scale is not None else Dh ** (-0.5)
    xf = x.astype(jnp.float32)
    qkv = jnp.einsum('bnc,oc->bno', xf, wqkv.astype(jnp.float32))
    qkv = qkv.reshape(B, N, 3, H, Dh).transpose(2, 0, 3, 1, 4)
    q, k, v = qkv[0], qkv[1], qkv[2]
    attn = jnp.einsum('bhnd,bhmd->bhnm', q, k) * scale
    attn = jax.nn.softmax(attn, axis=-1)
    out = jnp.einsum('bhnm,bhmd->bhnd', attn, v)
    out = out.transpose(0, 2, 1, 3).reshape(B, N, C)
    y = jnp.einsum('bnc,oc->bno', out, wp.astype(jnp.float32)) + bp
    return y.astype(x.dtype)


if __name__ == "__main__":
    B, N, C = 2, 8, 32
    num_heads = 8

    key = jax.random.PRNGKey(0)
    kx, kqkv, kwp, kbp = jax.random.split(key, 4)

    x = jax.random.normal(kx, (B, N, C), dtype=jnp.float32)
    # Deterministic "Linear" parameters (qkv has no bias, proj has bias).
    wqkv = jax.random.normal(kqkv, (3 * C, C), dtype=jnp.float32) * 0.05
    wp = jax.random.normal(kwp, (C, C), dtype=jnp.float32) * 0.05
    bp = jax.random.normal(kbp, (C,), dtype=jnp.float32) * 0.05

    out = multi_head_attention(x, wqkv, wp, bp, num_heads=num_heads)
    out = jax.block_until_ready(out)

    ref = _reference(x, wqkv, wp, bp, num_heads=num_heads)
    assert out.shape == (B, N, C)
    # Slightly looser tolerance than pure f32 divide: softmax uses the EUP
    # approximate reciprocal (pl.reciprocal(..., approx=True)).
    assert jnp.allclose(out, ref, atol=2e-3, rtol=2e-3), "mismatch vs reference"

    print("KERNEL_OK")
</pallas_src>

<mosaic_0001>
module attributes {stable_mosaic.version = 11 : i64} {
  func.func @_mha_kernel(%arg0: i32, %arg1: memref<2x8x32xf32, #tpu.memory_space<vmem>>, %arg2: memref<32x96xf32, #tpu.memory_space<vmem>>, %arg3: memref<32x32xf32, #tpu.memory_space<vmem>>, %arg4: memref<1x32xf32, #tpu.memory_space<vmem>>, %arg5: memref<2x8x32xf32, #tpu.memory_space<vmem>>, %arg6: memref<16x32xf32, #tpu.memory_space<vmem>>) attributes {dimension_semantics = [#tpu.dimension_semantics<parallel>], iteration_bounds = array<i64: 1>, scalar_prefetch = 0 : i64, scratch_operands = 1 : i64, tpu.core_type = #tpu.core_type<tc>, window_params = [{transform_indices = @transform_0, window_bounds = array<i64: 2, 8, 32>}, {pipeline_mode = #tpu.pipeline_mode<synchronous>, transform_indices = @transform_1, window_bounds = array<i64: 32, 96>}, {pipeline_mode = #tpu.pipeline_mode<synchronous>, transform_indices = @transform_2, window_bounds = array<i64: 32, 32>}, {pipeline_mode = #tpu.pipeline_mode<synchronous>, transform_indices = @transform_3, window_bounds = array<i64: 1, 32>}, {transform_indices = @transform_4, window_bounds = array<i64: 2, 8, 32>}]} {
    %c0 = arith.constant 0 : index
    %c0_0 = arith.constant 0 : index
    %c0_1 = arith.constant 0 : index
    %0 = vector.load %arg1[%c0, %c0_0, %c0_1] : memref<2x8x32xf32, #tpu.memory_space<vmem>>, vector<2x8x32xf32>
    %1 = vector.shape_cast %0 : vector<2x8x32xf32> to vector<16x32xf32>
    %c0_2 = arith.constant 0 : index
    %c0_3 = arith.constant 0 : index
    %2 = vector.load %arg2[%c0_2, %c0_3] : memref<32x96xf32, #tpu.memory_space<vmem>>, vector<32x96xf32>
    %cst = arith.constant dense<0.000000e+00> : vector<16x96xf32>
    %3 = tpu.matmul %1, %2, %cst {dimension_numbers = #tpu.dot_dimension_numbers<[1], [0], [0], [1], [0, 0, 1, 1], [], []>} : vector<16x32xf32>, vector<32x96xf32>, vector<16x96xf32> -> vector<16x96xf32>
    %4 = vector.extract_strided_slice %3 {offsets = [0, 0], sizes = [8, 96], strides = [1, 1]} : vector<16x96xf32> to vector<8x96xf32>
    %5 = vector.extract_strided_slice %4 {offsets = [0, 0], sizes = [8, 4], strides = [1, 1]} : vector<8x96xf32> to vector<8x4xf32>
    %6 = vector.extract_strided_slice %4 {offsets = [0, 32], sizes = [8, 4], strides = [1, 1]} : vector<8x96xf32> to vector<8x4xf32>
    %7 = vector.extract_strided_slice %4 {offsets = [0, 64], sizes = [8, 4], strides = [1, 1]} : vector<8x96xf32> to vector<8x4xf32>
    %cst_4 = arith.constant dense<0.000000e+00> : vector<8x8xf32>
    %8 = tpu.matmul %5, %6, %cst_4 {dimension_numbers = #tpu.dot_dimension_numbers<[1], [1], [0], [0], [0, 0, 1, 0], [], []>} : vector<8x4xf32>, vector<8x4xf32>, vector<8x8xf32> -> vector<8x8xf32>
    %cst_5 = arith.constant dense<0xFF800000> : vector<8xf32>
    %9 = vector.multi_reduction <maximumf>, %8, %cst_5 [1] : vector<8x8xf32> to vector<8xf32>
    %10 = vector.shape_cast %9 : vector<8xf32> to vector<8x1xf32>
    %11 = vector.broadcast %10 : vector<8x1xf32> to vector<8x8xf32>
    %12 = arith.subf %8, %11 : vector<8x8xf32>
    %13 = math.exp %12 : vector<8x8xf32>
    %cst_6 = arith.constant dense<0.000000e+00> : vector<8xf32>
    %14 = vector.multi_reduction <add>, %13, %cst_6 [1] : vector<8x8xf32> to vector<8xf32>
    %15 = vector.shape_cast %14 : vector<8xf32> to vector<8x1xf32>
    %16 = tpu.reciprocal %15 {approx = true} : vector<8x1xf32> -> vector<8x1xf32>
    %17 = vector.broadcast %16 : vector<8x1xf32> to vector<8x8xf32>
    %18 = arith.mulf %13, %17 : vector<8x8xf32>
    %cst_7 = arith.constant dense<0.000000e+00> : vector<8x4xf32>
    %19 = tpu.matmul %18, %7, %cst_7 {dimension_numbers = #tpu.dot_dimension_numbers<[1], [0], [0], [1], [0, 0, 1, 1], [], []>} : vector<8x8xf32>, vector<8x4xf32>, vector<8x4xf32> -> vector<8x4xf32>
    %c0_8 = arith.constant 0 : index
    %c0_9 = arith.constant 0 : index
    %20 = vector.load %arg6[%c0_8, %c0_9] : memref<16x32xf32, #tpu.memory_space<vmem>>, vector<8x4xf32>
    tpu.vector_store %arg6[%c0_8, %c0_9], %19 {strides = array<i32>} : memref<16x32xf32, #tpu.memory_space<vmem>>, vector<8x4xf32>,
    %21 = vector.extract_strided_slice %4 {offsets = [0, 4], sizes = [8, 4], strides = [1, 1]} : vector<8x96xf32> to vector<8x4xf32>
    %22 = vector.extract_strided_slice %4 {offsets = [0, 36], sizes = [8, 4], strides = [1, 1]} : vector<8x96xf32> to vector<8x4xf32>
    %23 = vector.extract_strided_slice %4 {offsets = [0, 68], sizes = [8, 4], strides = [1, 1]} : vector<8x96xf32> to vector<8x4xf32>
    %cst_10 = arith.constant dense<0.000000e+00> : vector<8x8xf32>
    %24 = tpu.matmul %21, %22, %cst_10 {dimension_numbers = #tpu.dot_dimension_numbers<[1], [1], [0], [0], [0, 0, 1, 0], [], []>} : vector<8x4xf32>, vector<8x4xf32>, vector<8x8xf32> -> vector<8x8xf32>
    %cst_11 = arith.constant dense<0xFF800000> : vector<8xf32>
    %25 = vector.multi_reduction <maximumf>, %24, %cst_11 [1] : vector<8x8xf32> to vector<8xf32>
    %26 = vector.shape_cast %25 : vector<8xf32> to vector<8x1xf32>
    %27 = vector.broadcast %26 : vector<8x1xf32> to vector<8x8xf32>
    %28 = arith.subf %24, %27 : vector<8x8xf32>
    %29 = math.exp %28 : vector<8x8xf32>
    %cst_12 = arith.constant dense<0.000000e+00> : vector<8xf32>
    %30 = vector.multi_reduction <add>, %29, %cst_12 [1] : vector<8x8xf32> to vector<8xf32>
    %31 = vector.shape_cast %30 : vector<8xf32> to vector<8x1xf32>
    %32 = tpu.reciprocal %31 {approx = true} : vector<8x1xf32> -> vector<8x1xf32>
    %33 = vector.broadcast %32 : vector<8x1xf32> to vector<8x8xf32>
    %34 = arith.mulf %29, %33 : vector<8x8xf32>
    %cst_13 = arith.constant dense<0.000000e+00> : vector<8x4xf32>
    %35 = tpu.matmul %34, %23, %cst_13 {dimension_numbers = #tpu.dot_dimension_numbers<[1], [0], [0], [1], [0, 0, 1, 1], [], []>} : vector<8x8xf32>, vector<8x4xf32>, vector<8x4xf32> -> vector<8x4xf32>
    %c0_14 = arith.constant 0 : index
    %c4 = arith.constant 4 : index
    %36 = vector.load %arg6[%c0_14, %c4] : memref<16x32xf32, #tpu.memory_space<vmem>>, vector<8x4xf32>
    tpu.vector_store %arg6[%c0_14, %c4], %35 {strides = array<i32>} : memref<16x32xf32, #tpu.memory_space<vmem>>, vector<8x4xf32>,
    %37 = vector.extract_strided_slice %4 {offsets = [0, 8], sizes = [8, 4], strides = [1, 1]} : vector<8x96xf32> to vector<8x4xf32>
    %38 = vector.extract_strided_slice %4 {offsets = [0, 40], sizes = [8, 4], strides = [1, 1]} : vector<8x96xf32> to vector<8x4xf32>
    %39 = vector.extract_strided_slice %4 {offsets = [0, 72], sizes = [8, 4], strides = [1, 1]} : vector<8x96xf32> to vector<8x4xf32>
    %cst_15 = arith.constant dense<0.000000e+00> : vector<8x8xf32>
    %40 = tpu.matmul %37, %38, %cst_15 {dimension_numbers = #tpu.dot_dimension_numbers<[1], [1], [0], [0], [0, 0, 1, 0], [], []>} : vector<8x4xf32>, vector<8x4xf32>, vector<8x8xf32> -> vector<8x8xf32>
    %cst_16 = arith.constant dense<0xFF800000> : vector<8xf32>
    %41 = vector.multi_reduction <maximumf>, %40, %cst_16 [1] : vector<8x8xf32> to vector<8xf32>
    %42 = vector.shape_cast %41 : vector<8xf32> to vector<8x1xf32>
    %43 = vector.broadcast %42 : vector<8x1xf32> to vector<8x8xf32>
    %44 = arith.subf %40, %43 : vector<8x8xf32>
    %45 = math.exp %44 : vector<8x8xf32>
    %cst_17 = arith.constant dense<0.000000e+00> : vector<8xf32>
    %46 = vector.multi_reduction <add>, %45, %cst_17 [1] : vector<8x8xf32> to vector<8xf32>
    %47 = vector.shape_cast %46 : vector<8xf32> to vector<8x1xf32>
    %48 = tpu.reciprocal %47 {approx = true} : vector<8x1xf32> -> vector<8x1xf32>
    %49 = vector.broadcast %48 : vector<8x1xf32> to vector<8x8xf32>
    %50 = arith.mulf %45, %49 : vector<8x8xf32>
    %cst_18 = arith.constant dense<0.000000e+00> : vector<8x4xf32>
    %51 = tpu.matmul %50, %39, %cst_18 {dimension_numbers = #tpu.dot_dimension_numbers<[1], [0], [0], [1], [0, 0, 1, 1], [], []>} : vector<8x8xf32>, vector<8x4xf32>, vector<8x4xf32> -> vector<8x4xf32>
    %c0_19 = arith.constant 0 : index
    %c8 = arith.constant 8 : index
    %52 = vector.load %arg6[%c0_19, %c8] : memref<16x32xf32, #tpu.memory_space<vmem>>, vector<8x4xf32>
    tpu.vector_store %arg6[%c0_19, %c8], %51 {strides = array<i32>} : memref<16x32xf32, #tpu.memory_space<vmem>>, vector<8x4xf32>,
    %53 = vector.extract_strided_slice %4 {offsets = [0, 12], sizes = [8, 4], strides = [1, 1]} : vector<8x96xf32> to vector<8x4xf32>
    %54 = vector.extract_strided_slice %4 {offsets = [0, 44], sizes = [8, 4], strides = [1, 1]} : vector<8x96xf32> to vector<8x4xf32>
    %55 = vector.extract_strided_slice %4 {offsets = [0, 76], sizes = [8, 4], strides = [1, 1]} : vector<8x96xf32> to vector<8x4xf32>
    %cst_20 = arith.constant dense<0.000000e+00> : vector<8x8xf32>
    %56 = tpu.matmul %53, %54, %cst_20 {dimension_numbers = #tpu.dot_dimension_numbers<[1], [1], [0], [0], [0, 0, 1, 0], [], []>} : vector<8x4xf32>, vector<8x4xf32>, vector<8x8xf32> -> vector<8x8xf32>
    %cst_21 = arith.constant dense<0xFF800000> : vector<8xf32>
    %57 = vector.multi_reduction <maximumf>, %56, %cst_21 [1] : vector<8x8xf32> to vector<8xf32>
    %58 = vector.shape_cast %57 : vector<8xf32> to vector<8x1xf32>
    %59 = vector.broadcast %58 : vector<8x1xf32> to vector<8x8xf32>
    %60 = arith.subf %56, %59 : vector<8x8xf32>
    %61 = math.exp %60 : vector<8x8xf32>
    %cst_22 = arith.constant dense<0.000000e+00> : vector<8xf32>
    %62 = vector.multi_reduction <add>, %61, %cst_22 [1] : vector<8x8xf32> to vector<8xf32>
    %63 = vector.shape_cast %62 : vector<8xf32> to vector<8x1xf32>
    %64 = tpu.reciprocal %63 {approx = true} : vector<8x1xf32> -> vector<8x1xf32>
    %65 = vector.broadcast %64 : vector<8x1xf32> to vector<8x8xf32>
    %66 = arith.mulf %61, %65 : vector<8x8xf32>
    %cst_23 = arith.constant dense<0.000000e+00> : vector<8x4xf32>
    %67 = tpu.matmul %66, %55, %cst_23 {dimension_numbers = #tpu.dot_dimension_numbers<[1], [0], [0], [1], [0, 0, 1, 1], [], []>} : vector<8x8xf32>, vector<8x4xf32>, vector<8x4xf32> -> vector<8x4xf32>
    %c0_24 = arith.constant 0 : index
    %c12 = arith.constant 12 : index
    %68 = vector.load %arg6[%c0_24, %c12] : memref<16x32xf32, #tpu.memory_space<vmem>>, vector<8x4xf32>
    tpu.vector_store %arg6[%c0_24, %c12], %67 {strides = array<i32>} : memref<16x32xf32, #tpu.memory_space<vmem>>, vector<8x4xf32>,
    %69 = vector.extract_strided_slice %4 {offsets = [0, 16], sizes = [8, 4], strides = [1, 1]} : vector<8x96xf32> to vector<8x4xf32>
    %70 = vector.extract_strided_slice %4 {offsets = [0, 48], sizes = [8, 4], strides = [1, 1]} : vector<8x96xf32> to vector<8x4xf32>
    %71 = vector.extract_strided_slice %4 {offsets = [0, 80], sizes = [8, 4], strides = [1, 1]} : vector<8x96xf32> to vector<8x4xf32>
    %cst_25 = arith.constant dense<0.000000e+00> : vector<8x8xf32>
    %72 = tpu.matmul %69, %70, %cst_25 {dimension_numbers = #tpu.dot_dimension_numbers<[1], [1], [0], [0], [0, 0, 1, 0], [], []>} : vector<8x4xf32>, vector<8x4xf32>, vector<8x8xf32> -> vector<8x8xf32>
    %cst_26 = arith.constant dense<0xFF800000> : vector<8xf32>
    %73 = vector.multi_reduction <maximumf>, %72, %cst_26 [1] : vector<8x8xf32> to vector<8xf32>
    %74 = vector.shape_cast %73 : vector<8xf32> to vector<8x1xf32>
    %75 = vector.broadcast %74 : vector<8x1xf32> to vector<8x8xf32>
    %76 = arith.subf %72, %75 : vector<8x8xf32>
    %77 = math.exp %76 : vector<8x8xf32>
    %cst_27 = arith.constant dense<0.000000e+00> : vector<8xf32>
    %78 = vector.multi_reduction <add>, %77, %cst_27 [1] : vector<8x8xf32> to vector<8xf32>
    %79 = vector.shape_cast %78 : vector<8xf32> to vector<8x1xf32>
    %80 = tpu.reciprocal %79 {approx = true} : vector<8x1xf32> -> vector<8x1xf32>
    %81 = vector.broadcast %80 : vector<8x1xf32> to vector<8x8xf32>
    %82 = arith.mulf %77, %81 : vector<8x8xf32>
    %cst_28 = arith.constant dense<0.000000e+00> : vector<8x4xf32>
    %83 = tpu.matmul %82, %71, %cst_28 {dimension_numbers = #tpu.dot_dimension_numbers<[1], [0], [0], [1], [0, 0, 1, 1], [], []>} : vector<8x8xf32>, vector<8x4xf32>, vector<8x4xf32> -> vector<8x4xf32>
    %c0_29 = arith.constant 0 : index
    %c16 = arith.constant 16 : index
    %84 = vector.load %arg6[%c0_29, %c16] : memref<16x32xf32, #tpu.memory_space<vmem>>, vector<8x4xf32>
    tpu.vector_store %arg6[%c0_29, %c16], %83 {strides = array<i32>} : memref<16x32xf32, #tpu.memory_space<vmem>>, vector<8x4xf32>,
    %85 = vector.extract_strided_slice %4 {offsets = [0, 20], sizes = [8, 4], strides = [1, 1]} : vector<8x96xf32> to vector<8x4xf32>
    %86 = vector.extract_strided_slice %4 {offsets = [0, 52], sizes = [8, 4], strides = [1, 1]} : vector<8x96xf32> to vector<8x4xf32>
    %87 = vector.extract_strided_slice %4 {offsets = [0, 84], sizes = [8, 4], strides = [1, 1]} : vector<8x96xf32> to vector<8x4xf32>
    %cst_30 = arith.constant dense<0.000000e+00> : vector<8x8xf32>
    %88 = tpu.matmul %85, %86, %cst_30 {dimension_numbers = #tpu.dot_dimension_numbers<[1], [1], [0], [0], [0, 0, 1, 0], [], []>} : vector<8x4xf32>, vector<8x4xf32>, vector<8x8xf32> -> vector<8x8xf32>
    %cst_31 = arith.constant dense<0xFF800000> : vector<8xf32>
    %89 = vector.multi_reduction <maximumf>, %88, %cst_31 [1] : vector<8x8xf32> to vector<8xf32>
    %90 = vector.shape_cast %89 : vector<8xf32> to vector<8x1xf32>
    %91 = vector.broadcast %90 : vector<8x1xf32> to vector<8x8xf32>
    %92 = arith.subf %88, %91 : vector<8x8xf32>
    %93 = math.exp %92 : vector<8x8xf32>
    %cst_32 = arith.constant dense<0.000000e+00> : vector<8xf32>
    %94 = vector.multi_reduction <add>, %93, %cst_32 [1] : vector<8x8xf32> to vector<8xf32>
    %95 = vector.shape_cast %94 : vector<8xf32> to vector<8x1xf32>
    %96 = tpu.reciprocal %95 {approx = true} : vector<8x1xf32> -> vector<8x1xf32>
    %97 = vector.broadcast %96 : vector<8x1xf32> to vector<8x8xf32>
    %98 = arith.mulf %93, %97 : vector<8x8xf32>
    %cst_33 = arith.constant dense<0.000000e+00> : vector<8x4xf32>
    %99 = tpu.matmul %98, %87, %cst_33 {dimension_numbers = #tpu.dot_dimension_numbers<[1], [0], [0], [1], [0, 0, 1, 1], [], []>} : vector<8x8xf32>, vector<8x4xf32>, vector<8x4xf32> -> vector<8x4xf32>
    %c0_34 = arith.constant 0 : index
    %c20 = arith.constant 20 : index
    %100 = vector.load %arg6[%c0_34, %c20] : memref<16x32xf32, #tpu.memory_space<vmem>>, vector<8x4xf32>
    tpu.vector_store %arg6[%c0_34, %c20], %99 {strides = array<i32>} : memref<16x32xf32, #tpu.memory_space<vmem>>, vector<8x4xf32>,
    %101 = vector.extract_strided_slice %4 {offsets = [0, 24], sizes = [8, 4], strides = [1, 1]} : vector<8x96xf32> to vector<8x4xf32>
    %102 = vector.extract_strided_slice %4 {offsets = [0, 56], sizes = [8, 4], strides = [1, 1]} : vector<8x96xf32> to vector<8x4xf32>
    %103 = vector.extract_strided_slice %4 {offsets = [0, 88], sizes = [8, 4], strides = [1, 1]} : vector<8x96xf32> to vector<8x4xf32>
    %cst_35 = arith.constant dense<0.000000e+00> : vector<8x8xf32>
    %104 = tpu.matmul %101, %102, %cst_35 {dimension_numbers = #tpu.dot_dimension_numbers<[1], [1], [0], [0], [0, 0, 1, 0], [], []>} : vector<8x4xf32>, vector<8x4xf32>, vector<8x8xf32> -> vector<8x8xf32>
    %cst_36 = arith.constant dense<0xFF800000> : vector<8xf32>
    %105 = vector.multi_reduction <maximumf>, %104, %cst_36 [1] : vector<8x8xf32> to vector<8xf32>
    %106 = vector.shape_cast %105 : vector<8xf32> to vector<8x1xf32>
    %107 = vector.broadcast %106 : vector<8x1xf32> to vector<8x8xf32>
    %108 = arith.subf %104, %107 : vector<8x8xf32>
    %109 = math.exp %108 : vector<8x8xf32>
    %cst_37 = arith.constant dense<0.000000e+00> : vector<8xf32>
    %110 = vector.multi_reduction <add>, %109, %cst_37 [1] : vector<8x8xf32> to vector<8xf32>
    %111 = vector.shape_cast %110 : vector<8xf32> to vector<8x1xf32>
    %112 = tpu.reciprocal %111 {approx = true} : vector<8x1xf32> -> vector<8x1xf32>
    %113 = vector.broadcast %112 : vector<8x1xf32> to vector<8x8xf32>
    %114 = arith.mulf %109, %113 : vector<8x8xf32>
    %cst_38 = arith.constant dense<0.000000e+00> : vector<8x4xf32>
    %115 = tpu.matmul %114, %103, %cst_38 {dimension_numbers = #tpu.dot_dimension_numbers<[1], [0], [0], [1], [0, 0, 1, 1], [], []>} : vector<8x8xf32>, vector<8x4xf32>, vector<8x4xf32> -> vector<8x4xf32>
    %c0_39 = arith.constant 0 : index
    %c24 = arith.constant 24 : index
    %116 = vector.load %arg6[%c0_39, %c24] : memref<16x32xf32, #tpu.memory_space<vmem>>, vector<8x4xf32>
    tpu.vector_store %arg6[%c0_39, %c24], %115 {strides = array<i32>} : memref<16x32xf32, #tpu.memory_space<vmem>>, vector<8x4xf32>,
    %117 = vector.extract_strided_slice %4 {offsets = [0, 28], sizes = [8, 4], strides = [1, 1]} : vector<8x96xf32> to vector<8x4xf32>
    %118 = vector.extract_strided_slice %4 {offsets = [0, 60], sizes = [8, 4], strides = [1, 1]} : vector<8x96xf32> to vector<8x4xf32>
    %119 = vector.extract_strided_slice %4 {offsets = [0, 92], sizes = [8, 4], strides = [1, 1]} : vector<8x96xf32> to vector<8x4xf32>
    %cst_40 = arith.constant dense<0.000000e+00> : vector<8x8xf32>
    %120 = tpu.matmul %117, %118, %cst_40 {dimension_numbers = #tpu.dot_dimension_numbers<[1], [1], [0], [0], [0, 0, 1, 0], [], []>} : vector<8x4xf32>, vector<8x4xf32>, vector<8x8xf32> -> vector<8x8xf32>
    %cst_41 = arith.constant dense<0xFF800000> : vector<8xf32>
    %121 = vector.multi_reduction <maximumf>, %120, %cst_41 [1] : vector<8x8xf32> to vector<8xf32>
    %122 = vector.shape_cast %121 : vector<8xf32> to vector<8x1xf32>
    %123 = vector.broadcast %122 : vector<8x1xf32> to vector<8x8xf32>
    %124 = arith.subf %120, %123 : vector<8x8xf32>
    %125 = math.exp %124 : vector<8x8xf32>
    %cst_42 = arith.constant dense<0.000000e+00> : vector<8xf32>
    %126 = vector.multi_reduction <add>, %125, %cst_42 [1] : vector<8x8xf32> to vector<8xf32>
    %127 = vector.shape_cast %126 : vector<8xf32> to vector<8x1xf32>
    %128 = tpu.reciprocal %127 {approx = true} : vector<8x1xf32> -> vector<8x1xf32>
    %129 = vector.broadcast %128 : vector<8x1xf32> to vector<8x8xf32>
    %130 = arith.mulf %125, %129 : vector<8x8xf32>
    %cst_43 = arith.constant dense<0.000000e+00> : vector<8x4xf32>
    %131 = tpu.matmul %130, %119, %cst_43 {dimension_numbers = #tpu.dot_dimension_numbers<[1], [0], [0], [1], [0, 0, 1, 1], [], []>} : vector<8x8xf32>, vector<8x4xf32>, vector<8x4xf32> -> vector<8x4xf32>
    %c0_44 = arith.constant 0 : index
    %c28 = arith.constant 28 : index
    %132 = vector.load %arg6[%c0_44, %c28] : memref<16x32xf32, #tpu.memory_space<vmem>>, vector<8x4xf32>
    tpu.vector_store %arg6[%c0_44, %c28], %131 {strides = array<i32>} : memref<16x32xf32, #tpu.memory_space<vmem>>, vector<8x4xf32>,
    %133 = vector.extract_strided_slice %3 {offsets = [8, 0], sizes = [8, 96], strides = [1, 1]} : vector<16x96xf32> to vector<8x96xf32>
    %134 = vector.extract_strided_slice %133 {offsets = [0, 0], sizes = [8, 4], strides = [1, 1]} : vector<8x96xf32> to vector<8x4xf32>
    %135 = vector.extract_strided_slice %133 {offsets = [0, 32], sizes = [8, 4], strides = [1, 1]} : vector<8x96xf32> to vector<8x4xf32>
    %136 = vector.extract_strided_slice %133 {offsets = [0, 64], sizes = [8, 4], strides = [1, 1]} : vector<8x96xf32> to vector<8x4xf32>
    %cst_45 = arith.constant dense<0.000000e+00> : vector<8x8xf32>
    %137 = tpu.matmul %134, %135, %cst_45 {dimension_numbers = #tpu.dot_dimension_numbers<[1], [1], [0], [0], [0, 0, 1, 0], [], []>} : vector<8x4xf32>, vector<8x4xf32>, vector<8x8xf32> -> vector<8x8xf32>
    %cst_46 = arith.constant dense<0xFF800000> : vector<8xf32>
    %138 = vector.multi_reduction <maximumf>, %137, %cst_46 [1] : vector<8x8xf32> to vector<8xf32>
    %139 = vector.shape_cast %138 : vector<8xf32> to vector<8x1xf32>
    %140 = vector.broadcast %139 : vector<8x1xf32> to vector<8x8xf32>
    %141 = arith.subf %137, %140 : vector<8x8xf32>
    %142 = math.exp %141 : vector<8x8xf32>
    %cst_47 = arith.constant dense<0.000000e+00> : vector<8xf32>
    %143 = vector.multi_reduction <add>, %142, %cst_47 [1] : vector<8x8xf32> to vector<8xf32>
    %144 = vector.shape_cast %143 : vector<8xf32> to vector<8x1xf32>
    %145 = tpu.reciprocal %144 {approx = true} : vector<8x1xf32> -> vector<8x1xf32>
    %146 = vector.broadcast %145 : vector<8x1xf32> to vector<8x8xf32>
    %147 = arith.mulf %142, %146 : vector<8x8xf32>
    %cst_48 = arith.constant dense<0.000000e+00> : vector<8x4xf32>
    %148 = tpu.matmul %147, %136, %cst_48 {dimension_numbers = #tpu.dot_dimension_numbers<[1], [0], [0], [1], [0, 0, 1, 1], [], []>} : vector<8x8xf32>, vector<8x4xf32>, vector<8x4xf32> -> vector<8x4xf32>
    %c8_49 = arith.constant 8 : index
    %c0_50 = arith.constant 0 : index
    %149 = vector.load %arg6[%c8_49, %c0_50] : memref<16x32xf32, #tpu.memory_space<vmem>>, vector<8x4xf32>
    tpu.vector_store %arg6[%c8_49, %c0_50], %148 {strides = array<i32>} : memref<16x32xf32, #tpu.memory_space<vmem>>, vector<8x4xf32>,
    %150 = vector.extract_strided_slice %133 {offsets = [0, 4], sizes = [8, 4], strides = [1, 1]} : vector<8x96xf32> to vector<8x4xf32>
    %151 = vector.extract_strided_slice %133 {offsets = [0, 36], sizes = [8, 4], strides = [1, 1]} : vector<8x96xf32> to vector<8x4xf32>
    %152 = vector.extract_strided_slice %133 {offsets = [0, 68], sizes = [8, 4], strides = [1, 1]} : vector<8x96xf32> to vector<8x4xf32>
    %cst_51 = arith.constant dense<0.000000e+00> : vector<8x8xf32>
    %153 = tpu.matmul %150, %151, %cst_51 {dimension_numbers = #tpu.dot_dimension_numbers<[1], [1], [0], [0], [0, 0, 1, 0], [], []>} : vector<8x4xf32>, vector<8x4xf32>, vector<8x8xf32> -> vector<8x8xf32>
    %cst_52 = arith.constant dense<0xFF800000> : vector<8xf32>
    %154 = vector.multi_reduction <maximumf>, %153, %cst_52 [1] : vector<8x8xf32> to vector<8xf32>
    %155 = vector.shape_cast %154 : vector<8xf32> to vector<8x1xf32>
    %156 = vector.broadcast %155 : vector<8x1xf32> to vector<8x8xf32>
    %157 = arith.subf %153, %156 : vector<8x8xf32>
    %158 = math.exp %157 : vector<8x8xf32>
    %cst_53 = arith.constant dense<0.000000e+00> : vector<8xf32>
    %159 = vector.multi_reduction <add>, %158, %cst_53 [1] : vector<8x8xf32> to vector<8xf32>
    %160 = vector.shape_cast %159 : vector<8xf32> to vector<8x1xf32>
    %161 = tpu.reciprocal %160 {approx = true} : vector<8x1xf32> -> vector<8x1xf32>
    %162 = vector.broadcast %161 : vector<8x1xf32> to vector<8x8xf32>
    %163 = arith.mulf %158, %162 : vector<8x8xf32>
    %cst_54 = arith.constant dense<0.000000e+00> : vector<8x4xf32>
    %164 = tpu.matmul %163, %152, %cst_54 {dimension_numbers = #tpu.dot_dimension_numbers<[1], [0], [0], [1], [0, 0, 1, 1], [], []>} : vector<8x8xf32>, vector<8x4xf32>, vector<8x4xf32> -> vector<8x4xf32>
    %c8_55 = arith.constant 8 : index
    %c4_56 = arith.constant 4 : index
    %165 = vector.load %arg6[%c8_55, %c4_56] : memref<16x32xf32, #tpu.memory_space<vmem>>, vector<8x4xf32>
    tpu.vector_store %arg6[%c8_55, %c4_56], %164 {strides = array<i32>} : memref<16x32xf32, #tpu.memory_space<vmem>>, vector<8x4xf32>,
    %166 = vector.extract_strided_slice %133 {offsets = [0, 8], sizes = [8, 4], strides = [1, 1]} : vector<8x96xf32> to vector<8x4xf32>
    %167 = vector.extract_strided_slice %133 {offsets = [0, 40], sizes = [8, 4], strides = [1, 1]} : vector<8x96xf32> to vector<8x4xf32>
    %168 = vector.extract_strided_slice %133 {offsets = [0, 72], sizes = [8, 4], strides = [1, 1]} : vector<8x96xf32> to vector<8x4xf32>
    %cst_57 = arith.constant dense<0.000000e+00> : vector<8x8xf32>
    %169 = tpu.matmul %166, %167, %cst_57 {dimension_numbers = #tpu.dot_dimension_numbers<[1], [1], [0], [0], [0, 0, 1, 0], [], []>} : vector<8x4xf32>, vector<8x4xf32>, vector<8x8xf32> -> vector<8x8xf32>
    %cst_58 = arith.constant dense<0xFF800000> : vector<8xf32>
    %170 = vector.multi_reduction <maximumf>, %169, %cst_58 [1] : vector<8x8xf32> to vector<8xf32>
    %171 = vector.shape_cast %170 : vector<8xf32> to vector<8x1xf32>
    %172 = vector.broadcast %171 : vector<8x1xf32> to vector<8x8xf32>
    %173 = arith.subf %169, %172 : vector<8x8xf32>
    %174 = math.exp %173 : vector<8x8xf32>
    %cst_59 = arith.constant dense<0.000000e+00> : vector<8xf32>
    %175 = vector.multi_reduction <add>, %174, %cst_59 [1] : vector<8x8xf32> to vector<8xf32>
    %176 = vector.shape_cast %175 : vector<8xf32> to vector<8x1xf32>
    %177 = tpu.reciprocal %176 {approx = true} : vector<8x1xf32> -> vector<8x1xf32>
    %178 = vector.broadcast %177 : vector<8x1xf32> to vector<8x8xf32>
    %179 = arith.mulf %174, %178 : vector<8x8xf32>
    %cst_60 = arith.constant dense<0.000000e+00> : vector<8x4xf32>
    %180 = tpu.matmul %179, %168, %cst_60 {dimension_numbers = #tpu.dot_dimension_numbers<[1], [0], [0], [1], [0, 0, 1, 1], [], []>} : vector<8x8xf32>, vector<8x4xf32>, vector<8x4xf32> -> vector<8x4xf32>
    %c8_61 = arith.constant 8 : index
    %c8_62 = arith.constant 8 : index
    %181 = vector.load %arg6[%c8_61, %c8_62] : memref<16x32xf32, #tpu.memory_space<vmem>>, vector<8x4xf32>
    tpu.vector_store %arg6[%c8_61, %c8_62], %180 {strides = array<i32>} : memref<16x32xf32, #tpu.memory_space<vmem>>, vector<8x4xf32>,
    %182 = vector.extract_strided_slice %133 {offsets = [0, 12], sizes = [8, 4], strides = [1, 1]} : vector<8x96xf32> to vector<8x4xf32>
    %183 = vector.extract_strided_slice %133 {offsets = [0, 44], sizes = [8, 4], strides = [1, 1]} : vector<8x96xf32> to vector<8x4xf32>
    %184 = vector.extract_strided_slice %133 {offsets = [0, 76], sizes = [8, 4], strides = [1, 1]} : vector<8x96xf32> to vector<8x4xf32>
    %cst_63 = arith.constant dense<0.000000e+00> : vector<8x8xf32>
    %185 = tpu.matmul %182, %183, %cst_63 {dimension_numbers = #tpu.dot_dimension_numbers<[1], [1], [0], [0], [0, 0, 1, 0], [], []>} : vector<8x4xf32>, vector<8x4xf32>, vector<8x8xf32> -> vector<8x8xf32>
    %cst_64 = arith.constant dense<0xFF800000> : vector<8xf32>
    %186 = vector.multi_reduction <maximumf>, %185, %cst_64 [1] : vector<8x8xf32> to vector<8xf32>
    %187 = vector.shape_cast %186 : vector<8xf32> to vector<8x1xf32>
    %188 = vector.broadcast %187 : vector<8x1xf32> to vector<8x8xf32>
    %189 = arith.subf %185, %188 : vector<8x8xf32>
    %190 = math.exp %189 : vector<8x8xf32>
    %cst_65 = arith.constant dense<0.000000e+00> : vector<8xf32>
    %191 = vector.multi_reduction <add>, %190, %cst_65 [1] : vector<8x8xf32> to vector<8xf32>
    %192 = vector.shape_cast %191 : vector<8xf32> to vector<8x1xf32>
    %193 = tpu.reciprocal %192 {approx = true} : vector<8x1xf32> -> vector<8x1xf32>
    %194 = vector.broadcast %193 : vector<8x1xf32> to vector<8x8xf32>
    %195 = arith.mulf %190, %194 : vector<8x8xf32>
    %cst_66 = arith.constant dense<0.000000e+00> : vector<8x4xf32>
    %196 = tpu.matmul %195, %184, %cst_66 {dimension_numbers = #tpu.dot_dimension_numbers<[1], [0], [0], [1], [0, 0, 1, 1], [], []>} : vector<8x8xf32>, vector<8x4xf32>, vector<8x4xf32> -> vector<8x4xf32>
    %c8_67 = arith.constant 8 : index
    %c12_68 = arith.constant 12 : index
    %197 = vector.load %arg6[%c8_67, %c12_68] : memref<16x32xf32, #tpu.memory_space<vmem>>, vector<8x4xf32>
    tpu.vector_store %arg6[%c8_67, %c12_68], %196 {strides = array<i32>} : memref<16x32xf32, #tpu.memory_space<vmem>>, vector<8x4xf32>,
    %198 = vector.extract_strided_slice %133 {offsets = [0, 16], sizes = [8, 4], strides = [1, 1]} : vector<8x96xf32> to vector<8x4xf32>
    %199 = vector.extract_strided_slice %133 {offsets = [0, 48], sizes = [8, 4], strides = [1, 1]} : vector<8x96xf32> to vector<8x4xf32>
    %200 = vector.extract_strided_slice %133 {offsets = [0, 80], sizes = [8, 4], strides = [1, 1]} : vector<8x96xf32> to vector<8x4xf32>
    %cst_69 = arith.constant dense<0.000000e+00> : vector<8x8xf32>
    %201 = tpu.matmul %198, %199, %cst_69 {dimension_numbers = #tpu.dot_dimension_numbers<[1], [1], [0], [0], [0, 0, 1, 0], [], []>} : vector<8x4xf32>, vector<8x4xf32>, vector<8x8xf32> -> vector<8x8xf32>
    %cst_70 = arith.constant dense<0xFF800000> : vector<8xf32>
    %202 = vector.multi_reduction <maximumf>, %201, %cst_70 [1] : vector<8x8xf32> to vector<8xf32>
    %203 = vector.shape_cast %202 : vector<8xf32> to vector<8x1xf32>
    %204 = vector.broadcast %203 : vector<8x1xf32> to vector<8x8xf32>
    %205 = arith.subf %201, %204 : vector<8x8xf32>
    %206 = math.exp %205 : vector<8x8xf32>
    %cst_71 = arith.constant dense<0.000000e+00> : vector<8xf32>
    %207 = vector.multi_reduction <add>, %206, %cst_71 [1] : vector<8x8xf32> to vector<8xf32>
    %208 = vector.shape_cast %207 : vector<8xf32> to vector<8x1xf32>
    %209 = tpu.reciprocal %208 {approx = true} : vector<8x1xf32> -> vector<8x1xf32>
    %210 = vector.broadcast %209 : vector<8x1xf32> to vector<8x8xf32>
    %211 = arith.mulf %206, %210 : vector<8x8xf32>
    %cst_72 = arith.constant dense<0.000000e+00> : vector<8x4xf32>
    %212 = tpu.matmul %211, %200, %cst_72 {dimension_numbers = #tpu.dot_dimension_numbers<[1], [0], [0], [1], [0, 0, 1, 1], [], []>} : vector<8x8xf32>, vector<8x4xf32>, vector<8x4xf32> -> vector<8x4xf32>
    %c8_73 = arith.constant 8 : index
    %c16_74 = arith.constant 16 : index
    %213 = vector.load %arg6[%c8_73, %c16_74] : memref<16x32xf32, #tpu.memory_space<vmem>>, vector<8x4xf32>
    tpu.vector_store %arg6[%c8_73, %c16_74], %212 {strides = array<i32>} : memref<16x32xf32, #tpu.memory_space<vmem>>, vector<8x4xf32>,
    %214 = vector.extract_strided_slice %133 {offsets = [0, 20], sizes = [8, 4], strides = [1, 1]} : vector<8x96xf32> to vector<8x4xf32>
    %215 = vector.extract_strided_slice %133 {offsets = [0, 52], sizes = [8, 4], strides = [1, 1]} : vector<8x96xf32> to vector<8x4xf32>
    %216 = vector.extract_strided_slice %133 {offsets = [0, 84], sizes = [8, 4], strides = [1, 1]} : vector<8x96xf32> to vector<8x4xf32>
    %cst_75 = arith.constant dense<0.000000e+00> : vector<8x8xf32>
    %217 = tpu.matmul %214, %215, %cst_75 {dimension_numbers = #tpu.dot_dimension_numbers<[1], [1], [0], [0], [0, 0, 1, 0], [], []>} : vector<8x4xf32>, vector<8x4xf32>, vector<8x8xf32> -> vector<8x8xf32>
    %cst_76 = arith.constant dense<0xFF800000> : vector<8xf32>
    %218 = vector.multi_reduction <maximumf>, %217, %cst_76 [1] : vector<8x8xf32> to vector<8xf32>
    %219 = vector.shape_cast %218 : vector<8xf32> to vector<8x1xf32>
    %220 = vector.broadcast %219 : vector<8x1xf32> to vector<8x8xf32>
    %221 = arith.subf %217, %220 : vector<8x8xf32>
    %222 = math.exp %221 : vector<8x8xf32>
    %cst_77 = arith.constant dense<0.000000e+00> : vector<8xf32>
    %223 = vector.multi_reduction <add>, %222, %cst_77 [1] : vector<8x8xf32> to vector<8xf32>
    %224 = vector.shape_cast %223 : vector<8xf32> to vector<8x1xf32>
    %225 = tpu.reciprocal %224 {approx = true} : vector<8x1xf32> -> vector<8x1xf32>
    %226 = vector.broadcast %225 : vector<8x1xf32> to vector<8x8xf32>
    %227 = arith.mulf %222, %226 : vector<8x8xf32>
    %cst_78 = arith.constant dense<0.000000e+00> : vector<8x4xf32>
    %228 = tpu.matmul %227, %216, %cst_78 {dimension_numbers = #tpu.dot_dimension_numbers<[1], [0], [0], [1], [0, 0, 1, 1], [], []>} : vector<8x8xf32>, vector<8x4xf32>, vector<8x4xf32> -> vector<8x4xf32>
    %c8_79 = arith.constant 8 : index
    %c20_80 = arith.constant 20 : index
    %229 = vector.load %arg6[%c8_79, %c20_80] : memref<16x32xf32, #tpu.memory_space<vmem>>, vector<8x4xf32>
    tpu.vector_store %arg6[%c8_79, %c20_80], %228 {strides = array<i32>} : memref<16x32xf32, #tpu.memory_space<vmem>>, vector<8x4xf32>,
    %230 = vector.extract_strided_slice %133 {offsets = [0, 24], sizes = [8, 4], strides = [1, 1]} : vector<8x96xf32> to vector<8x4xf32>
    %231 = vector.extract_strided_slice %133 {offsets = [0, 56], sizes = [8, 4], strides = [1, 1]} : vector<8x96xf32> to vector<8x4xf32>
    %232 = vector.extract_strided_slice %133 {offsets = [0, 88], sizes = [8, 4], strides = [1, 1]} : vector<8x96xf32> to vector<8x4xf32>
    %cst_81 = arith.constant dense<0.000000e+00> : vector<8x8xf32>
    %233 = tpu.matmul %230, %231, %cst_81 {dimension_numbers = #tpu.dot_dimension_numbers<[1], [1], [0], [0], [0, 0, 1, 0], [], []>} : vector<8x4xf32>, vector<8x4xf32>, vector<8x8xf32> -> vector<8x8xf32>
    %cst_82 = arith.constant dense<0xFF800000> : vector<8xf32>
    %234 = vector.multi_reduction <maximumf>, %233, %cst_82 [1] : vector<8x8xf32> to vector<8xf32>
    %235 = vector.shape_cast %234 : vector<8xf32> to vector<8x1xf32>
    %236 = vector.broadcast %235 : vector<8x1xf32> to vector<8x8xf32>
    %237 = arith.subf %233, %236 : vector<8x8xf32>
    %238 = math.exp %237 : vector<8x8xf32>
    %cst_83 = arith.constant dense<0.000000e+00> : vector<8xf32>
    %239 = vector.multi_reduction <add>, %238, %cst_83 [1] : vector<8x8xf32> to vector<8xf32>
    %240 = vector.shape_cast %239 : vector<8xf32> to vector<8x1xf32>
    %241 = tpu.reciprocal %240 {approx = true} : vector<8x1xf32> -> vector<8x1xf32>
    %242 = vector.broadcast %241 : vector<8x1xf32> to vector<8x8xf32>
    %243 = arith.mulf %238, %242 : vector<8x8xf32>
    %cst_84 = arith.constant dense<0.000000e+00> : vector<8x4xf32>
    %244 = tpu.matmul %243, %232, %cst_84 {dimension_numbers = #tpu.dot_dimension_numbers<[1], [0], [0], [1], [0, 0, 1, 1], [], []>} : vector<8x8xf32>, vector<8x4xf32>, vector<8x4xf32> -> vector<8x4xf32>
    %c8_85 = arith.constant 8 : index
    %c24_86 = arith.constant 24 : index
    %245 = vector.load %arg6[%c8_85, %c24_86] : memref<16x32xf32, #tpu.memory_space<vmem>>, vector<8x4xf32>
    tpu.vector_store %arg6[%c8_85, %c24_86], %244 {strides = array<i32>} : memref<16x32xf32, #tpu.memory_space<vmem>>, vector<8x4xf32>,
    %246 = vector.extract_strided_slice %133 {offsets = [0, 28], sizes = [8, 4], strides = [1, 1]} : vector<8x96xf32> to vector<8x4xf32>
    %247 = vector.extract_strided_slice %133 {offsets = [0, 60], sizes = [8, 4], strides = [1, 1]} : vector<8x96xf32> to vector<8x4xf32>
    %248 = vector.extract_strided_slice %133 {offsets = [0, 92], sizes = [8, 4], strides = [1, 1]} : vector<8x96xf32> to vector<8x4xf32>
    %cst_87 = arith.constant dense<0.000000e+00> : vector<8x8xf32>
    %249 = tpu.matmul %246, %247, %cst_87 {dimension_numbers = #tpu.dot_dimension_numbers<[1], [1], [0], [0], [0, 0, 1, 0], [], []>} : vector<8x4xf32>, vector<8x4xf32>, vector<8x8xf32> -> vector<8x8xf32>
    %cst_88 = arith.constant dense<0xFF800000> : vector<8xf32>
    %250 = vector.multi_reduction <maximumf>, %249, %cst_88 [1] : vector<8x8xf32> to vector<8xf32>
    %251 = vector.shape_cast %250 : vector<8xf32> to vector<8x1xf32>
    %252 = vector.broadcast %251 : vector<8x1xf32> to vector<8x8xf32>
    %253 = arith.subf %249, %252 : vector<8x8xf32>
    %254 = math.exp %253 : vector<8x8xf32>
    %cst_89 = arith.constant dense<0.000000e+00> : vector<8xf32>
    %255 = vector.multi_reduction <add>, %254, %cst_89 [1] : vector<8x8xf32> to vector<8xf32>
    %256 = vector.shape_cast %255 : vector<8xf32> to vector<8x1xf32>
    %257 = tpu.reciprocal %256 {approx = true} : vector<8x1xf32> -> vector<8x1xf32>
    %258 = vector.broadcast %257 : vector<8x1xf32> to vector<8x8xf32>
    %259 = arith.mulf %254, %258 : vector<8x8xf32>
    %cst_90 = arith.constant dense<0.000000e+00> : vector<8x4xf32>
    %260 = tpu.matmul %259, %248, %cst_90 {dimension_numbers = #tpu.dot_dimension_numbers<[1], [0], [0], [1], [0, 0, 1, 1], [], []>} : vector<8x8xf32>, vector<8x4xf32>, vector<8x4xf32> -> vector<8x4xf32>
    %c8_91 = arith.constant 8 : index
    %c28_92 = arith.constant 28 : index
    %261 = vector.load %arg6[%c8_91, %c28_92] : memref<16x32xf32, #tpu.memory_space<vmem>>, vector<8x4xf32>
    tpu.vector_store %arg6[%c8_91, %c28_92], %260 {strides = array<i32>} : memref<16x32xf32, #tpu.memory_space<vmem>>, vector<8x4xf32>,
    %c0_93 = arith.constant 0 : index
    %c0_94 = arith.constant 0 : index
    %262 = vector.load %arg6[%c0_93, %c0_94] : memref<16x32xf32, #tpu.memory_space<vmem>>, vector<16x32xf32>
    %c0_95 = arith.constant 0 : index
    %c0_96 = arith.constant 0 : index
    %263 = vector.load %arg3[%c0_95, %c0_96] : memref<32x32xf32, #tpu.memory_space<vmem>>, vector<32x32xf32>
    %cst_97 = arith.constant dense<0.000000e+00> : vector<16x32xf32>
    %264 = tpu.matmul %262, %263, %cst_97 {dimension_numbers = #tpu.dot_dimension_numbers<[1], [0], [0], [1], [0, 0, 1, 1], [], []>} : vector<16x32xf32>, vector<32x32xf32>, vector<16x32xf32> -> vector<16x32xf32>
    %c0_98 = arith.constant 0 : index
    %c0_99 = arith.constant 0 : index
    %265 = vector.load %arg4[%c0_98, %c0_99] : memref<1x32xf32, #tpu.memory_space<vmem>>, vector<1x32xf32>
    %266 = vector.shape_cast %265 : vector<1x32xf32> to vector<32xf32>
    %267 = vector.shape_cast %266 : vector<32xf32> to vector<1x32xf32>
    %268 = vector.broadcast %267 : vector<1x32xf32> to vector<16x32xf32>
    %269 = arith.addf %264, %268 : vector<16x32xf32>
    %270 = vector.shape_cast %269 : vector<16x32xf32> to vector<2x8x32xf32>
    %c0_100 = arith.constant 0 : index
    %c0_101 = arith.constant 0 : index
    %c0_102 = arith.constant 0 : index
    %271 = vector.load %arg5[%c0_100, %c0_101, %c0_102] : memref<2x8x32xf32, #tpu.memory_space<vmem>>, vector<2x8x32xf32>
    tpu.vector_store %arg5[%c0_100, %c0_101, %c0_102], %270 {strides = array<i32>} : memref<2x8x32xf32, #tpu.memory_space<vmem>>, vector<2x8x32xf32>,
    return
  }
  func.func @transform_0(%arg0: i32) -> (i32, i32, i32) {
    %c0_i32 = arith.constant 0 : i32
    %c0_i32_0 = arith.constant 0 : i32
    %c0_i32_1 = arith.constant 0 : i32
    return %arg0, %c0_i32, %c0_i32_0 : i32, i32, i32
  }
  func.func @transform_1(%arg0: i32) -> (i32, i32) {
    %c0_i32 = arith.constant 0 : i32
    %c0_i32_0 = arith.constant 0 : i32
    %c0_i32_1 = arith.constant 0 : i32
    return %c0_i32, %c0_i32_0 : i32, i32
  }
  func.func @transform_2(%arg0: i32) -> (i32, i32) {
    %c0_i32 = arith.constant 0 : i32
    %c0_i32_0 = arith.constant 0 : i32
    %c0_i32_1 = arith.constant 0 : i32
    return %c0_i32, %c0_i32_0 : i32, i32
  }
  func.func @transform_3(%arg0: i32) -> (i32, i32) {
    %c0_i32 = arith.constant 0 : i32
    %c0_i32_0 = arith.constant 0 : i32
    %c0_i32_1 = arith.constant 0 : i32
    return %c0_i32, %c0_i32_0 : i32, i32
  }
  func.func @transform_4(%arg0: i32) -> (i32, i32, i32) {
    %c0_i32 = arith.constant 0 : i32
    %c0_i32_0 = arith.constant 0 : i32
    %c0_i32_1 = arith.constant 0 : i32
    return %arg0, %c0_i32, %c0_i32_0 : i32, i32, i32
  }
}

</mosaic_0001>

<llo_original>
// kernel: tpu_custom_call.1
$region0: #{tpu_custom_call.1}
  #allocation0 [shape = 'u32[]', space=smem, size = 0x4, offset = 0x4, fixed_abs, tag = 'smem constant byte address 0x4 - core index']
  #allocation1 [shape = 'u32[144,128]{1,0:T(1,128)}', space=vmem, size = 0x12000, scoped, tag = 'internal scratch']
  #allocation2 [shape = 'f32[16,32]{1,0:T(8,128)}', space=vmem, size = 0x2000, scoped, tag = 'scratch operand']
  %s0 = inlined_call_operand.hbm [shape: f32[2,8,32], index: 0, kind: input, shape index: {}]
  %s1 = inlined_call_operand.hbm [shape: f32[32,96], index: 1, kind: input, shape index: {}]
  %s2 = inlined_call_operand.hbm [shape: f32[32,32], index: 2, kind: input, shape index: {}]
  %s3 = inlined_call_operand.hbm [shape: f32[1,32], index: 3, kind: input, shape index: {}]
  %s4 = inlined_call_operand.hbm [shape: f32[2,8,32], index: 4, kind: output, shape index: {}]
  %s5 = sld [smem:[#allocation0]]
  $region42: #{tpu_custom_call.1} parent=0
    _
  %s7 = ssub.s32 1, %s5
  %s8 = scalar_select 0, %s7, %s5
  $region1: #{tpu_custom_call.1} parent=0
    #allocation3 [shape = 'u8[8192]{0}', space=vmem, size = 0x2000, scoped, tag = 'input window, operand 0, single buffered']
    #allocation4 [shape = 's32[1]{0}', space=sflag, size = 0x4, scoped, tag = 'scoped memory for tpu_custom_call.1']
    #allocation5 [shape = 's32[1]{0}', space=sflag, size = 0x4, scoped, tag = 'scoped memory for tpu_custom_call.1']
    #allocation6 [shape = 'u8[16384]{0}', space=vmem, size = 0x4000, scoped, tag = 'input window, operand 1, single buffered']
    #allocation7 [shape = 's32[1]{0}', space=sflag, size = 0x4, scoped, tag = 'scoped memory for tpu_custom_call.1']
    #allocation8 [shape = 'u8[16384]{0}', space=vmem, size = 0x4000, scoped, tag = 'input window, operand 2, single buffered']
    #allocation9 [shape = 'u8[512]{0}', space=vmem, size = 0x400, scoped, tag = 'input window, operand 3, single buffered']
    #allocation10 [shape = 's32[1]{0}', space=sflag, size = 0x4, scoped, tag = 'scoped memory for tpu_custom_call.1']
    #allocation11 [shape = 'u8[8192]{0}', space=vmem, size = 0x2000, scoped, tag = 'output window, operand 0, single buffered']
    %9 = vsyncpa [#allocation4], 0
    %10 = vsyncpa [#allocation7], 0
    %11 = vsyncpa [#allocation10], 0
    %12 = vsyncpa [#allocation5], 0
    // Predicated region
    $region2: #{tpu_custom_call.1} parent=1 // pred_check
      _
    $region3: #{tpu_custom_call.1} parent=1 // pred_check_branch
      %14 = sbr.rel (0) target = $region5
    $region4: #{tpu_custom_call.1} parent=1 // pred_region
      %s16 = ssub.s32 256, 256
      %17 = vsyncadd [#allocation4], %s16
      %s18 = sshll.u32 [#allocation3], 4
      %s19 = int_to_ptr.vmem [resolvable:$true] %s18
      %24 = dma.hbm_to_vmem [thread:$0]  %s0, 256, %s19, [#allocation4], 128, 128, 8
    $region5: #{tpu_custom_call.1} parent=1 // pred_fallthru
      _
    // Predicated region
    $region6: #{tpu_custom_call.1} parent=1 // pred_check
      _
    $region7: #{tpu_custom_call.1} parent=1 // pred_check_branch
      %26 = sbr.rel (0) target = $region9
    $region8: #{tpu_custom_call.1} parent=1 // pred_region
      %s28 = ssub.s32 512, 512
      %29 = vsyncadd [#allocation7], %s28
      %s30 = sshll.u32 [#allocation6], 4
      %s31 = int_to_ptr.vmem [resolvable:$true] %s30
      %36 = dma.hbm_to_vmem [thread:$0]  %s1, 512, %s31, [#allocation7], 128, 128, 8
    $region9: #{tpu_custom_call.1} parent=1 // pred_fallthru
      _
    // Predicated region
    $region10: #{tpu_custom_call.1} parent=1 // pred_check
      _
    $region11: #{tpu_custom_call.1} parent=1 // pred_check_branch
      %38 = sbr.rel (0) target = $region13
    $region12: #{tpu_custom_call.1} parent=1 // pred_region
      %s40 = ssub.s32 512, 512
      %41 = vsyncadd [#allocation7], %s40
      %s42 = sshll.u32 [#allocation8], 4
      %s43 = int_to_ptr.vmem [resolvable:$true] %s42
      %48 = dma.hbm_to_vmem [thread:$0]  %s2, 512, %s43, [#allocation7], 128, 128, 8
    $region13: #{tpu_custom_call.1} parent=1 // pred_fallthru
      _
    // Predicated region
    $region14: #{tpu_custom_call.1} parent=1 // pred_check
      _
    $region15: #{tpu_custom_call.1} parent=1 // pred_check_branch
      %50 = sbr.rel (0) target = $region17
    $region16: #{tpu_custom_call.1} parent=1 // pred_region
      %s52 = ssub.s32 16, 16
      %53 = vsyncadd [#allocation10], %s52
      %s55 = sshll.u32 [#allocation9], 4
      %s56 = int_to_ptr.vmem [resolvable:$true] %s55
      %58 = dma.hbm_to_vmem [thread:$0]  %s3, 16, %s56, [#allocation10]
    $region17: #{tpu_custom_call.1} parent=1 // pred_fallthru
      _
    // Predicated region
    $region18: #{tpu_custom_call.1} parent=1 // pred_check
      _
    $region19: #{tpu_custom_call.1} parent=1 // pred_check_branch
      %60 = sbr.rel (0) target = $region21
    $region20: #{tpu_custom_call.1} parent=1 // pred_region
      %61 = dma.done [#allocation4], 256
    $region21: #{tpu_custom_call.1} parent=1 // pred_fallthru
      _
    // Predicated region
    $region22: #{tpu_custom_call.1} parent=1 // pred_check
      _
    $region23: #{tpu_custom_call.1} parent=1 // pred_check_branch
      %63 = sbr.rel (0) target = $region25
    $region24: #{tpu_custom_call.1} parent=1 // pred_region
      %64 = dma.done [#allocation7], 512
    $region25: #{tpu_custom_call.1} parent=1 // pred_fallthru
      _
    // Predicated region
    $region26: #{tpu_custom_call.1} parent=1 // pred_check
      _
    $region27: #{tpu_custom_call.1} parent=1 // pred_check_branch
      %66 = sbr.rel (0) target = $region29
    $region28: #{tpu_custom_call.1} parent=1 // pred_region
      %67 = dma.done [#allocation7], 512
    $region29: #{tpu_custom_call.1} parent=1 // pred_fallthru
      _
    // Predicated region
    $region30: #{tpu_custom_call.1} parent=1 // pred_check
      _
    $region31: #{tpu_custom_call.1} parent=1 // pred_check_branch
      %69 = sbr.rel (0) target = $region33
    $region32: #{tpu_custom_call.1} parent=1 // pred_region
      %70 = dma.done [#allocation10], 16
    $region33: #{tpu_custom_call.1} parent=1 // pred_fallthru
      _
    %v71 = vld [vmem:[#allocation3] sm:$0xff]
    %v72 = vld [vmem:[#allocation3 + $0x8] sm:$0xff]
    %v73 = vld [vmem:[#allocation6] sm:$0xff]
    %v74 = vld [vmem:[#allocation6 + $0x8] sm:$0xff]
    %v75 = vld [vmem:[#allocation6 + $0x10] sm:$0xff]
    %v76 = vld [vmem:[#allocation6 + $0x18] sm:$0xff]
    %vm77 = vcmask 261120
    %v79 = vsel %vm77, %v71, 0
    %v82 = vsel %vm77, %v72, 0
    %84 = vmatprep.subr.mxu0 0.0
    %85 = vmatpush1.msra.mxu0 %v73
    %86 = vmatprep.subr.mxu0 0.0
    %87 = vmatpush1.msra.mxu0 %v74
    %88 = vmatprep.subr.mxu0 0.0
    %89 = vmatpush1.msra.mxu0 %v75
    %90 = vmatprep.subr.mxu0 0.0
    %91 = vmatpush1.msra.mxu0 %v76
    %92 = vmatprep.subr.mxu0 0.0
    %93 = vmatpush1.msra.mxu0 0.0
    %94 = vmatprep.subr.mxu0 0.0
    %95 = vmatpush1.msra.mxu0 0.0
    %96 = vmatprep.subr.mxu0 0.0
    %97 = vmatpush1.msra.mxu0 0.0
    %98 = vmatprep.subr.mxu0 0.0
    %99 = vmatpush1.msra.mxu0 0.0
    %100 = vmatprep.subr.mxu0 0.0
    %101 = vmatpush1.msra.mxu0 0.0
    %102 = vmatprep.subr.mxu0 0.0
    %103 = vmatpush1.msra.mxu0 0.0
    %104 = vmatprep.subr.mxu0 0.0
    %105 = vmatpush1.msra.mxu0 0.0
    %106 = vmatprep.subr.mxu0 0.0
    %107 = vmatpush1.msra.mxu0 0.0
    %108 = vmatprep.subr.mxu0 0.0
    %109 = vmatpush1.msra.mxu0 0.0
    %110 = vmatprep.subr.mxu0 0.0
    %111 = vmatpush1.msra.mxu0 0.0
    %112 = vmatprep.subr.mxu0 0.0
    %113 = vmatpush1.msra.mxu0 0.0
    %114 = vmatprep.subr.mxu0 0.0
    %115 = vmatpush1.msra.mxu0 0.0
    %116 = vmatprep.subr.mxu0 0.0
    %117 = vmatpush1.msra.mxu0 0.0
    %118 = vmatprep.subr.mxu0 0.0
    %119 = vmatpush1.msra.mxu0 0.0
    %120 = vmatprep.subr.mxu0 0.0
    %121 = vmatpush1.msra.mxu0 0.0
    %122 = vmatprep.subr.mxu0 0.0
    %123 = vmatpush1.msra.mxu0 0.0
    %124 = vmatprep.subr.mxu0 0.0
    %125 = vmatpush1.msra.mxu0 0.0
    %126 = vmatprep.subr.mxu0 0.0
    %127 = vmatpush1.msra.mxu0 0.0
    %128 = vmatprep.subr.mxu0 0.0
    %129 = vmatpush1.msra.mxu0 0.0
    %130 = vmatprep.subr.mxu0 0.0
    %131 = vmatpush1.msra.mxu0 0.0
    %132 = vmatprep.subr.mxu0 0.0
    %133 = vmatpush1.msra.mxu0 0.0
    %134 = vmatprep.subr.mxu0 0.0
    %135 = vmatpush1.msra.mxu0 0.0
    %136 = vmatprep.subr.mxu0 0.0
    %137 = vmatpush1.msra.mxu0 0.0
    %138 = vmatprep.subr.mxu0 0.0
    %139 = vmatpush1.msra.mxu0 0.0
    %140 = vmatprep.subr.mxu0 0.0
    %141 = vmatpush1.msra.mxu0 0.0
    %142 = vmatprep.subr.mxu0 0.0
    %143 = vmatpush1.msra.mxu0 0.0
    %144 = vmatprep.subr.mxu0 0.0
    %145 = vmatpush1.msra.mxu0 0.0
    %146 = vmatprep.subr.mxu0 0.0
    %147 = vmatpush1.msra.mxu0 0.0
    %148 = vmatprep.mubr.f32.mxu0 0.0
    %149 = vmatmul.mubr.f32.gmra.mrb[0].mxu0 %v79
    %v150 = vpop.f32.mrb[0].mxu0
    %v151 = vadd.f32 0.0, %v150
    %v152 = vpop.f32.mrb[0].mxu0
    %153 = vmatprep.mubr.f32.mxu0 0.0
    %154 = vmatmul.mubr.f32.gmra.mrb[0].mxu0 %v82
    %v155 = vpop.f32.mrb[0].mxu0
    %v156 = vadd.f32 0.0, %v155
    %v157 = vpop.f32.mrb[0].mxu0
    %158 = vdwg.mxu0
    %160 = vrot.lane.b32.xlu0 %v151, 96
    %v161 = vpop.permute.xlu0 %160
    %vm162 = vcmask 31744
    %v163 = vsel %vm162, %v151, 0
    %v165 = vsel %vm162, %v161, 0
    %167 = vmatprep.subr.mxu0 0.0
    %168 = vmatpush1.xpose.msra.mxu0 %v165
    %169 = vmatprep.subr.mxu0 0.0
    %170 = vmatpush1.xpose.msra.mxu0 0.0
    %171 = vmatprep.subr.mxu0 0.0
    %172 = vmatpush1.xpose.msra.mxu0 0.0
    %173 = vmatprep.subr.mxu0 0.0
    %174 = vmatpush1.xpose.msra.mxu0 0.0
    %175 = vmatprep.subr.mxu0 0.0
    %176 = vmatpush1.xpose.msra.mxu0 0.0
    %177 = vmatprep.subr.mxu0 0.0
    %178 = vmatpush1.xpose.msra.mxu0 0.0
    %179 = vmatprep.subr.mxu0 0.0
    %180 = vmatpush1.xpose.msra.mxu0 0.0
    %181 = vmatprep.subr.mxu0 0.0
    %182 = vmatpush1.xpose.msra.mxu0 0.0
    %183 = vmatprep.subr.mxu0 0.0
    %184 = vmatpush1.xpose.msra.mxu0 0.0
    %185 = vmatprep.subr.mxu0 0.0
    %186 = vmatpush1.xpose.msra.mxu0 0.0
    %187 = vmatprep.subr.mxu0 0.0
    %188 = vmatpush1.xpose.msra.mxu0 0.0
    %189 = vmatprep.subr.mxu0 0.0
    %190 = vmatpush1.xpose.msra.mxu0 0.0
    %191 = vmatprep.subr.mxu0 0.0
    %192 = vmatpush1.xpose.msra.mxu0 0.0
    %193 = vmatprep.subr.mxu0 0.0
    %194 = vmatpush1.xpose.msra.mxu0 0.0
    %195 = vmatprep.subr.mxu0 0.0
    %196 = vmatpush1.xpose.msra.mxu0 0.0
    %197 = vmatprep.subr.mxu0 0.0
    %198 = vmatpush1.xpose.msra.mxu0 0.0
    %199 = vmatprep.subr.mxu0 0.0
    %200 = vmatpush1.xpose.msra.mxu0 0.0
    %201 = vmatprep.subr.mxu0 0.0
    %202 = vmatpush1.xpose.msra.mxu0 0.0
    %203 = vmatprep.subr.mxu0 0.0
    %204 = vmatpush1.xpose.msra.mxu0 0.0
    %205 = vmatprep.subr.mxu0 0.0
    %206 = vmatpush1.xpose.msra.mxu0 0.0
    %207 = vmatprep.subr.mxu0 0.0
    %208 = vmatpush1.xpose.msra.mxu0 0.0
    %209 = vmatprep.subr.mxu0 0.0
    %210 = vmatpush1.xpose.msra.mxu0 0.0
    %211 = vmatprep.subr.mxu0 0.0
    %212 = vmatpush1.xpose.msra.mxu0 0.0
    %213 = vmatprep.subr.mxu0 0.0
    %214 = vmatpush1.xpose.msra.mxu0 0.0
    %215 = vmatprep.subr.mxu0 0.0
    %216 = vmatpush1.xpose.msra.mxu0 0.0
    %217 = vmatprep.subr.mxu0 0.0
    %218 = vmatpush1.xpose.msra.mxu0 0.0
    %219 = vmatprep.subr.mxu0 0.0
    %220 = vmatpush1.xpose.msra.mxu0 0.0
    %221 = vmatprep.subr.mxu0 0.0
    %222 = vmatpush1.xpose.msra.mxu0 0.0
    %223 = vmatprep.subr.mxu0 0.0
    %224 = vmatpush1.xpose.msra.mxu0 0.0
    %225 = vmatprep.subr.mxu0 0.0
    %226 = vmatpush1.xpose.msra.mxu0 0.0
    %227 = vmatprep.subr.mxu0 0.0
    %228 = vmatpush1.xpose.msra.mxu0 0.0
    %229 = vmatprep.subr.mxu0 0.0
    %230 = vmatpush1.xpose.msra.mxu0 0.0
    %231 = vmatprep.mubr.f32.mxu0 0.0
    %232 = vmatmul.mubr.f32.gmra.mrb[0].mxu0 %v163
    %v233 = vpop.f32.mrb[0].mxu0
    %v234 = vadd.f32 0.0, %v233
    %v235 = vpop.f32.mrb[0].mxu0
    %236 = vdwg.mxu0
    %vm237 = vcmask 64512
    %v238 = vsel %vm237, %v234, -inf
    %239 = vmax.xlane.f32.xlu0 %v238
    %v240 = vpop.xlane.xlu0 %239
    %v241 = vsub.f32 %v234, %v240
    %v242 = vmul.f32 %v241, 1.442695
    %v243 = vpow.pop %v242
    %v244 = vsel %vm237, %v243, 0.0
    %245 = vadd.xlane.f32.xlu0 %v244
    %v246 = vpop.xlane.xlu0 %245
    %v247 = vrcp.pop %v246
    %v248 = vmul.f32 %v243, %v247
    %249 = vrot.lane.b32.xlu0 %v151, 64
    %v250 = vpop.permute.xlu0 %249
    %v253 = vsel %vm237, %v248, 0
    %255 = vmatprep.subr.mxu0 0.0
    %256 = vmatpush1.msra.mxu0 %v250
    %257 = vmatprep.subr.mxu0 0.0
    %258 = vmatpush1.msra.mxu0 0.0
    %259 = vmatprep.subr.mxu0 0.0
    %260 = vmatpush1.msra.mxu0 0.0
    %261 = vmatprep.subr.mxu0 0.0
    %262 = vmatpush1.msra.mxu0 0.0
    %263 = vmatprep.subr.mxu0 0.0
    %264 = vmatpush1.msra.mxu0 0.0
    %265 = vmatprep.subr.mxu0 0.0
    %266 = vmatpush1.msra.mxu0 0.0
    %267 = vmatprep.subr.mxu0 0.0
    %268 = vmatpush1.msra.mxu0 0.0
    %269 = vmatprep.subr.mxu0 0.0
    %270 = vmatpush1.msra.mxu0 0.0
    %271 = vmatprep.subr.mxu0 0.0
    %272 = vmatpush1.msra.mxu0 0.0
    %273 = vmatprep.subr.mxu0 0.0
    %274 = vmatpush1.msra.mxu0 0.0
    %275 = vmatprep.subr.mxu0 0.0
    %276 = vmatpush1.msra.mxu0 0.0
    %277 = vmatprep.subr.mxu0 0.0
    %278 = vmatpush1.msra.mxu0 0.0
    %279 = vmatprep.subr.mxu0 0.0
    %280 = vmatpush1.msra.mxu0 0.0
    %281 = vmatprep.subr.mxu0 0.0
    %282 = vmatpush1.msra.mxu0 0.0
    %283 = vmatprep.subr.mxu0 0.0
    %284 = vmatpush1.msra.mxu0 0.0
    %285 = vmatprep.subr.mxu0 0.0
    %286 = vmatpush1.msra.mxu0 0.0
    %287 = vmatprep.subr.mxu0 0.0
    %288 = vmatpush1.msra.mxu0 0.0
    %289 = vmatprep.subr.mxu0 0.0
    %290 = vmatpush1.msra.mxu0 0.0
    %291 = vmatprep.subr.mxu0 0.0
    %292 = vmatpush1.msra.mxu0 0.0
    %293 = vmatprep.subr.mxu0 0.0
    %294 = vmatpush1.msra.mxu0 0.0
    %295 = vmatprep.subr.mxu0 0.0
    %296 = vmatpush1.msra.mxu0 0.0
    %297 = vmatprep.subr.mxu0 0.0
    %298 = vmatpush1.msra.mxu0 0.0
    %299 = vmatprep.subr.mxu0 0.0
    %300 = vmatpush1.msra.mxu0 0.0
    %301 = vmatprep.subr.mxu0 0.0
    %302 = vmatpush1.msra.mxu0 0.0
    %303 = vmatprep.subr.mxu0 0.0
    %304 = vmatpush1.msra.mxu0 0.0
    %305 = vmatprep.subr.mxu0 0.0
    %306 = vmatpush1.msra.mxu0 0.0
    %307 = vmatprep.subr.mxu0 0.0
    %308 = vmatpush1.msra.mxu0 0.0
    %309 = vmatprep.subr.mxu0 0.0
    %310 = vmatpush1.msra.mxu0 0.0
    %311 = vmatprep.subr.mxu0 0.0
    %312 = vmatpush1.msra.mxu0 0.0
    %313 = vmatprep.subr.mxu0 0.0
    %314 = vmatpush1.msra.mxu0 0.0
    %315 = vmatprep.subr.mxu0 0.0
    %316 = vmatpush1.msra.mxu0 0.0
    %317 = vmatprep.subr.mxu0 0.0
    %318 = vmatpush1.msra.mxu0 0.0
    %319 = vmatprep.mubr.f32.mxu0 0.0
    %320 = vmatmul.mubr.f32.gmra.mrb[0].mxu0 %v253
    %v321 = vpop.f32.mrb[0].mxu0
    %v322 = vadd.f32 0.0, %v321
    %v323 = vpop.f32.mrb[0].mxu0
    %324 = vdwg.mxu0
    %325 = vst.msk [vmem:[#allocation2] sm:$0xff] %vm162, %v322
    %326 = vrot.lane.b32.xlu0 %v151, 124
    %v327 = vpop.permute.xlu0 %326
    %328 = vrot.lane.b32.xlu0 %v151, 92
    %v329 = vpop.permute.xlu0 %328
    %v330 = vsel %vm162, %v327, 0
    %v332 = vsel %vm162, %v329, 0
    %334 = vmatprep.subr.mxu0 0.0
    %335 = vmatpush1.xpose.msra.mxu0 %v332
    %336 = vmatprep.subr.mxu0 0.0
    %337 = vmatpush1.xpose.msra.mxu0 0.0
    %338 = vmatprep.subr.mxu0 0.0
    %339 = vmatpush1.xpose.msra.mxu0 0.0
    %340 = vmatprep.subr.mxu0 0.0
    %341 = vmatpush1.xpose.msra.mxu0 0.0
    %342 = vmatprep.subr.mxu0 0.0
    %343 = vmatpush1.xpose.msra.mxu0 0.0
    %344 = vmatprep.subr.mxu0 0.0
    %345 = vmatpush1.xpose.msra.mxu0 0.0
    %346 = vmatprep.subr.mxu0 0.0
    %347 = vmatpush1.xpose.msra.mxu0 0.0
    %348 = vmatprep.subr.mxu0 0.0
    %349 = vmatpush1.xpose.msra.mxu0 0.0
    %350 = vmatprep.subr.mxu0 0.0
    %351 = vmatpush1.xpose.msra.mxu0 0.0
    %352 = vmatprep.subr.mxu0 0.0
    %353 = vmatpush1.xpose.msra.mxu0 0.0
    %354 = vmatprep.subr.mxu0 0.0
    %355 = vmatpush1.xpose.msra.mxu0 0.0
    %356 = vmatprep.subr.mxu0 0.0
    %357 = vmatpush1.xpose.msra.mxu0 0.0
    %358 = vmatprep.subr.mxu0 0.0
    %359 = vmatpush1.xpose.msra.mxu0 0.0
    %360 = vmatprep.subr.mxu0 0.0
    %361 = vmatpush1.xpose.msra.mxu0 0.0
    %362 = vmatprep.subr.mxu0 0.0
    %363 = vmatpush1.xpose.msra.mxu0 0.0
    %364 = vmatprep.subr.mxu0 0.0
    %365 = vmatpush1.xpose.msra.mxu0 0.0
    %366 = vmatprep.subr.mxu0 0.0
    %367 = vmatpush1.xpose.msra.mxu0 0.0
    %368 = vmatprep.subr.mxu0 0.0
    %369 = vmatpush1.xpose.msra.mxu0 0.0
    %370 = vmatprep.subr.mxu0 0.0
    %371 = vmatpush1.xpose.msra.mxu0 0.0
    %372 = vmatprep.subr.mxu0 0.0
    %373 = vmatpush1.xpose.msra.mxu0 0.0
    %374 = vmatprep.subr.mxu0 0.0
    %375 = vmatpush1.xpose.msra.mxu0 0.0
    %376 = vmatprep.subr.mxu0 0.0
    %377 = vmatpush1.xpose.msra.mxu0 0.0
    %378 = vmatprep.subr.mxu0 0.0
    %379 = vmatpush1.xpose.msra.mxu0 0.0
    %380 = vmatprep.subr.mxu0 0.0
    %381 = vmatpush1.xpose.msra.mxu0 0.0
    %382 = vmatprep.subr.mxu0 0.0
    %383 = vmatpush1.xpose.msra.mxu0 0.0
    %384 = vmatprep.subr.mxu0 0.0
    %385 = vmatpush1.xpose.msra.mxu0 0.0
    %386 = vmatprep.subr.mxu0 0.0
    %387 = vmatpush1.xpose.msra.mxu0 0.0
    %388 = vmatprep.subr.mxu0 0.0
    %389 = vmatpush1.xpose.msra.mxu0 0.0
    %390 = vmatprep.subr.mxu0 0.0
    %391 = vmatpush1.xpose.msra.mxu0 0.0
    %392 = vmatprep.subr.mxu0 0.0
    %393 = vmatpush1.xpose.msra.mxu0 0.0
    %394 = vmatprep.subr.mxu0 0.0
    %395 = vmatpush1.xpose.msra.mxu0 0.0
    %396 = vmatprep.subr.mxu0 0.0
    %397 = vmatpush1.xpose.msra.mxu0 0.0
    %398 = vmatprep.mubr.f32.mxu0 0.0
    %399 = vmatmul.mubr.f32.gmra.mrb[0].mxu0 %v330
    %v400 = vpop.f32.mrb[0].mxu0
    %v401 = vadd.f32 0.0, %v400
    %v402 = vpop.f32.mrb[0].mxu0
    %403 = vdwg.mxu0
    %v404 = vsel %vm237, %v401, -inf
    %405 = vmax.xlane.f32.xlu0 %v404
    %v406 = vpop.xlane.xlu0 %405
    %v407 = vsub.f32 %v401, %v406
    %v408 = vmul.f32 %v407, 1.442695
    %v409 = vpow.pop %v408
    %v410 = vsel %vm237, %v409, 0.0
    %411 = vadd.xlane.f32.xlu0 %v410
    %v412 = vpop.xlane.xlu0 %411
    %v413 = vrcp.pop %v412
    %v414 = vmul.f32 %v409, %v413
    %415 = vrot.lane.b32.xlu0 %v151, 60
    %v416 = vpop.permute.xlu0 %415
    %v419 = vsel %vm237, %v414, 0
    %421 = vmatprep.subr.mxu0 0.0
    %422 = vmatpush1.msra.mxu0 %v416
    %423 = vmatprep.subr.mxu0 0.0
    %424 = vmatpush1.msra.mxu0 0.0
    %425 = vmatprep.subr.mxu0 0.0
    %426 = vmatpush1.msra.mxu0 0.0
    %427 = vmatprep.subr.mxu0 0.0
    %428 = vmatpush1.msra.mxu0 0.0
    %429 = vmatprep.subr.mxu0 0.0
    %430 = vmatpush1.msra.mxu0 0.0
    %431 = vmatprep.subr.mxu0 0.0
    %432 = vmatpush1.msra.mxu0 0.0
    %433 = vmatprep.subr.mxu0 0.0
    %434 = vmatpush1.msra.mxu0 0.0
    %435 = vmatprep.subr.mxu0 0.0
    %436 = vmatpush1.msra.mxu0 0.0
    %437 = vmatprep.subr.mxu0 0.0
    %438 = vmatpush1.msra.mxu0 0.0
    %439 = vmatprep.subr.mxu0 0.0
    %440 = vmatpush1.msra.mxu0 0.0
    %441 = vmatprep.subr.mxu0 0.0
    %442 = vmatpush1.msra.mxu0 0.0
    %443 = vmatprep.subr.mxu0 0.0
    %444 = vmatpush1.msra.mxu0 0.0
    %445 = vmatprep.subr.mxu0 0.0
    %446 = vmatpush1.msra.mxu0 0.0
    %447 = vmatprep.subr.mxu0 0.0
    %448 = vmatpush1.msra.mxu0 0.0
    %449 = vmatprep.subr.mxu0 0.0
    %450 = vmatpush1.msra.mxu0 0.0
    %451 = vmatprep.subr.mxu0 0.0
    %452 = vmatpush1.msra.mxu0 0.0
    %453 = vmatprep.subr.mxu0 0.0
    %454 = vmatpush1.msra.mxu0 0.0
    %455 = vmatprep.subr.mxu0 0.0
    %456 = vmatpush1.msra.mxu0 0.0
    %457 = vmatprep.subr.mxu0 0.0
    %458 = vmatpush1.msra.mxu0 0.0
    %459 = vmatprep.subr.mxu0 0.0
    %460 = vmatpush1.msra.mxu0 0.0
    %461 = vmatprep.subr.mxu0 0.0
    %462 = vmatpush1.msra.mxu0 0.0
    %463 = vmatprep.subr.mxu0 0.0
    %464 = vmatpush1.msra.mxu0 0.0
    %465 = vmatprep.subr.mxu0 0.0
    %466 = vmatpush1.msra.mxu0 0.0
    %467 = vmatprep.subr.mxu0 0.0
    %468 = vmatpush1.msra.mxu0 0.0
    %469 = vmatprep.subr.mxu0 0.0
    %470 = vmatpush1.msra.mxu0 0.0
    %471 = vmatprep.subr.mxu0 0.0
    %472 = vmatpush1.msra.mxu0 0.0
    %473 = vmatprep.subr.mxu0 0.0
    %474 = vmatpush1.msra.mxu0 0.0
    %475 = vmatprep.subr.mxu0 0.0
    %476 = vmatpush1.msra.mxu0 0.0
    %477 = vmatprep.subr.mxu0 0.0
    %478 = vmatpush1.msra.mxu0 0.0
    %479 = vmatprep.subr.mxu0 0.0
    %480 = vmatpush1.msra.mxu0 0.0
    %481 = vmatprep.subr.mxu0 0.0
    %482 = vmatpush1.msra.mxu0 0.0
    %483 = vmatprep.subr.mxu0 0.0
    %484 = vmatpush1.msra.mxu0 0.0
    %485 = vmatprep.mubr.f32.mxu0 0.0
    %486 = vmatmul.mubr.f32.gmra.mrb[0].mxu0 %v419
    %v487 = vpop.f32.mrb[0].mxu0
    %v488 = vadd.f32 0.0, %v487
    %v489 = vpop.f32.mrb[0].mxu0
    %490 = vdwg.mxu0
    %492 = vrot.lane.b32.xlu0 %v488, 4
    %v493 = vpop.permute.xlu0 %492
    %vm495 = vcmask 64544
    %496 = vst.msk [vmem:[#allocation2] sm:$0xff] %vm495, %v493
    %497 = vrot.lane.b32.xlu0 %v151, 120
    %v498 = vpop.permute.xlu0 %497
    %499 = vrot.lane.b32.xlu0 %v151, 88
    %v500 = vpop.permute.xlu0 %499
    %v501 = vsel %vm162, %v498, 0
    %v503 = vsel %vm162, %v500, 0
    %505 = vmatprep.subr.mxu0 0.0
    %506 = vmatpush1.xpose.msra.mxu0 %v503
    %507 = vmatprep.subr.mxu0 0.0
    %508 = vmatpush1.xpose.msra.mxu0 0.0
    %509 = vmatprep.subr.mxu0 0.0
    %510 = vmatpush1.xpose.msra.mxu0 0.0
    %511 = vmatprep.subr.mxu0 0.0
    %512 = vmatpush1.xpose.msra.mxu0 0.0
    %513 = vmatprep.subr.mxu0 0.0
    %514 = vmatpush1.xpose.msra.mxu0 0.0
    %515 = vmatprep.subr.mxu0 0.0
    %516 = vmatpush1.xpose.msra.mxu0 0.0
    %517 = vmatprep.subr.mxu0 0.0
    %518 = vmatpush1.xpose.msra.mxu0 0.0
    %519 = vmatprep.subr.mxu0 0.0
    %520 = vmatpush1.xpose.msra.mxu0 0.0
    %521 = vmatprep.subr.mxu0 0.0
    %522 = vmatpush1.xpose.msra.mxu0 0.0
    %523 = vmatprep.subr.mxu0 0.0
    %524 = vmatpush1.xpose.msra.mxu0 0.0
    %525 = vmatprep.subr.mxu0 0.0
    %526 = vmatpush1.xpose.msra.mxu0 0.0
    %527 = vmatprep.subr.mxu0 0.0
    %528 = vmatpush1.xpose.msra.mxu0 0.0
    %529 = vmatprep.subr.mxu0 0.0
    %530 = vmatpush1.xpose.msra.mxu0 0.0
    %531 = vmatprep.subr.mxu0 0.0
    %532 = vmatpush1.xpose.msra.mxu0 0.0
    %533 = vmatprep.subr.mxu0 0.0
    %534 = vmatpush1.xpose.msra.mxu0 0.0
    %535 = vmatprep.subr.mxu0 0.0
    %536 = vmatpush1.xpose.msra.mxu0 0.0
    %537 = vmatprep.subr.mxu0 0.0
    %538 = vmatpush1.xpose.msra.mxu0 0.0
    %539 = vmatprep.subr.mxu0 0.0
    %540 = vmatpush1.xpose.msra.mxu0 0.0
    %541 = vmatprep.subr.mxu0 0.0
    %542 = vmatpush1.xpose.msra.mxu0 0.0
    %543 = vmatprep.subr.mxu0 0.0
    %544 = vmatpush1.xpose.msra.mxu0 0.0
    %545 = vmatprep.subr.mxu0 0.0
    %546 = vmatpush1.xpose.msra.mxu0 0.0
    %547 = vmatprep.subr.mxu0 0.0
    %548 = vmatpush1.xpose.msra.mxu0 0.0
    %549 = vmatprep.subr.mxu0 0.0
    %550 = vmatpush1.xpose.msra.mxu0 0.0
    %551 = vmatprep.subr.mxu0 0.0
    %552 = vmatpush1.xpose.msra.mxu0 0.0
    %553 = vmatprep.subr.mxu0 0.0
    %554 = vmatpush1.xpose.msra.mxu0 0.0
    %555 = vmatprep.subr.mxu0 0.0
    %556 = vmatpush1.xpose.msra.mxu0 0.0
    %557 = vmatprep.subr.mxu0 0.0
    %558 = vmatpush1.xpose.msra.mxu0 0.0
    %559 = vmatprep.subr.mxu0 0.0
    %560 = vmatpush1.xpose.msra.mxu0 0.0
    %561 = vmatprep.subr.mxu0 0.0
    %562 = vmatpush1.xpose.msra.mxu0 0.0
    %563 = vmatprep.subr.mxu0 0.0
    %564 = vmatpush1.xpose.msra.mxu0 0.0
    %565 = vmatprep.subr.mxu0 0.0
    %566 = vmatpush1.xpose.msra.mxu0 0.0
    %567 = vmatprep.subr.mxu0 0.0
    %568 = vmatpush1.xpose.msra.mxu0 0.0
    %569 = vmatprep.mubr.f32.mxu0 0.0
    %570 = vmatmul.mubr.f32.gmra.mrb[0].mxu0 %v501
    %v571 = vpop.f32.mrb[0].mxu0
    %v572 = vadd.f32 0.0, %v571
    %v573 = vpop.f32.mrb[0].mxu0
    %574 = vdwg.mxu0
    %v575 = vsel %vm237, %v572, -inf
    %576 = vmax.xlane.f32.xlu0 %v575
    %v577 = vpop.xlane.xlu0 %576
    %v578 = vsub.f32 %v572, %v577
    %v579 = vmul.f32 %v578, 1.442695
    %v580 = vpow.pop %v579
    %v581 = vsel %vm237, %v580, 0.0
    %582 = vadd.xlane.f32.xlu0 %v581
    %v583 = vpop.xlane.xlu0 %582
    %v584 = vrcp.pop %v583
    %v585 = vmul.f32 %v580, %v584
    %586 = vrot.lane.b32.xlu0 %v151, 56
    %v587 = vpop.permute.xlu0 %586
    %v590 = vsel %vm237, %v585, 0
    %592 = vmatprep.subr.mxu0 0.0
    %593 = vmatpush1.msra.mxu0 %v587
    %594 = vmatprep.subr.mxu0 0.0
    %595 = vmatpush1.msra.mxu0 0.0
    %596 = vmatprep.subr.mxu0 0.0
    %597 = vmatpush1.msra.mxu0 0.0
    %598 = vmatprep.subr.mxu0 0.0
    %599 = vmatpush1.msra.mxu0 0.0
    %600 = vmatprep.subr.mxu0 0.0
    %601 = vmatpush1.msra.mxu0 0.0
    %602 = vmatprep.subr.mxu0 0.0
    %603 = vmatpush1.msra.mxu0 0.0
    %604 = vmatprep.subr.mxu0 0.0
    %605 = vmatpush1.msra.mxu0 0.0
    %606 = vmatprep.subr.mxu0 0.0
    %607 = vmatpush1.msra.mxu0 0.0
    %608 = vmatprep.subr.mxu0 0.0
    %609 = vmatpush1.msra.mxu0 0.0
    %610 = vmatprep.subr.mxu0 0.0
    %611 = vmatpush1.msra.mxu0 0.0
    %612 = vmatprep.subr.mxu0 0.0
    %613 = vmatpush1.msra.mxu0 0.0
    %614 = vmatprep.subr.mxu0 0.0
    %615 = vmatpush1.msra.mxu0 0.0
    %616 = vmatprep.subr.mxu0 0.0
    %617 = vmatpush1.msra.mxu0 0.0
    %618 = vmatprep.subr.mxu0 0.0
    %619 = vmatpush1.msra.mxu0 0.0
    %620 = vmatprep.subr.mxu0 0.0
    %621 = vmatpush1.msra.mxu0 0.0
    %622 = vmatprep.subr.mxu0 0.0
    %623 = vmatpush1.msra.mxu0 0.0
    %624 = vmatprep.subr.mxu0 0.0
    %625 = vmatpush1.msra.mxu0 0.0
    %626 = vmatprep.subr.mxu0 0.0
    %627 = vmatpush1.msra.mxu0 0.0
    %628 = vmatprep.subr.mxu0 0.0
    %629 = vmatpush1.msra.mxu0 0.0
    %630 = vmatprep.subr.mxu0 0.0
    %631 = vmatpush1.msra.mxu0 0.0
    %632 = vmatprep.subr.mxu0 0.0
    %633 = vmatpush1.msra.mxu0 0.0
    %634 = vmatprep.subr.mxu0 0.0
    %635 = vmatpush1.msra.mxu0 0.0
    %636 = vmatprep.subr.mxu0 0.0
    %637 = vmatpush1.msra.mxu0 0.0
    %638 = vmatprep.subr.mxu0 0.0
    %639 = vmatpush1.msra.mxu0 0.0
    %640 = vmatprep.subr.mxu0 0.0
    %641 = vmatpush1.msra.mxu0 0.0
    %642 = vmatprep.subr.mxu0 0.0
    %643 = vmatpush1.msra.mxu0 0.0
    %644 = vmatprep.subr.mxu0 0.0
    %645 = vmatpush1.msra.mxu0 0.0
    %646 = vmatprep.subr.mxu0 0.0
    %647 = vmatpush1.msra.mxu0 0.0
    %648 = vmatprep.subr.mxu0 0.0
    %649 = vmatpush1.msra.mxu0 0.0
    %650 = vmatprep.subr.mxu0 0.0
    %651 = vmatpush1.msra.mxu0 0.0
    %652 = vmatprep.subr.mxu0 0.0
    %653 = vmatpush1.msra.mxu0 0.0
    %654 = vmatprep.subr.mxu0 0.0
    %655 = vmatpush1.msra.mxu0 0.0
    %656 = vmatprep.mubr.f32.mxu0 0.0
    %657 = vmatmul.mubr.f32.gmra.mrb[0].mxu0 %v590
    %v658 = vpop.f32.mrb[0].mxu0
    %v659 = vadd.f32 0.0, %v658
    %v660 = vpop.f32.mrb[0].mxu0
    %661 = vdwg.mxu0
    %663 = vrot.lane.b32.xlu0 %v659, 8
    %v664 = vpop.permute.xlu0 %663
    %vm666 = vcmask 97344
    %667 = vst.msk [vmem:[#allocation2] sm:$0xff] %vm666, %v664
    %668 = vrot.lane.b32.xlu0 %v151, 116
    %v669 = vpop.permute.xlu0 %668
    %670 = vrot.lane.b32.xlu0 %v151, 84
    %v671 = vpop.permute.xlu0 %670
    %v672 = vsel %vm162, %v669, 0
    %v674 = vsel %vm162, %v671, 0
    %676 = vmatprep.subr.mxu0 0.0
    %677 = vmatpush1.xpose.msra.mxu0 %v674
    %678 = vmatprep.subr.mxu0 0.0
    %679 = vmatpush1.xpose.msra.mxu0 0.0
    %680 = vmatprep.subr.mxu0 0.0
    %681 = vmatpush1.xpose.msra.mxu0 0.0
    %682 = vmatprep.subr.mxu0 0.0
    %683 = vmatpush1.xpose.msra.mxu0 0.0
    %684 = vmatprep.subr.mxu0 0.0
    %685 = vmatpush1.xpose.msra.mxu0 0.0
    %686 = vmatprep.subr.mxu0 0.0
    %687 = vmatpush1.xpose.msra.mxu0 0.0
    %688 = vmatprep.subr.mxu0 0.0
    %689 = vmatpush1.xpose.msra.mxu0 0.0
    %690 = vmatprep.subr.mxu0 0.0
    %691 = vmatpush1.xpose.msra.mxu0 0.0
    %692 = vmatprep.subr.mxu0 0.0
    %693 = vmatpush1.xpose.msra.mxu0 0.0
    %694 = vmatprep.subr.mxu0 0.0
    %695 = vmatpush1.xpose.msra.mxu0 0.0
    %696 = vmatprep.subr.mxu0 0.0
    %697 = vmatpush1.xpose.msra.mxu0 0.0
    %698 = vmatprep.subr.mxu0 0.0
    %699 = vmatpush1.xpose.msra.mxu0 0.0
    %700 = vmatprep.subr.mxu0 0.0
    %701 = vmatpush1.xpose.msra.mxu0 0.0
    %702 = vmatprep.subr.mxu0 0.0
    %703 = vmatpush1.xpose.msra.mxu0 0.0
    %704 = vmatprep.subr.mxu0 0.0
    %705 = vmatpush1.xpose.msra.mxu0 0.0
    %706 = vmatprep.subr.mxu0 0.0
    %707 = vmatpush1.xpose.msra.mxu0 0.0
    %708 = vmatprep.subr.mxu0 0.0
    %709 = vmatpush1.xpose.msra.mxu0 0.0
    %710 = vmatprep.subr.mxu0 0.0
    %711 = vmatpush1.xpose.msra.mxu0 0.0
    %712 = vmatprep.subr.mxu0 0.0
    %713 = vmatpush1.xpose.msra.mxu0 0.0
    %714 = vmatprep.subr.mxu0 0.0
    %715 = vmatpush1.xpose.msra.mxu0 0.0
    %716 = vmatprep.subr.mxu0 0.0
    %717 = vmatpush1.xpose.msra.mxu0 0.0
    %718 = vmatprep.subr.mxu0 0.0
    %719 = vmatpush1.xpose.msra.mxu0 0.0
    %720 = vmatprep.subr.mxu0 0.0
    %721 = vmatpush1.xpose.msra.mxu0 0.0
    %722 = vmatprep.subr.mxu0 0.0
    %723 = vmatpush1.xpose.msra.mxu0 0.0
    %724 = vmatprep.subr.mxu0 0.0
    %725 = vmatpush1.xpose.msra.mxu0 0.0
    %726 = vmatprep.subr.mxu0 0.0
    %727 = vmatpush1.xpose.msra.mxu0 0.0
    %728 = vmatprep.subr.mxu0 0.0
    %729 = vmatpush1.xpose.msra.mxu0 0.0
    %730 = vmatprep.subr.mxu0 0.0
    %731 = vmatpush1.xpose.msra.mxu0 0.0
    %732 = vmatprep.subr.mxu0 0.0
    %733 = vmatpush1.xpose.msra.mxu0 0.0
    %734 = vmatprep.subr.mxu0 0.0
    %735 = vmatpush1.xpose.msra.mxu0 0.0
    %736 = vmatprep.subr.mxu0 0.0
    %737 = vmatpush1.xpose.msra.mxu0 0.0
    %738 = vmatprep.subr.mxu0 0.0
    %739 = vmatpush1.xpose.msra.mxu0 0.0
    %740 = vmatprep.mubr.f32.mxu0 0.0
    %741 = vmatmul.mubr.f32.gmra.mrb[0].mxu0 %v672
    %v742 = vpop.f32.mrb[0].mxu0
    %v743 = vadd.f32 0.0, %v742
    %v744 = vpop.f32.mrb[0].mxu0
    %745 = vdwg.mxu0
    %v746 = vsel %vm237, %v743, -inf
    %747 = vmax.xlane.f32.xlu0 %v746
    %v748 = vpop.xlane.xlu0 %747
    %v749 = vsub.f32 %v743, %v748
    %v750 = vmul.f32 %v749, 1.442695
    %v751 = vpow.pop %v750
    %v752 = vsel %vm237, %v751, 0.0
    %753 = vadd.xlane.f32.xlu0 %v752
    %v754 = vpop.xlane.xlu0 %753
    %v755 = vrcp.pop %v754
    %v756 = vmul.f32 %v751, %v755
    %757 = vrot.lane.b32.xlu0 %v151, 52
    %v758 = vpop.permute.xlu0 %757
    %v761 = vsel %vm237, %v756, 0
    %763 = vmatprep.subr.mxu0 0.0
    %764 = vmatpush1.msra.mxu0 %v758
    %765 = vmatprep.subr.mxu0 0.0
    %766 = vmatpush1.msra.mxu0 0.0
    %767 = vmatprep.subr.mxu0 0.0
    %768 = vmatpush1.msra.mxu0 0.0
    %769 = vmatprep.subr.mxu0 0.0
    %770 = vmatpush1.msra.mxu0 0.0
    %771 = vmatprep.subr.mxu0 0.0
    %772 = vmatpush1.msra.mxu0 0.0
    %773 = vmatprep.subr.mxu0 0.0
    %774 = vmatpush1.msra.mxu0 0.0
    %775 = vmatprep.subr.mxu0 0.0
    %776 = vmatpush1.msra.mxu0 0.0
    %777 = vmatprep.subr.mxu0 0.0
    %778 = vmatpush1.msra.mxu0 0.0
    %779 = vmatprep.subr.mxu0 0.0
    %780 = vmatpush1.msra.mxu0 0.0
    %781 = vmatprep.subr.mxu0 0.0
    %782 = vmatpush1.msra.mxu0 0.0
    %783 = vmatprep.subr.mxu0 0.0
    %784 = vmatpush1.msra.mxu0 0.0
    %785 = vmatprep.subr.mxu0 0.0
    %786 = vmatpush1.msra.mxu0 0.0
    %787 = vmatprep.subr.mxu0 0.0
    %788 = vmatpush1.msra.mxu0 0.0
    %789 = vmatprep.subr.mxu0 0.0
    %790 = vmatpush1.msra.mxu0 0.0
    %791 = vmatprep.subr.mxu0 0.0
    %792 = vmatpush1.msra.mxu0 0.0
    %793 = vmatprep.subr.mxu0 0.0
    %794 = vmatpush1.msra.mxu0 0.0
    %795 = vmatprep.subr.mxu0 0.0
    %796 = vmatpush1.msra.mxu0 0.0
    %797 = vmatprep.subr.mxu0 0.0
    %798 = vmatpush1.msra.mxu0 0.0
    %799 = vmatprep.subr.mxu0 0.0
    %800 = vmatpush1.msra.mxu0 0.0
    %801 = vmatprep.subr.mxu0 0.0
    %802 = vmatpush1.msra.mxu0 0.0
    %803 = vmatprep.subr.mxu0 0.0
    %804 = vmatpush1.msra.mxu0 0.0
    %805 = vmatprep.subr.mxu0 0.0
    %806 = vmatpush1.msra.mxu0 0.0
    %807 = vmatprep.subr.mxu0 0.0
    %808 = vmatpush1.msra.mxu0 0.0
    %809 = vmatprep.subr.mxu0 0.0
    %810 = vmatpush1.msra.mxu0 0.0
    %811 = vmatprep.subr.mxu0 0.0
    %812 = vmatpush1.msra.mxu0 0.0
    %813 = vmatprep.subr.mxu0 0.0
    %814 = vmatpush1.msra.mxu0 0.0
    %815 = vmatprep.subr.mxu0 0.0
    %816 = vmatpush1.msra.mxu0 0.0
    %817 = vmatprep.subr.mxu0 0.0
    %818 = vmatpush1.msra.mxu0 0.0
    %819 = vmatprep.subr.mxu0 0.0
    %820 = vmatpush1.msra.mxu0 0.0
    %821 = vmatprep.subr.mxu0 0.0
    %822 = vmatpush1.msra.mxu0 0.0
    %823 = vmatprep.subr.mxu0 0.0
    %824 = vmatpush1.msra.mxu0 0.0
    %825 = vmatprep.subr.mxu0 0.0
    %826 = vmatpush1.msra.mxu0 0.0
    %827 = vmatprep.mubr.f32.mxu0 0.0
    %828 = vmatmul.mubr.f32.gmra.mrb[0].mxu0 %v761
    %v829 = vpop.f32.mrb[0].mxu0
    %v830 = vadd.f32 0.0, %v829
    %v831 = vpop.f32.mrb[0].mxu0
    %832 = vdwg.mxu0
    %834 = vrot.lane.b32.xlu0 %v830, 12
    %v835 = vpop.permute.xlu0 %834
    %vm837 = vcmask 130144
    %838 = vst.msk [vmem:[#allocation2] sm:$0xff] %vm837, %v835
    %839 = vrot.lane.b32.xlu0 %v151, 112
    %v840 = vpop.permute.xlu0 %839
    %841 = vrot.lane.b32.xlu0 %v151, 80
    %v842 = vpop.permute.xlu0 %841
    %v843 = vsel %vm162, %v840, 0
    %v845 = vsel %vm162, %v842, 0
    %847 = vmatprep.subr.mxu0 0.0
    %848 = vmatpush1.xpose.msra.mxu0 %v845
    %849 = vmatprep.subr.mxu0 0.0
    %850 = vmatpush1.xpose.msra.mxu0 0.0
    %851 = vmatprep.subr.mxu0 0.0
    %852 = vmatpush1.xpose.msra.mxu0 0.0
    %853 = vmatprep.subr.mxu0 0.0
    %854 = vmatpush1.xpose.msra.mxu0 0.0
    %855 = vmatprep.subr.mxu0 0.0
    %856 = vmatpush1.xpose.msra.mxu0 0.0
    %857 = vmatprep.subr.mxu0 0.0
    %858 = vmatpush1.xpose.msra.mxu0 0.0
    %859 = vmatprep.subr.mxu0 0.0
    %860 = vmatpush1.xpose.msra.mxu0 0.0
    %861 = vmatprep.subr.mxu0 0.0
    %862 = vmatpush1.xpose.msra.mxu0 0.0
    %863 = vmatprep.subr.mxu0 0.0
    %864 = vmatpush1.xpose.msra.mxu0 0.0
    %865 = vmatprep.subr.mxu0 0.0
    %866 = vmatpush1.xpose.msra.mxu0 0.0
    %867 = vmatprep.subr.mxu0 0.0
    %868 = vmatpush1.xpose.msra.mxu0 0.0
    %869 = vmatprep.subr.mxu0 0.0
    %870 = vmatpush1.xpose.msra.mxu0 0.0
    %871 = vmatprep.subr.mxu0 0.0
    %872 = vmatpush1.xpose.msra.mxu0 0.0
    %873 = vmatprep.subr.mxu0 0.0
    %874 = vmatpush1.xpose.msra.mxu0 0.0
    %875 = vmatprep.subr.mxu0 0.0
    %876 = vmatpush1.xpose.msra.mxu0 0.0
    %877 = vmatprep.subr.mxu0 0.0
    %878 = vmatpush1.xpose.msra.mxu0 0.0
    %879 = vmatprep.subr.mxu0 0.0
    %880 = vmatpush1.xpose.msra.mxu0 0.0
    %881 = vmatprep.subr.mxu0 0.0
    %882 = vmatpush1.xpose.msra.mxu0 0.0
    %883 = vmatprep.subr.mxu0 0.0
    %884 = vmatpush1.xpose.msra.mxu0 0.0
    %885 = vmatprep.subr.mxu0 0.0
    %886 = vmatpush1.xpose.msra.mxu0 0.0
    %887 = vmatprep.subr.mxu0 0.0
    %888 = vmatpush1.xpose.msra.mxu0 0.0
    %889 = vmatprep.subr.mxu0 0.0
    %890 = vmatpush1.xpose.msra.mxu0 0.0
    %891 = vmatprep.subr.mxu0 0.0
    %892 = vmatpush1.xpose.msra.mxu0 0.0
    %893 = vmatprep.subr.mxu0 0.0
    %894 = vmatpush1.xpose.msra.mxu0 0.0
    %895 = vmatprep.subr.mxu0 0.0
    %896 = vmatpush1.xpose.msra.mxu0 0.0
    %897 = vmatprep.subr.mxu0 0.0
    %898 = vmatpush1.xpose.msra.mxu0 0.0
    %899 = vmatprep.subr.mxu0 0.0
    %900 = vmatpush1.xpose.msra.mxu0 0.0
    %901 = vmatprep.subr.mxu0 0.0
    %902 = vmatpush1.xpose.msra.mxu0 0.0
    %903 = vmatprep.subr.mxu0 0.0
    %904 = vmatpush1.xpose.msra.mxu0 0.0
    %905 = vmatprep.subr.mxu0 0.0
    %906 = vmatpush1.xpose.msra.mxu0 0.0
    %907 = vmatprep.subr.mxu0 0.0
    %908 = vmatpush1.xpose.msra.mxu0 0.0
    %909 = vmatprep.subr.mxu0 0.0
    %910 = vmatpush1.xpose.msra.mxu0 0.0
    %911 = vmatprep.mubr.f32.mxu0 0.0
    %912 = vmatmul.mubr.f32.gmra.mrb[0].mxu0 %v843
    %v913 = vpop.f32.mrb[0].mxu0
    %v914 = vadd.f32 0.0, %v913
    %v915 = vpop.f32.mrb[0].mxu0
    %916 = vdwg.mxu0
    %v917 = vsel %vm237, %v914, -inf
    %918 = vmax.xlane.f32.xlu0 %v917
    %v919 = vpop.xlane.xlu0 %918
    %v920 = vsub.f32 %v914, %v919
    %v921 = vmul.f32 %v920, 1.442695
    %v922 = vpow.pop %v921
    %v923 = vsel %vm237, %v922, 0.0
    %924 = vadd.xlane.f32.xlu0 %v923
    %v925 = vpop.xlane.xlu0 %924
    %v926 = vrcp.pop %v925
    %v927 = vmul.f32 %v922, %v926
    %928 = vrot.lane.b32.xlu0 %v151, 48
    %v929 = vpop.permute.xlu0 %928
    %v932 = vsel %vm237, %v927, 0
    %934 = vmatprep.subr.mxu0 0.0
    %935 = vmatpush1.msra.mxu0 %v929
    %936 = vmatprep.subr.mxu0 0.0
    %937 = vmatpush1.msra.mxu0 0.0
    %938 = vmatprep.subr.mxu0 0.0
    %939 = vmatpush1.msra.mxu0 0.0
    %940 = vmatprep.subr.mxu0 0.0
    %941 = vmatpush1.msra.mxu0 0.0
    %942 = vmatprep.subr.mxu0 0.0
    %943 = vmatpush1.msra.mxu0 0.0
    %944 = vmatprep.subr.mxu0 0.0
    %945 = vmatpush1.msra.mxu0 0.0
    %946 = vmatprep.subr.mxu0 0.0
    %947 = vmatpush1.msra.mxu0 0.0
    %948 = vmatprep.subr.mxu0 0.0
    %949 = vmatpush1.msra.mxu0 0.0
    %950 = vmatprep.subr.mxu0 0.0
    %951 = vmatpush1.msra.mxu0 0.0
    %952 = vmatprep.subr.mxu0 0.0
    %953 = vmatpush1.msra.mxu0 0.0
    %954 = vmatprep.subr.mxu0 0.0
    %955 = vmatpush1.msra.mxu0 0.0
    %956 = vmatprep.subr.mxu0 0.0
    %957 = vmatpush1.msra.mxu0 0.0
    %958 = vmatprep.subr.mxu0 0.0
    %959 = vmatpush1.msra.mxu0 0.0
    %960 = vmatprep.subr.mxu0 0.0
    %961 = vmatpush1.msra.mxu0 0.0
    %962 = vmatprep.subr.mxu0 0.0
    %963 = vmatpush1.msra.mxu0 0.0
    %964 = vmatprep.subr.mxu0 0.0
    %965 = vmatpush1.msra.mxu0 0.0
    %966 = vmatprep.subr.mxu0 0.0
    %967 = vmatpush1.msra.mxu0 0.0
    %968 = vmatprep.subr.mxu0 0.0
    %969 = vmatpush1.msra.mxu0 0.0
    %970 = vmatprep.subr.mxu0 0.0
    %971 = vmatpush1.msra.mxu0 0.0
    %972 = vmatprep.subr.mxu0 0.0
    %973 = vmatpush1.msra.mxu0 0.0
    %974 = vmatprep.subr.mxu0 0.0
    %975 = vmatpush1.msra.mxu0 0.0
    %976 = vmatprep.subr.mxu0 0.0
    %977 = vmatpush1.msra.mxu0 0.0
    %978 = vmatprep.subr.mxu0 0.0
    %979 = vmatpush1.msra.mxu0 0.0
    %980 = vmatprep.subr.mxu0 0.0
    %981 = vmatpush1.msra.mxu0 0.0
    %982 = vmatprep.subr.mxu0 0.0
    %983 = vmatpush1.msra.mxu0 0.0
    %984 = vmatprep.subr.mxu0 0.0
    %985 = vmatpush1.msra.mxu0 0.0
    %986 = vmatprep.subr.mxu0 0.0
    %987 = vmatpush1.msra.mxu0 0.0
    %988 = vmatprep.subr.mxu0 0.0
    %989 = vmatpush1.msra.mxu0 0.0
    %990 = vmatprep.subr.mxu0 0.0
    %991 = vmatpush1.msra.mxu0 0.0
    %992 = vmatprep.subr.mxu0 0.0
    %993 = vmatpush1.msra.mxu0 0.0
    %994 = vmatprep.subr.mxu0 0.0
    %995 = vmatpush1.msra.mxu0 0.0
    %996 = vmatprep.subr.mxu0 0.0
    %997 = vmatpush1.msra.mxu0 0.0
    %998 = vmatprep.mubr.f32.mxu0 0.0
    %999 = vmatmul.mubr.f32.gmra.mrb[0].mxu0 %v932
    %v1000 = vpop.f32.mrb[0].mxu0
    %v1001 = vadd.f32 0.0, %v1000
    %v1002 = vpop.f32.mrb[0].mxu0
    %1003 = vdwg.mxu0
    %1005 = vrot.lane.b32.xlu0 %v1001, 16
    %v1006 = vpop.permute.xlu0 %1005
    %vm1008 = vcmask 162944
    %1009 = vst.msk [vmem:[#allocation2] sm:$0xff] %vm1008, %v1006
    %1010 = vrot.lane.b32.xlu0 %v151, 108
    %v1011 = vpop.permute.xlu0 %1010
    %1012 = vrot.lane.b32.xlu0 %v151, 76
    %v1013 = vpop.permute.xlu0 %1012
    %v1014 = vsel %vm162, %v1011, 0
    %v1016 = vsel %vm162, %v1013, 0
    %1018 = vmatprep.subr.mxu0 0.0
    %1019 = vmatpush1.xpose.msra.mxu0 %v1016
    %1020 = vmatprep.subr.mxu0 0.0
    %1021 = vmatpush1.xpose.msra.mxu0 0.0
    %1022 = vmatprep.subr.mxu0 0.0
    %1023 = vmatpush1.xpose.msra.mxu0 0.0
    %1024 = vmatprep.subr.mxu0 0.0
    %1025 = vmatpush1.xpose.msra.mxu0 0.0
    %1026 = vmatprep.subr.mxu0 0.0
    %1027 = vmatpush1.xpose.msra.mxu0 0.0
    %1028 = vmatprep.subr.mxu0 0.0
    %1029 = vmatpush1.xpose.msra.mxu0 0.0
    %1030 = vmatprep.subr.mxu0 0.0
    %1031 = vmatpush1.xpose.msra.mxu0 0.0
    %1032 = vmatprep.subr.mxu0 0.0
    %1033 = vmatpush1.xpose.msra.mxu0 0.0
    %1034 = vmatprep.subr.mxu0 0.0
    %1035 = vmatpush1.xpose.msra.mxu0 0.0
    %1036 = vmatprep.subr.mxu0 0.0
    %1037 = vmatpush1.xpose.msra.mxu0 0.0
    %1038 = vmatprep.subr.mxu0 0.0
    %1039 = vmatpush1.xpose.msra.mxu0 0.0
    %1040 = vmatprep.subr.mxu0 0.0
    %1041 = vmatpush1.xpose.msra.mxu0 0.0
    %1042 = vmatprep.subr.mxu0 0.0
    %1043 = vmatpush1.xpose.msra.mxu0 0.0
    %1044 = vmatprep.subr.mxu0 0.0
    %1045 = vmatpush1.xpose.msra.mxu0 0.0
    %1046 = vmatprep.subr.mxu0 0.0
    %1047 = vmatpush1.xpose.msra.mxu0 0.0
    %1048 = vmatprep.subr.mxu0 0.0
    %1049 = vmatpush1.xpose.msra.mxu0 0.0
    %1050 = vmatprep.subr.mxu0 0.0
    %1051 = vmatpush1.xpose.msra.mxu0 0.0
    %1052 = vmatprep.subr.mxu0 0.0
    %1053 = vmatpush1.xpose.msra.mxu0 0.0
    %1054 = vmatprep.subr.mxu0 0.0
    %1055 = vmatpush1.xpose.msra.mxu0 0.0
    %1056 = vmatprep.subr.mxu0 0.0
    %1057 = vmatpush1.xpose.msra.mxu0 0.0
    %1058 = vmatprep.subr.mxu0 0.0
    %1059 = vmatpush1.xpose.msra.mxu0 0.0
    %1060 = vmatprep.subr.mxu0 0.0
    %1061 = vmatpush1.xpose.msra.mxu0 0.0
    %1062 = vmatprep.subr.mxu0 0.0
    %1063 = vmatpush1.xpose.msra.mxu0 0.0
    %1064 = vmatprep.subr.mxu0 0.0
    %1065 = vmatpush1.xpose.msra.mxu0 0.0
    %1066 = vmatprep.subr.mxu0 0.0
    %1067 = vmatpush1.xpose.msra.mxu0 0.0
    %1068 = vmatprep.subr.mxu0 0.0
    %1069 = vmatpush1.xpose.msra.mxu0 0.0
    %1070 = vmatprep.subr.mxu0 0.0
    %1071 = vmatpush1.xpose.msra.mxu0 0.0
    %1072 = vmatprep.subr.mxu0 0.0
    %1073 = vmatpush1.xpose.msra.mxu0 0.0
    %1074 = vmatprep.subr.mxu0 0.0
    %1075 = vmatpush1.xpose.msra.mxu0 0.0
    %1076 = vmatprep.subr.mxu0 0.0
    %1077 = vmatpush1.xpose.msra.mxu0 0.0
    %1078 = vmatprep.subr.mxu0 0.0
    %1079 = vmatpush1.xpose.msra.mxu0 0.0
    %1080 = vmatprep.subr.mxu0 0.0
    %1081 = vmatpush1.xpose.msra.mxu0 0.0
    %1082 = vmatprep.mubr.f32.mxu0 0.0
    %1083 = vmatmul.mubr.f32.gmra.mrb[0].mxu0 %v1014
    %v1084 = vpop.f32.mrb[0].mxu0
    %v1085 = vadd.f32 0.0, %v1084
    %v1086 = vpop.f32.mrb[0].mxu0
    %1087 = vdwg.mxu0
    %v1088 = vsel %vm237, %v1085, -inf
    %1089 = vmax.xlane.f32.xlu0 %v1088
    %v1090 = vpop.xlane.xlu0 %1089
    %v1091 = vsub.f32 %v1085, %v1090
    %v1092 = vmul.f32 %v1091, 1.442695
    %v1093 = vpow.pop %v1092
    %v1094 = vsel %vm237, %v1093, 0.0
    %1095 = vadd.xlane.f32.xlu0 %v1094
    %v1096 = vpop.xlane.xlu0 %1095
    %v1097 = vrcp.pop %v1096
    %v1098 = vmul.f32 %v1093, %v1097
    %1099 = vrot.lane.b32.xlu0 %v151, 44
    %v1100 = vpop.permute.xlu0 %1099
    %v1103 = vsel %vm237, %v1098, 0
    %1105 = vmatprep.subr.mxu0 0.0
    %1106 = vmatpush1.msra.mxu0 %v1100
    %1107 = vmatprep.subr.mxu0 0.0
    %1108 = vmatpush1.msra.mxu0 0.0
    %1109 = vmatprep.subr.mxu0 0.0
    %1110 = vmatpush1.msra.mxu0 0.0
    %1111 = vmatprep.subr.mxu0 0.0
    %1112 = vmatpush1.msra.mxu0 0.0
    %1113 = vmatprep.subr.mxu0 0.0
    %1114 = vmatpush1.msra.mxu0 0.0
    %1115 = vmatprep.subr.mxu0 0.0
    %1116 = vmatpush1.msra.mxu0 0.0
    %1117 = vmatprep.subr.mxu0 0.0
    %1118 = vmatpush1.msra.mxu0 0.0
    %1119 = vmatprep.subr.mxu0 0.0
    %1120 = vmatpush1.msra.mxu0 0.0
    %1121 = vmatprep.subr.mxu0 0.0
    %1122 = vmatpush1.msra.mxu0 0.0
    %1123 = vmatprep.subr.mxu0 0.0
    %1124 = vmatpush1.msra.mxu0 0.0
    %1125 = vmatprep.subr.mxu0 0.0
    %1126 = vmatpush1.msra.mxu0 0.0
    %1127 = vmatprep.subr.mxu0 0.0
    %1128 = vmatpush1.msra.mxu0 0.0
    %1129 = vmatprep.subr.mxu0 0.0
    %1130 = vmatpush1.msra.mxu0 0.0
    %1131 = vmatprep.subr.mxu0 0.0
    %1132 = vmatpush1.msra.mxu0 0.0
    %1133 = vmatprep.subr.mxu0 0.0
    %1134 = vmatpush1.msra.mxu0 0.0
    %1135 = vmatprep.subr.mxu0 0.0
    %1136 = vmatpush1.msra.mxu0 0.0
    %1137 = vmatprep.subr.mxu0 0.0
    %1138 = vmatpush1.msra.mxu0 0.0
    %1139 = vmatprep.subr.mxu0 0.0
    %1140 = vmatpush1.msra.mxu0 0.0
    %1141 = vmatprep.subr.mxu0 0.0
    %1142 = vmatpush1.msra.mxu0 0.0
    %1143 = vmatprep.subr.mxu0 0.0
    %1144 = vmatpush1.msra.mxu0 0.0
    %1145 = vmatprep.subr.mxu0 0.0
    %1146 = vmatpush1.msra.mxu0 0.0
    %1147 = vmatprep.subr.mxu0 0.0
    %1148 = vmatpush1.msra.mxu0 0.0
    %1149 = vmatprep.subr.mxu0 0.0
    %1150 = vmatpush1.msra.mxu0 0.0
    %1151 = vmatprep.subr.mxu0 0.0
    %1152 = vmatpush1.msra.mxu0 0.0
    %1153 = vmatprep.subr.mxu0 0.0
    %1154 = vmatpush1.msra.mxu0 0.0
    %1155 = vmatprep.subr.mxu0 0.0
    %1156 = vmatpush1.msra.mxu0 0.0
    %1157 = vmatprep.subr.mxu0 0.0
    %1158 = vmatpush1.msra.mxu0 0.0
    %1159 = vmatprep.subr.mxu0 0.0
    %1160 = vmatpush1.msra.mxu0 0.0
    %1161 = vmatprep.subr.mxu0 0.0
    %1162 = vmatpush1.msra.mxu0 0.0
    %1163 = vmatprep.subr.mxu0 0.0
    %1164 = vmatpush1.msra.mxu0 0.0
    %1165 = vmatprep.subr.mxu0 0.0
    %1166 = vmatpush1.msra.mxu0 0.0
    %1167 = vmatprep.subr.mxu0 0.0
    %1168 = vmatpush1.msra.mxu0 0.0
    %1169 = vmatprep.mubr.f32.mxu0 0.0
    %1170 = vmatmul.mubr.f32.gmra.mrb[0].mxu0 %v1103
    %v1171 = vpop.f32.mrb[0].mxu0
    %v1172 = vadd.f32 0.0, %v1171
    %v1173 = vpop.f32.mrb[0].mxu0
    %1174 = vdwg.mxu0
    %1176 = vrot.lane.b32.xlu0 %v1172, 20
    %v1177 = vpop.permute.xlu0 %1176
    %vm1179 = vcmask 195744
    %1180 = vst.msk [vmem:[#allocation2] sm:$0xff] %vm1179, %v1177
    %1181 = vrot.lane.b32.xlu0 %v151, 104
    %v1182 = vpop.permute.xlu0 %1181
    %1183 = vrot.lane.b32.xlu0 %v151, 72
    %v1184 = vpop.permute.xlu0 %1183
    %v1185 = vsel %vm162, %v1182, 0
    %v1187 = vsel %vm162, %v1184, 0
    %1189 = vmatprep.subr.mxu0 0.0
    %1190 = vmatpush1.xpose.msra.mxu0 %v1187
    %1191 = vmatprep.subr.mxu0 0.0
    %1192 = vmatpush1.xpose.msra.mxu0 0.0
    %1193 = vmatprep.subr.mxu0 0.0
    %1194 = vmatpush1.xpose.msra.mxu0 0.0
    %1195 = vmatprep.subr.mxu0 0.0
    %1196 = vmatpush1.xpose.msra.mxu0 0.0
    %1197 = vmatprep.subr.mxu0 0.0
    %1198 = vmatpush1.xpose.msra.mxu0 0.0
    %1199 = vmatprep.subr.mxu0 0.0
    %1200 = vmatpush1.xpose.msra.mxu0 0.0
    %1201 = vmatprep.subr.mxu0 0.0
    %1202 = vmatpush1.xpose.msra.mxu0 0.0
    %1203 = vmatprep.subr.mxu0 0.0
    %1204 = vmatpush1.xpose.msra.mxu0 0.0
    %1205 = vmatprep.subr.mxu0 0.0
    %1206 = vmatpush1.xpose.msra.mxu0 0.0
    %1207 = vmatprep.subr.mxu0 0.0
    %1208 = vmatpush1.xpose.msra.mxu0 0.0
    %1209 = vmatprep.subr.mxu0 0.0
    %1210 = vmatpush1.xpose.msra.mxu0 0.0
    %1211 = vmatprep.subr.mxu0 0.0
    %1212 = vmatpush1.xpose.msra.mxu0 0.0
    %1213 = vmatprep.subr.mxu0 0.0
    %1214 = vmatpush1.xpose.msra.mxu0 0.0
    %1215 = vmatprep.subr.mxu0 0.0
    %1216 = vmatpush1.xpose.msra.mxu0 0.0
    %1217 = vmatprep.subr.mxu0 0.0
    %1218 = vmatpush1.xpose.msra.mxu0 0.0
    %1219 = vmatprep.subr.mxu0 0.0
    %1220 = vmatpush1.xpose.msra.mxu0 0.0
    %1221 = vmatprep.subr.mxu0 0.0
    %1222 = vmatpush1.xpose.msra.mxu0 0.0
    %1223 = vmatprep.subr.mxu0 0.0
    %1224 = vmatpush1.xpose.msra.mxu0 0.0
    %1225 = vmatprep.subr.mxu0 0.0
    %1226 = vmatpush1.xpose.msra.mxu0 0.0
    %1227 = vmatprep.subr.mxu0 0.0
    %1228 = vmatpush1.xpose.msra.mxu0 0.0
    %1229 = vmatprep.subr.mxu0 0.0
    %1230 = vmatpush1.xpose.msra.mxu0 0.0
    %1231 = vmatprep.subr.mxu0 0.0
    %1232 = vmatpush1.xpose.msra.mxu0 0.0
    %1233 = vmatprep.subr.mxu0 0.0
    %1234 = vmatpush1.xpose.msra.mxu0 0.0
    %1235 = vmatprep.subr.mxu0 0.0
    %1236 = vmatpush1.xpose.msra.mxu0 0.0
    %1237 = vmatprep.subr.mxu0 0.0
    %1238 = vmatpush1.xpose.msra.mxu0 0.0
    %1239 = vmatprep.subr.mxu0 0.0
    %1240 = vmatpush1.xpose.msra.mxu0 0.0
    %1241 = vmatprep.subr.mxu0 0.0
    %1242 = vmatpush1.xpose.msra.mxu0 0.0
    %1243 = vmatprep.subr.mxu0 0.0
    %1244 = vmatpush1.xpose.msra.mxu0 0.0
    %1245 = vmatprep.subr.mxu0 0.0
    %1246 = vmatpush1.xpose.msra.mxu0 0.0
    %1247 = vmatprep.subr.mxu0 0.0
    %1248 = vmatpush1.xpose.msra.mxu0 0.0
    %1249 = vmatprep.subr.mxu0 0.0
    %1250 = vmatpush1.xpose.msra.mxu0 0.0
    %1251 = vmatprep.subr.mxu0 0.0
    %1252 = vmatpush1.xpose.msra.mxu0 0.0
    %1253 = vmatprep.mubr.f32.mxu0 0.0
    %1254 = vmatmul.mubr.f32.gmra.mrb[0].mxu0 %v1185
    %v1255 = vpop.f32.mrb[0].mxu0
    %v1256 = vadd.f32 0.0, %v1255
    %v1257 = vpop.f32.mrb[0].mxu0
    %1258 = vdwg.mxu0
    %v1259 = vsel %vm237, %v1256, -inf
    %1260 = vmax.xlane.f32.xlu0 %v1259
    %v1261 = vpop.xlane.xlu0 %1260
    %v1262 = vsub.f32 %v1256, %v1261
    %v1263 = vmul.f32 %v1262, 1.442695
    %v1264 = vpow.pop %v1263
    %v1265 = vsel %vm237, %v1264, 0.0
    %1266 = vadd.xlane.f32.xlu0 %v1265
    %v1267 = vpop.xlane.xlu0 %1266
    %v1268 = vrcp.pop %v1267
    %v1269 = vmul.f32 %v1264, %v1268
    %1270 = vrot.lane.b32.xlu0 %v151, 40
    %v1271 = vpop.permute.xlu0 %1270
    %v1274 = vsel %vm237, %v1269, 0
    %1276 = vmatprep.subr.mxu0 0.0
    %1277 = vmatpush1.msra.mxu0 %v1271
    %1278 = vmatprep.subr.mxu0 0.0
    %1279 = vmatpush1.msra.mxu0 0.0
    %1280 = vmatprep.subr.mxu0 0.0
    %1281 = vmatpush1.msra.mxu0 0.0
    %1282 = vmatprep.subr.mxu0 0.0
    %1283 = vmatpush1.msra.mxu0 0.0
    %1284 = vmatprep.subr.mxu0 0.0
    %1285 = vmatpush1.msra.mxu0 0.0
    %1286 = vmatprep.subr.mxu0 0.0
    %1287 = vmatpush1.msra.mxu0 0.0
    %1288 = vmatprep.subr.mxu0 0.0
    %1289 = vmatpush1.msra.mxu0 0.0
    %1290 = vmatprep.subr.mxu0 0.0
    %1291 = vmatpush1.msra.mxu0 0.0
    %1292 = vmatprep.subr.mxu0 0.0
    %1293 = vmatpush1.msra.mxu0 0.0
    %1294 = vmatprep.subr.mxu0 0.0
    %1295 = vmatpush1.msra.mxu0 0.0
    %1296 = vmatprep.subr.mxu0 0.0
    %1297 = vmatpush1.msra.mxu0 0.0
    %1298 = vmatprep.subr.mxu0 0.0
    %1299 = vmatpush1.msra.mxu0 0.0
    %1300 = vmatprep.subr.mxu0 0.0
    %1301 = vmatpush1.msra.mxu0 0.0
    %1302 = vmatprep.subr.mxu0 0.0
    %1303 = vmatpush1.msra.mxu0 0.0
    %1304 = vmatprep.subr.mxu0 0.0
    %1305 = vmatpush1.msra.mxu0 0.0
    %1306 = vmatprep.subr.mxu0 0.0
    %1307 = vmatpush1.msra.mxu0 0.0
    %1308 = vmatprep.subr.mxu0 0.0
    %1309 = vmatpush1.msra.mxu0 0.0
    %1310 = vmatprep.subr.mxu0 0.0
    %1311 = vmatpush1.msra.mxu0 0.0
    %1312 = vmatprep.subr.mxu0 0.0
    %1313 = vmatpush1.msra.mxu0 0.0
    %1314 = vmatprep.subr.mxu0 0.0
    %1315 = vmatpush1.msra.mxu0 0.0
    %1316 = vmatprep.subr.mxu0 0.0
    %1317 = vmatpush1.msra.mxu0 0.0
    %1318 = vmatprep.subr.mxu0 0.0
    %1319 = vmatpush1.msra.mxu0 0.0
    %1320 = vmatprep.subr.mxu0 0.0
    %1321 = vmatpush1.msra.mxu0 0.0
    %1322 = vmatprep.subr.mxu0 0.0
    %1323 = vmatpush1.msra.mxu0 0.0
    %1324 = vmatprep.subr.mxu0 0.0
    %1325 = vmatpush1.msra.mxu0 0.0
    %1326 = vmatprep.subr.mxu0 0.0
    %1327 = vmatpush1.msra.mxu0 0.0
    %1328 = vmatprep.subr.mxu0 0.0
    %1329 = vmatpush1.msra.mxu0 0.0
    %1330 = vmatprep.subr.mxu0 0.0
    %1331 = vmatpush1.msra.mxu0 0.0
    %1332 = vmatprep.subr.mxu0 0.0
    %1333 = vmatpush1.msra.mxu0 0.0
    %1334 = vmatprep.subr.mxu0 0.0
    %1335 = vmatpush1.msra.mxu0 0.0
    %1336 = vmatprep.subr.mxu0 0.0
    %1337 = vmatpush1.msra.mxu0 0.0
    %1338 = vmatprep.subr.mxu0 0.0
    %1339 = vmatpush1.msra.mxu0 0.0
    %1340 = vmatprep.mubr.f32.mxu0 0.0
    %1341 = vmatmul.mubr.f32.gmra.mrb[0].mxu0 %v1274
    %v1342 = vpop.f32.mrb[0].mxu0
    %v1343 = vadd.f32 0.0, %v1342
    %v1344 = vpop.f32.mrb[0].mxu0
    %1345 = vdwg.mxu0
    %1347 = vrot.lane.b32.xlu0 %v1343, 24
    %v1348 = vpop.permute.xlu0 %1347
    %vm1350 = vcmask 228544
    %1351 = vst.msk [vmem:[#allocation2] sm:$0xff] %vm1350, %v1348
    %1352 = vrot.lane.b32.xlu0 %v151, 100
    %v1353 = vpop.permute.xlu0 %1352
    %1354 = vrot.lane.b32.xlu0 %v151, 68
    %v1355 = vpop.permute.xlu0 %1354
    %v1356 = vsel %vm162, %v1353, 0
    %v1358 = vsel %vm162, %v1355, 0
    %1360 = vmatprep.subr.mxu0 0.0
    %1361 = vmatpush1.xpose.msra.mxu0 %v1358
    %1362 = vmatprep.subr.mxu0 0.0
    %1363 = vmatpush1.xpose.msra.mxu0 0.0
    %1364 = vmatprep.subr.mxu0 0.0
    %1365 = vmatpush1.xpose.msra.mxu0 0.0
    %1366 = vmatprep.subr.mxu0 0.0
    %1367 = vmatpush1.xpose.msra.mxu0 0.0
    %1368 = vmatprep.subr.mxu0 0.0
    %1369 = vmatpush1.xpose.msra.mxu0 0.0
    %1370 = vmatprep.subr.mxu0 0.0
    %1371 = vmatpush1.xpose.msra.mxu0 0.0
    %1372 = vmatprep.subr.mxu0 0.0
    %1373 = vmatpush1.xpose.msra.mxu0 0.0
    %1374 = vmatprep.subr.mxu0 0.0
    %1375 = vmatpush1.xpose.msra.mxu0 0.0
    %1376 = vmatprep.subr.mxu0 0.0
    %1377 = vmatpush1.xpose.msra.mxu0 0.0
    %1378 = vmatprep.subr.mxu0 0.0
    %1379 = vmatpush1.xpose.msra.mxu0 0.0
    %1380 = vmatprep.subr.mxu0 0.0
    %1381 = vmatpush1.xpose.msra.mxu0 0.0
    %1382 = vmatprep.subr.mxu0 0.0
    %1383 = vmatpush1.xpose.msra.mxu0 0.0
    %1384 = vmatprep.subr.mxu0 0.0
    %1385 = vmatpush1.xpose.msra.mxu0 0.0
    %1386 = vmatprep.subr.mxu0 0.0
    %1387 = vmatpush1.xpose.msra.mxu0 0.0
    %1388 = vmatprep.subr.mxu0 0.0
    %1389 = vmatpush1.xpose.msra.mxu0 0.0
    %1390 = vmatprep.subr.mxu0 0.0
    %1391 = vmatpush1.xpose.msra.mxu0 0.0
    %1392 = vmatprep.subr.mxu0 0.0
    %1393 = vmatpush1.xpose.msra.mxu0 0.0
    %1394 = vmatprep.subr.mxu0 0.0
    %1395 = vmatpush1.xpose.msra.mxu0 0.0
    %1396 = vmatprep.subr.mxu0 0.0
    %1397 = vmatpush1.xpose.msra.mxu0 0.0
    %1398 = vmatprep.subr.mxu0 0.0
    %1399 = vmatpush1.xpose.msra.mxu0 0.0
    %1400 = vmatprep.subr.mxu0 0.0
    %1401 = vmatpush1.xpose.msra.mxu0 0.0
    %1402 = vmatprep.subr.mxu0 0.0
    %1403 = vmatpush1.xpose.msra.mxu0 0.0
    %1404 = vmatprep.subr.mxu0 0.0
    %1405 = vmatpush1.xpose.msra.mxu0 0.0
    %1406 = vmatprep.subr.mxu0 0.0
    %1407 = vmatpush1.xpose.msra.mxu0 0.0
    %1408 = vmatprep.subr.mxu0 0.0
    %1409 = vmatpush1.xpose.msra.mxu0 0.0
    %1410 = vmatprep.subr.mxu0 0.0
    %1411 = vmatpush1.xpose.msra.mxu0 0.0
    %1412 = vmatprep.subr.mxu0 0.0
    %1413 = vmatpush1.xpose.msra.mxu0 0.0
    %1414 = vmatprep.subr.mxu0 0.0
    %1415 = vmatpush1.xpose.msra.mxu0 0.0
    %1416 = vmatprep.subr.mxu0 0.0
    %1417 = vmatpush1.xpose.msra.mxu0 0.0
    %1418 = vmatprep.subr.mxu0 0.0
    %1419 = vmatpush1.xpose.msra.mxu0 0.0
    %1420 = vmatprep.subr.mxu0 0.0
    %1421 = vmatpush1.xpose.msra.mxu0 0.0
    %1422 = vmatprep.subr.mxu0 0.0
    %1423 = vmatpush1.xpose.msra.mxu0 0.0
    %1424 = vmatprep.mubr.f32.mxu0 0.0
    %1425 = vmatmul.mubr.f32.gmra.mrb[0].mxu0 %v1356
    %v1426 = vpop.f32.mrb[0].mxu0
    %v1427 = vadd.f32 0.0, %v1426
    %v1428 = vpop.f32.mrb[0].mxu0
    %1429 = vdwg.mxu0
    %v1430 = vsel %vm237, %v1427, -inf
    %1431 = vmax.xlane.f32.xlu0 %v1430
    %v1432 = vpop.xlane.xlu0 %1431
    %v1433 = vsub.f32 %v1427, %v1432
    %v1434 = vmul.f32 %v1433, 1.442695
    %v1435 = vpow.pop %v1434
    %v1436 = vsel %vm237, %v1435, 0.0
    %1437 = vadd.xlane.f32.xlu0 %v1436
    %v1438 = vpop.xlane.xlu0 %1437
    %v1439 = vrcp.pop %v1438
    %v1440 = vmul.f32 %v1435, %v1439
    %1441 = vrot.lane.b32.xlu0 %v151, 36
    %v1442 = vpop.permute.xlu0 %1441
    %v1445 = vsel %vm237, %v1440, 0
    %1447 = vmatprep.subr.mxu0 0.0
    %1448 = vmatpush1.msra.mxu0 %v1442
    %1449 = vmatprep.subr.mxu0 0.0
    %1450 = vmatpush1.msra.mxu0 0.0
    %1451 = vmatprep.subr.mxu0 0.0
    %1452 = vmatpush1.msra.mxu0 0.0
    %1453 = vmatprep.subr.mxu0 0.0
    %1454 = vmatpush1.msra.mxu0 0.0
    %1455 = vmatprep.subr.mxu0 0.0
    %1456 = vmatpush1.msra.mxu0 0.0
    %1457 = vmatprep.subr.mxu0 0.0
    %1458 = vmatpush1.msra.mxu0 0.0
    %1459 = vmatprep.subr.mxu0 0.0
    %1460 = vmatpush1.msra.mxu0 0.0
    %1461 = vmatprep.subr.mxu0 0.0
    %1462 = vmatpush1.msra.mxu0 0.0
    %1463 = vmatprep.subr.mxu0 0.0
    %1464 = vmatpush1.msra.mxu0 0.0
    %1465 = vmatprep.subr.mxu0 0.0
    %1466 = vmatpush1.msra.mxu0 0.0
    %1467 = vmatprep.subr.mxu0 0.0
    %1468 = vmatpush1.msra.mxu0 0.0
    %1469 = vmatprep.subr.mxu0 0.0
    %1470 = vmatpush1.msra.mxu0 0.0
    %1471 = vmatprep.subr.mxu0 0.0
    %1472 = vmatpush1.msra.mxu0 0.0
    %1473 = vmatprep.subr.mxu0 0.0
    %1474 = vmatpush1.msra.mxu0 0.0
    %1475 = vmatprep.subr.mxu0 0.0
    %1476 = vmatpush1.msra.mxu0 0.0
    %1477 = vmatprep.subr.mxu0 0.0
    %1478 = vmatpush1.msra.mxu0 0.0
    %1479 = vmatprep.subr.mxu0 0.0
    %1480 = vmatpush1.msra.mxu0 0.0
    %1481 = vmatprep.subr.mxu0 0.0
    %1482 = vmatpush1.msra.mxu0 0.0
    %1483 = vmatprep.subr.mxu0 0.0
    %1484 = vmatpush1.msra.mxu0 0.0
    %1485 = vmatprep.subr.mxu0 0.0
    %1486 = vmatpush1.msra.mxu0 0.0
    %1487 = vmatprep.subr.mxu0 0.0
    %1488 = vmatpush1.msra.mxu0 0.0
    %1489 = vmatprep.subr.mxu0 0.0
    %1490 = vmatpush1.msra.mxu0 0.0
    %1491 = vmatprep.subr.mxu0 0.0
    %1492 = vmatpush1.msra.mxu0 0.0
    %1493 = vmatprep.subr.mxu0 0.0
    %1494 = vmatpush1.msra.mxu0 0.0
    %1495 = vmatprep.subr.mxu0 0.0
    %1496 = vmatpush1.msra.mxu0 0.0
    %1497 = vmatprep.subr.mxu0 0.0
    %1498 = vmatpush1.msra.mxu0 0.0
    %1499 = vmatprep.subr.mxu0 0.0
    %1500 = vmatpush1.msra.mxu0 0.0
    %1501 = vmatprep.subr.mxu0 0.0
    %1502 = vmatpush1.msra.mxu0 0.0
    %1503 = vmatprep.subr.mxu0 0.0
    %1504 = vmatpush1.msra.mxu0 0.0
    %1505 = vmatprep.subr.mxu0 0.0
    %1506 = vmatpush1.msra.mxu0 0.0
    %1507 = vmatprep.subr.mxu0 0.0
    %1508 = vmatpush1.msra.mxu0 0.0
    %1509 = vmatprep.subr.mxu0 0.0
    %1510 = vmatpush1.msra.mxu0 0.0
    %1511 = vmatprep.mubr.f32.mxu0 0.0
    %1512 = vmatmul.mubr.f32.gmra.mrb[0].mxu0 %v1445
    %v1513 = vpop.f32.mrb[0].mxu0
    %v1514 = vadd.f32 0.0, %v1513
    %v1515 = vpop.f32.mrb[0].mxu0
    %1516 = vdwg.mxu0
    %1518 = vrot.lane.b32.xlu0 %v1514, 28
    %v1519 = vpop.permute.xlu0 %1518
    %vm1521 = vcmask 261344
    %1522 = vst.msk [vmem:[#allocation2] sm:$0xff] %vm1521, %v1519
    %1524 = vrot.lane.b32.xlu0 %v156, 96
    %v1525 = vpop.permute.xlu0 %1524
    %v1526 = vsel %vm162, %v156, 0
    %v1528 = vsel %vm162, %v1525, 0
    %1530 = vmatprep.subr.mxu0 0.0
    %1531 = vmatpush1.xpose.msra.mxu0 %v1528
    %1532 = vmatprep.subr.mxu0 0.0
    %1533 = vmatpush1.xpose.msra.mxu0 0.0
    %1534 = vmatprep.subr.mxu0 0.0
    %1535 = vmatpush1.xpose.msra.mxu0 0.0
    %1536 = vmatprep.subr.mxu0 0.0
    %1537 = vmatpush1.xpose.msra.mxu0 0.0
    %1538 = vmatprep.subr.mxu0 0.0
    %1539 = vmatpush1.xpose.msra.mxu0 0.0
    %1540 = vmatprep.subr.mxu0 0.0
    %1541 = vmatpush1.xpose.msra.mxu0 0.0
    %1542 = vmatprep.subr.mxu0 0.0
    %1543 = vmatpush1.xpose.msra.mxu0 0.0
    %1544 = vmatprep.subr.mxu0 0.0
    %1545 = vmatpush1.xpose.msra.mxu0 0.0
    %1546 = vmatprep.subr.mxu0 0.0
    %1547 = vmatpush1.xpose.msra.mxu0 0.0
    %1548 = vmatprep.subr.mxu0 0.0
    %1549 = vmatpush1.xpose.msra.mxu0 0.0
    %1550 = vmatprep.subr.mxu0 0.0
    %1551 = vmatpush1.xpose.msra.mxu0 0.0
    %1552 = vmatprep.subr.mxu0 0.0
    %1553 = vmatpush1.xpose.msra.mxu0 0.0
    %1554 = vmatprep.subr.mxu0 0.0
    %1555 = vmatpush1.xpose.msra.mxu0 0.0
    %1556 = vmatprep.subr.mxu0 0.0
    %1557 = vmatpush1.xpose.msra.mxu0 0.0
    %1558 = vmatprep.subr.mxu0 0.0
    %1559 = vmatpush1.xpose.msra.mxu0 0.0
    %1560 = vmatprep.subr.mxu0 0.0
    %1561 = vmatpush1.xpose.msra.mxu0 0.0
    %1562 = vmatprep.subr.mxu0 0.0
    %1563 = vmatpush1.xpose.msra.mxu0 0.0
    %1564 = vmatprep.subr.mxu0 0.0
    %1565 = vmatpush1.xpose.msra.mxu0 0.0
    %1566 = vmatprep.subr.mxu0 0.0
    %1567 = vmatpush1.xpose.msra.mxu0 0.0
    %1568 = vmatprep.subr.mxu0 0.0
    %1569 = vmatpush1.xpose.msra.mxu0 0.0
    %1570 = vmatprep.subr.mxu0 0.0
    %1571 = vmatpush1.xpose.msra.mxu0 0.0
    %1572 = vmatprep.subr.mxu0 0.0
    %1573 = vmatpush1.xpose.msra.mxu0 0.0
    %1574 = vmatprep.subr.mxu0 0.0
    %1575 = vmatpush1.xpose.msra.mxu0 0.0
    %1576 = vmatprep.subr.mxu0 0.0
    %1577 = vmatpush1.xpose.msra.mxu0 0.0
    %1578 = vmatprep.subr.mxu0 0.0
    %1579 = vmatpush1.xpose.msra.mxu0 0.0
    %1580 = vmatprep.subr.mxu0 0.0
    %1581 = vmatpush1.xpose.msra.mxu0 0.0
    %1582 = vmatprep.subr.mxu0 0.0
    %1583 = vmatpush1.xpose.msra.mxu0 0.0
    %1584 = vmatprep.subr.mxu0 0.0
    %1585 = vmatpush1.xpose.msra.mxu0 0.0
    %1586 = vmatprep.subr.mxu0 0.0
    %1587 = vmatpush1.xpose.msra.mxu0 0.0
    %1588 = vmatprep.subr.mxu0 0.0
    %1589 = vmatpush1.xpose.msra.mxu0 0.0
    %1590 = vmatprep.subr.mxu0 0.0
    %1591 = vmatpush1.xpose.msra.mxu0 0.0
    %1592 = vmatprep.subr.mxu0 0.0
    %1593 = vmatpush1.xpose.msra.mxu0 0.0
    %1594 = vmatprep.mubr.f32.mxu0 0.0
    %1595 = vmatmul.mubr.f32.gmra.mrb[0].mxu0 %v1526
    %v1596 = vpop.f32.mrb[0].mxu0
    %v1597 = vadd.f32 0.0, %v1596
    %v1598 = vpop.f32.mrb[0].mxu0
    %1599 = vdwg.mxu0
    %v1600 = vsel %vm237, %v1597, -inf
    %1601 = vmax.xlane.f32.xlu0 %v1600
    %v1602 = vpop.xlane.xlu0 %1601
    %v1603 = vsub.f32 %v1597, %v1602
    %v1604 = vmul.f32 %v1603, 1.442695
    %v1605 = vpow.pop %v1604
    %v1606 = vsel %vm237, %v1605, 0.0
    %1607 = vadd.xlane.f32.xlu0 %v1606
    %v1608 = vpop.xlane.xlu0 %1607
    %v1609 = vrcp.pop %v1608
    %v1610 = vmul.f32 %v1605, %v1609
    %1611 = vrot.lane.b32.xlu0 %v156, 64
    %v1612 = vpop.permute.xlu0 %1611
    %v1615 = vsel %vm237, %v1610, 0
    %1617 = vmatprep.subr.mxu0 0.0
    %1618 = vmatpush1.msra.mxu0 %v1612
    %1619 = vmatprep.subr.mxu0 0.0
    %1620 = vmatpush1.msra.mxu0 0.0
    %1621 = vmatprep.subr.mxu0 0.0
    %1622 = vmatpush1.msra.mxu0 0.0
    %1623 = vmatprep.subr.mxu0 0.0
    %1624 = vmatpush1.msra.mxu0 0.0
    %1625 = vmatprep.subr.mxu0 0.0
    %1626 = vmatpush1.msra.mxu0 0.0
    %1627 = vmatprep.subr.mxu0 0.0
    %1628 = vmatpush1.msra.mxu0 0.0
    %1629 = vmatprep.subr.mxu0 0.0
    %1630 = vmatpush1.msra.mxu0 0.0
    %1631 = vmatprep.subr.mxu0 0.0
    %1632 = vmatpush1.msra.mxu0 0.0
    %1633 = vmatprep.subr.mxu0 0.0
    %1634 = vmatpush1.msra.mxu0 0.0
    %1635 = vmatprep.subr.mxu0 0.0
    %1636 = vmatpush1.msra.mxu0 0.0
    %1637 = vmatprep.subr.mxu0 0.0
    %1638 = vmatpush1.msra.mxu0 0.0
    %1639 = vmatprep.subr.mxu0 0.0
    %1640 = vmatpush1.msra.mxu0 0.0
    %1641 = vmatprep.subr.mxu0 0.0
    %1642 = vmatpush1.msra.mxu0 0.0
    %1643 = vmatprep.subr.mxu0 0.0
    %1644 = vmatpush1.msra.mxu0 0.0
    %1645 = vmatprep.subr.mxu0 0.0
    %1646 = vmatpush1.msra.mxu0 0.0
    %1647 = vmatprep.subr.mxu0 0.0
    %1648 = vmatpush1.msra.mxu0 0.0
    %1649 = vmatprep.subr.mxu0 0.0
    %1650 = vmatpush1.msra.mxu0 0.0
    %1651 = vmatprep.subr.mxu0 0.0
    %1652 = vmatpush1.msra.mxu0 0.0
    %1653 = vmatprep.subr.mxu0 0.0
    %1654 = vmatpush1.msra.mxu0 0.0
    %1655 = vmatprep.subr.mxu0 0.0
    %1656 = vmatpush1.msra.mxu0 0.0
    %1657 = vmatprep.subr.mxu0 0.0
    %1658 = vmatpush1.msra.mxu0 0.0
    %1659 = vmatprep.subr.mxu0 0.0
    %1660 = vmatpush1.msra.mxu0 0.0
    %1661 = vmatprep.subr.mxu0 0.0
    %1662 = vmatpush1.msra.mxu0 0.0
    %1663 = vmatprep.subr.mxu0 0.0
    %1664 = vmatpush1.msra.mxu0 0.0
    %1665 = vmatprep.subr.mxu0 0.0
    %1666 = vmatpush1.msra.mxu0 0.0
    %1667 = vmatprep.subr.mxu0 0.0
    %1668 = vmatpush1.msra.mxu0 0.0
    %1669 = vmatprep.subr.mxu0 0.0
    %1670 = vmatpush1.msra.mxu0 0.0
    %1671 = vmatprep.subr.mxu0 0.0
    %1672 = vmatpush1.msra.mxu0 0.0
    %1673 = vmatprep.subr.mxu0 0.0
    %1674 = vmatpush1.msra.mxu0 0.0
    %1675 = vmatprep.subr.mxu0 0.0
    %1676 = vmatpush1.msra.mxu0 0.0
    %1677 = vmatprep.subr.mxu0 0.0
    %1678 = vmatpush1.msra.mxu0 0.0
    %1679 = vmatprep.subr.mxu0 0.0
    %1680 = vmatpush1.msra.mxu0 0.0
    %1681 = vmatprep.mubr.f32.mxu0 0.0
    %1682 = vmatmul.mubr.f32.gmra.mrb[0].mxu0 %v1615
    %v1683 = vpop.f32.mrb[0].mxu0
    %v1684 = vadd.f32 0.0, %v1683
    %v1685 = vpop.f32.mrb[0].mxu0
    %1686 = vdwg.mxu0
    %1687 = vst.msk [vmem:[#allocation2 + $0x8] sm:$0xff] %vm162, %v1684
    %1688 = vrot.lane.b32.xlu0 %v156, 124
    %v1689 = vpop.permute.xlu0 %1688
    %1690 = vrot.lane.b32.xlu0 %v156, 92
    %v1691 = vpop.permute.xlu0 %1690
    %v1692 = vsel %vm162, %v1689, 0
    %v1694 = vsel %vm162, %v1691, 0
    %1696 = vmatprep.subr.mxu0 0.0
    %1697 = vmatpush1.xpose.msra.mxu0 %v1694
    %1698 = vmatprep.subr.mxu0 0.0
    %1699 = vmatpush1.xpose.msra.mxu0 0.0
    %1700 = vmatprep.subr.mxu0 0.0
    %1701 = vmatpush1.xpose.msra.mxu0 0.0
    %1702 = vmatprep.subr.mxu0 0.0
    %1703 = vmatpush1.xpose.msra.mxu0 0.0
    %1704 = vmatprep.subr.mxu0 0.0
    %1705 = vmatpush1.xpose.msra.mxu0 0.0
    %1706 = vmatprep.subr.mxu0 0.0
    %1707 = vmatpush1.xpose.msra.mxu0 0.0
    %1708 = vmatprep.subr.mxu0 0.0
    %1709 = vmatpush1.xpose.msra.mxu0 0.0
    %1710 = vmatprep.subr.mxu0 0.0
    %1711 = vmatpush1.xpose.msra.mxu0 0.0
    %1712 = vmatprep.subr.mxu0 0.0
    %1713 = vmatpush1.xpose.msra.mxu0 0.0
    %1714 = vmatprep.subr.mxu0 0.0
    %1715 = vmatpush1.xpose.msra.mxu0 0.0
    %1716 = vmatprep.subr.mxu0 0.0
    %1717 = vmatpush1.xpose.msra.mxu0 0.0
    %1718 = vmatprep.subr.mxu0 0.0
    %1719 = vmatpush1.xpose.msra.mxu0 0.0
    %1720 = vmatprep.subr.mxu0 0.0
    %1721 = vmatpush1.xpose.msra.mxu0 0.0
    %1722 = vmatprep.subr.mxu0 0.0
    %1723 = vmatpush1.xpose.msra.mxu0 0.0
    %1724 = vmatprep.subr.mxu0 0.0
    %1725 = vmatpush1.xpose.msra.mxu0 0.0
    %1726 = vmatprep.subr.mxu0 0.0
    %1727 = vmatpush1.xpose.msra.mxu0 0.0
    %1728 = vmatprep.subr.mxu0 0.0
    %1729 = vmatpush1.xpose.msra.mxu0 0.0
    %1730 = vmatprep.subr.mxu0 0.0
    %1731 = vmatpush1.xpose.msra.mxu0 0.0
    %1732 = vmatprep.subr.mxu0 0.0
    %1733 = vmatpush1.xpose.msra.mxu0 0.0
    %1734 = vmatprep.subr.mxu0 0.0
    %1735 = vmatpush1.xpose.msra.mxu0 0.0
    %1736 = vmatprep.subr.mxu0 0.0
    %1737 = vmatpush1.xpose.msra.mxu0 0.0
    %1738 = vmatprep.subr.mxu0 0.0
    %1739 = vmatpush1.xpose.msra.mxu0 0.0
    %1740 = vmatprep.subr.mxu0 0.0
    %1741 = vmatpush1.xpose.msra.mxu0 0.0
    %1742 = vmatprep.subr.mxu0 0.0
    %1743 = vmatpush1.xpose.msra.mxu0 0.0
    %1744 = vmatprep.subr.mxu0 0.0
    %1745 = vmatpush1.xpose.msra.mxu0 0.0
    %1746 = vmatprep.subr.mxu0 0.0
    %1747 = vmatpush1.xpose.msra.mxu0 0.0
    %1748 = vmatprep.subr.mxu0 0.0
    %1749 = vmatpush1.xpose.msra.mxu0 0.0
    %1750 = vmatprep.subr.mxu0 0.0
    %1751 = vmatpush1.xpose.msra.mxu0 0.0
    %1752 = vmatprep.subr.mxu0 0.0
    %1753 = vmatpush1.xpose.msra.mxu0 0.0
    %1754 = vmatprep.subr.mxu0 0.0
    %1755 = vmatpush1.xpose.msra.mxu0 0.0
    %1756 = vmatprep.subr.mxu0 0.0
    %1757 = vmatpush1.xpose.msra.mxu0 0.0
    %1758 = vmatprep.subr.mxu0 0.0
    %1759 = vmatpush1.xpose.msra.mxu0 0.0
    %1760 = vmatprep.mubr.f32.mxu0 0.0
    %1761 = vmatmul.mubr.f32.gmra.mrb[0].mxu0 %v1692
    %v1762 = vpop.f32.mrb[0].mxu0
    %v1763 = vadd.f32 0.0, %v1762
    %v1764 = vpop.f32.mrb[0].mxu0
    %1765 = vdwg.mxu0
    %v1766 = vsel %vm237, %v1763, -inf
    %1767 = vmax.xlane.f32.xlu0 %v1766
    %v1768 = vpop.xlane.xlu0 %1767
    %v1769 = vsub.f32 %v1763, %v1768
    %v1770 = vmul.f32 %v1769, 1.442695
    %v1771 = vpow.pop %v1770
    %v1772 = vsel %vm237, %v1771, 0.0
    %1773 = vadd.xlane.f32.xlu0 %v1772
    %v1774 = vpop.xlane.xlu0 %1773
    %v1775 = vrcp.pop %v1774
    %v1776 = vmul.f32 %v1771, %v1775
    %1777 = vrot.lane.b32.xlu0 %v156, 60
    %v1778 = vpop.permute.xlu0 %1777
    %v1781 = vsel %vm237, %v1776, 0
    %1783 = vmatprep.subr.mxu0 0.0
    %1784 = vmatpush1.msra.mxu0 %v1778
    %1785 = vmatprep.subr.mxu0 0.0
    %1786 = vmatpush1.msra.mxu0 0.0
    %1787 = vmatprep.subr.mxu0 0.0
    %1788 = vmatpush1.msra.mxu0 0.0
    %1789 = vmatprep.subr.mxu0 0.0
    %1790 = vmatpush1.msra.mxu0 0.0
    %1791 = vmatprep.subr.mxu0 0.0
    %1792 = vmatpush1.msra.mxu0 0.0
    %1793 = vmatprep.subr.mxu0 0.0
    %1794 = vmatpush1.msra.mxu0 0.0
    %1795 = vmatprep.subr.mxu0 0.0
    %1796 = vmatpush1.msra.mxu0 0.0
    %1797 = vmatprep.subr.mxu0 0.0
    %1798 = vmatpush1.msra.mxu0 0.0
    %1799 = vmatprep.subr.mxu0 0.0
    %1800 = vmatpush1.msra.mxu0 0.0
    %1801 = vmatprep.subr.mxu0 0.0
    %1802 = vmatpush1.msra.mxu0 0.0
    %1803 = vmatprep.subr.mxu0 0.0
    %1804 = vmatpush1.msra.mxu0 0.0
    %1805 = vmatprep.subr.mxu0 0.0
    %1806 = vmatpush1.msra.mxu0 0.0
    %1807 = vmatprep.subr.mxu0 0.0
    %1808 = vmatpush1.msra.mxu0 0.0
    %1809 = vmatprep.subr.mxu0 0.0
    %1810 = vmatpush1.msra.mxu0 0.0
    %1811 = vmatprep.subr.mxu0 0.0
    %1812 = vmatpush1.msra.mxu0 0.0
    %1813 = vmatprep.subr.mxu0 0.0
    %1814 = vmatpush1.msra.mxu0 0.0
    %1815 = vmatprep.subr.mxu0 0.0
    %1816 = vmatpush1.msra.mxu0 0.0
    %1817 = vmatprep.subr.mxu0 0.0
    %1818 = vmatpush1.msra.mxu0 0.0
    %1819 = vmatprep.subr.mxu0 0.0
    %1820 = vmatpush1.msra.mxu0 0.0
    %1821 = vmatprep.subr.mxu0 0.0
    %1822 = vmatpush1.msra.mxu0 0.0
    %1823 = vmatprep.subr.mxu0 0.0
    %1824 = vmatpush1.msra.mxu0 0.0
    %1825 = vmatprep.subr.mxu0 0.0
    %1826 = vmatpush1.msra.mxu0 0.0
    %1827 = vmatprep.subr.mxu0 0.0
    %1828 = vmatpush1.msra.mxu0 0.0
    %1829 = vmatprep.subr.mxu0 0.0
    %1830 = vmatpush1.msra.mxu0 0.0
    %1831 = vmatprep.subr.mxu0 0.0
    %1832 = vmatpush1.msra.mxu0 0.0
    %1833 = vmatprep.subr.mxu0 0.0
    %1834 = vmatpush1.msra.mxu0 0.0
    %1835 = vmatprep.subr.mxu0 0.0
    %1836 = vmatpush1.msra.mxu0 0.0
    %1837 = vmatprep.subr.mxu0 0.0
    %1838 = vmatpush1.msra.mxu0 0.0
    %1839 = vmatprep.subr.mxu0 0.0
    %1840 = vmatpush1.msra.mxu0 0.0
    %1841 = vmatprep.subr.mxu0 0.0
    %1842 = vmatpush1.msra.mxu0 0.0
    %1843 = vmatprep.subr.mxu0 0.0
    %1844 = vmatpush1.msra.mxu0 0.0
    %1845 = vmatprep.subr.mxu0 0.0
    %1846 = vmatpush1.msra.mxu0 0.0
    %1847 = vmatprep.mubr.f32.mxu0 0.0
    %1848 = vmatmul.mubr.f32.gmra.mrb[0].mxu0 %v1781
    %v1849 = vpop.f32.mrb[0].mxu0
    %v1850 = vadd.f32 0.0, %v1849
    %v1851 = vpop.f32.mrb[0].mxu0
    %1852 = vdwg.mxu0
    %1854 = vrot.lane.b32.xlu0 %v1850, 4
    %v1855 = vpop.permute.xlu0 %1854
    %1857 = vst.msk [vmem:[#allocation2 + $0x8] sm:$0xff] %vm495, %v1855
    %1858 = vrot.lane.b32.xlu0 %v156, 120
    %v1859 = vpop.permute.xlu0 %1858
    %1860 = vrot.lane.b32.xlu0 %v156, 88
    %v1861 = vpop.permute.xlu0 %1860
    %v1862 = vsel %vm162, %v1859, 0
    %v1864 = vsel %vm162, %v1861, 0
    %1866 = vmatprep.subr.mxu0 0.0
    %1867 = vmatpush1.xpose.msra.mxu0 %v1864
    %1868 = vmatprep.subr.mxu0 0.0
    %1869 = vmatpush1.xpose.msra.mxu0 0.0
    %1870 = vmatprep.subr.mxu0 0.0
    %1871 = vmatpush1.xpose.msra.mxu0 0.0
    %1872 = vmatprep.subr.mxu0 0.0
    %1873 = vmatpush1.xpose.msra.mxu0 0.0
    %1874 = vmatprep.subr.mxu0 0.0
    %1875 = vmatpush1.xpose.msra.mxu0 0.0
    %1876 = vmatprep.subr.mxu0 0.0
    %1877 = vmatpush1.xpose.msra.mxu0 0.0
    %1878 = vmatprep.subr.mxu0 0.0
    %1879 = vmatpush1.xpose.msra.mxu0 0.0
    %1880 = vmatprep.subr.mxu0 0.0
    %1881 = vmatpush1.xpose.msra.mxu0 0.0
    %1882 = vmatprep.subr.mxu0 0.0
    %1883 = vmatpush1.xpose.msra.mxu0 0.0
    %1884 = vmatprep.subr.mxu0 0.0
    %1885 = vmatpush1.xpose.msra.mxu0 0.0
    %1886 = vmatprep.subr.mxu0 0.0
    %1887 = vmatpush1.xpose.msra.mxu0 0.0
    %1888 = vmatprep.subr.mxu0 0.0
    %1889 = vmatpush1.xpose.msra.mxu0 0.0
    %1890 = vmatprep.subr.mxu0 0.0
    %1891 = vmatpush1.xpose.msra.mxu0 0.0
    %1892 = vmatprep.subr.mxu0 0.0
    %1893 = vmatpush1.xpose.msra.mxu0 0.0
    %1894 = vmatprep.subr.mxu0 0.0
    %1895 = vmatpush1.xpose.msra.mxu0 0.0
    %1896 = vmatprep.subr.mxu0 0.0
    %1897 = vmatpush1.xpose.msra.mxu0 0.0
    %1898 = vmatprep.subr.mxu0 0.0
    %1899 = vmatpush1.xpose.msra.mxu0 0.0
    %1900 = vmatprep.subr.mxu0 0.0
    %1901 = vmatpush1.xpose.msra.mxu0 0.0
    %1902 = vmatprep.subr.mxu0 0.0
    %1903 = vmatpush1.xpose.msra.mxu0 0.0
    %1904 = vmatprep.subr.mxu0 0.0
    %1905 = vmatpush1.xpose.msra.mxu0 0.0
    %1906 = vmatprep.subr.mxu0 0.0
    %1907 = vmatpush1.xpose.msra.mxu0 0.0
    %1908 = vmatprep.subr.mxu0 0.0
    %1909 = vmatpush1.xpose.msra.mxu0 0.0
    %1910 = vmatprep.subr.mxu0 0.0
    %1911 = vmatpush1.xpose.msra.mxu0 0.0
    %1912 = vmatprep.subr.mxu0 0.0
    %1913 = vmatpush1.xpose.msra.mxu0 0.0
    %1914 = vmatprep.subr.mxu0 0.0
    %1915 = vmatpush1.xpose.msra.mxu0 0.0
    %1916 = vmatprep.subr.mxu0 0.0
    %1917 = vmatpush1.xpose.msra.mxu0 0.0
    %1918 = vmatprep.subr.mxu0 0.0
    %1919 = vmatpush1.xpose.msra.mxu0 0.0
    %1920 = vmatprep.subr.mxu0 0.0
    %1921 = vmatpush1.xpose.msra.mxu0 0.0
    %1922 = vmatprep.subr.mxu0 0.0
    %1923 = vmatpush1.xpose.msra.mxu0 0.0
    %1924 = vmatprep.subr.mxu0 0.0
    %1925 = vmatpush1.xpose.msra.mxu0 0.0
    %1926 = vmatprep.subr.mxu0 0.0
    %1927 = vmatpush1.xpose.msra.mxu0 0.0
    %1928 = vmatprep.subr.mxu0 0.0
    %1929 = vmatpush1.xpose.msra.mxu0 0.0
    %1930 = vmatprep.mubr.f32.mxu0 0.0
    %1931 = vmatmul.mubr.f32.gmra.mrb[0].mxu0 %v1862
    %v1932 = vpop.f32.mrb[0].mxu0
    %v1933 = vadd.f32 0.0, %v1932
    %v1934 = vpop.f32.mrb[0].mxu0
    %1935 = vdwg.mxu0
    %v1936 = vsel %vm237, %v1933, -inf
    %1937 = vmax.xlane.f32.xlu0 %v1936
    %v1938 = vpop.xlane.xlu0 %1937
    %v1939 = vsub.f32 %v1933, %v1938
    %v1940 = vmul.f32 %v1939, 1.442695
    %v1941 = vpow.pop %v1940
    %v1942 = vsel %vm237, %v1941, 0.0
    %1943 = vadd.xlane.f32.xlu0 %v1942
    %v1944 = vpop.xlane.xlu0 %1943
    %v1945 = vrcp.pop %v1944
    %v1946 = vmul.f32 %v1941, %v1945
    %1947 = vrot.lane.b32.xlu0 %v156, 56
    %v1948 = vpop.permute.xlu0 %1947
    %v1951 = vsel %vm237, %v1946, 0
    %1953 = vmatprep.subr.mxu0 0.0
    %1954 = vmatpush1.msra.mxu0 %v1948
    %1955 = vmatprep.subr.mxu0 0.0
    %1956 = vmatpush1.msra.mxu0 0.0
    %1957 = vmatprep.subr.mxu0 0.0
    %1958 = vmatpush1.msra.mxu0 0.0
    %1959 = vmatprep.subr.mxu0 0.0
    %1960 = vmatpush1.msra.mxu0 0.0
    %1961 = vmatprep.subr.mxu0 0.0
    %1962 = vmatpush1.msra.mxu0 0.0
    %1963 = vmatprep.subr.mxu0 0.0
    %1964 = vmatpush1.msra.mxu0 0.0
    %1965 = vmatprep.subr.mxu0 0.0
    %1966 = vmatpush1.msra.mxu0 0.0
    %1967 = vmatprep.subr.mxu0 0.0
    %1968 = vmatpush1.msra.mxu0 0.0
    %1969 = vmatprep.subr.mxu0 0.0
    %1970 = vmatpush1.msra.mxu0 0.0
    %1971 = vmatprep.subr.mxu0 0.0
    %1972 = vmatpush1.msra.mxu0 0.0
    %1973 = vmatprep.subr.mxu0 0.0
    %1974 = vmatpush1.msra.mxu0 0.0
    %1975 = vmatprep.subr.mxu0 0.0
    %1976 = vmatpush1.msra.mxu0 0.0
    %1977 = vmatprep.subr.mxu0 0.0
    %1978 = vmatpush1.msra.mxu0 0.0
    %1979 = vmatprep.subr.mxu0 0.0
    %1980 = vmatpush1.msra.mxu0 0.0
    %1981 = vmatprep.subr.mxu0 0.0
    %1982 = vmatpush1.msra.mxu0 0.0
    %1983 = vmatprep.subr.mxu0 0.0
    %1984 = vmatpush1.msra.mxu0 0.0
    %1985 = vmatprep.subr.mxu0 0.0
    %1986 = vmatpush1.msra.mxu0 0.0
    %1987 = vmatprep.subr.mxu0 0.0
    %1988 = vmatpush1.msra.mxu0 0.0
    %1989 = vmatprep.subr.mxu0 0.0
    %1990 = vmatpush1.msra.mxu0 0.0
    %1991 = vmatprep.subr.mxu0 0.0
    %1992 = vmatpush1.msra.mxu0 0.0
    %1993 = vmatprep.subr.mxu0 0.0
    %1994 = vmatpush1.msra.mxu0 0.0
    %1995 = vmatprep.subr.mxu0 0.0
    %1996 = vmatpush1.msra.mxu0 0.0
    %1997 = vmatprep.subr.mxu0 0.0
    %1998 = vmatpush1.msra.mxu0 0.0
    %1999 = vmatprep.subr.mxu0 0.0
    %2000 = vmatpush1.msra.mxu0 0.0
    %2001 = vmatprep.subr.mxu0 0.0
    %2002 = vmatpush1.msra.mxu0 0.0
    %2003 = vmatprep.subr.mxu0 0.0
    %2004 = vmatpush1.msra.mxu0 0.0
    %2005 = vmatprep.subr.mxu0 0.0
    %2006 = vmatpush1.msra.mxu0 0.0
    %2007 = vmatprep.subr.mxu0 0.0
    %2008 = vmatpush1.msra.mxu0 0.0
    %2009 = vmatprep.subr.mxu0 0.0
    %2010 = vmatpush1.msra.mxu0 0.0
    %2011 = vmatprep.subr.mxu0 0.0
    %2012 = vmatpush1.msra.mxu0 0.0
    %2013 = vmatprep.subr.mxu0 0.0
    %2014 = vmatpush1.msra.mxu0 0.0
    %2015 = vmatprep.subr.mxu0 0.0
    %2016 = vmatpush1.msra.mxu0 0.0
    %2017 = vmatprep.mubr.f32.mxu0 0.0
    %2018 = vmatmul.mubr.f32.gmra.mrb[0].mxu0 %v1951
    %v2019 = vpop.f32.mrb[0].mxu0
    %v2020 = vadd.f32 0.0, %v2019
    %v2021 = vpop.f32.mrb[0].mxu0
    %2022 = vdwg.mxu0
    %2024 = vrot.lane.b32.xlu0 %v2020, 8
    %v2025 = vpop.permute.xlu0 %2024
    %2027 = vst.msk [vmem:[#allocation2 + $0x8] sm:$0xff] %vm666, %v2025
    %2028 = vrot.lane.b32.xlu0 %v156, 116
    %v2029 = vpop.permute.xlu0 %2028
    %2030 = vrot.lane.b32.xlu0 %v156, 84
    %v2031 = vpop.permute.xlu0 %2030
    %v2032 = vsel %vm162, %v2029, 0
    %v2034 = vsel %vm162, %v2031, 0
    %2036 = vmatprep.subr.mxu0 0.0
    %2037 = vmatpush1.xpose.msra.mxu0 %v2034
    %2038 = vmatprep.subr.mxu0 0.0
    %2039 = vmatpush1.xpose.msra.mxu0 0.0
    %2040 = vmatprep.subr.mxu0 0.0
    %2041 = vmatpush1.xpose.msra.mxu0 0.0
    %2042 = vmatprep.subr.mxu0 0.0
    %2043 = vmatpush1.xpose.msra.mxu0 0.0
    %2044 = vmatprep.subr.mxu0 0.0
    %2045 = vmatpush1.xpose.msra.mxu0 0.0
    %2046 = vmatprep.subr.mxu0 0.0
    %2047 = vmatpush1.xpose.msra.mxu0 0.0
    %2048 = vmatprep.subr.mxu0 0.0
    %2049 = vmatpush1.xpose.msra.mxu0 0.0
    %2050 = vmatprep.subr.mxu0 0.0
    %2051 = vmatpush1.xpose.msra.mxu0 0.0
    %2052 = vmatprep.subr.mxu0 0.0
    %2053 = vmatpush1.xpose.msra.mxu0 0.0
    %2054 = vmatprep.subr.mxu0 0.0
    %2055 = vmatpush1.xpose.msra.mxu0 0.0
    %2056 = vmatprep.subr.mxu0 0.0
    %2057 = vmatpush1.xpose.msra.mxu0 0.0
    %2058 = vmatprep.subr.mxu0 0.0
    %2059 = vmatpush1.xpose.msra.mxu0 0.0
    %2060 = vmatprep.subr.mxu0 0.0
    %2061 = vmatpush1.xpose.msra.mxu0 0.0
    %2062 = vmatprep.subr.mxu0 0.0
    %2063 = vmatpush1.xpose.msra.mxu0 0.0
    %2064 = vmatprep.subr.mxu0 0.0
    %2065 = vmatpush1.xpose.msra.mxu0 0.0
    %2066 = vmatprep.subr.mxu0 0.0
    %2067 = vmatpush1.xpose.msra.mxu0 0.0
    %2068 = vmatprep.subr.mxu0 0.0
    %2069 = vmatpush1.xpose.msra.mxu0 0.0
    %2070 = vmatprep.subr.mxu0 0.0
    %2071 = vmatpush1.xpose.msra.mxu0 0.0
    %2072 = vmatprep.subr.mxu0 0.0
    %2073 = vmatpush1.xpose.msra.mxu0 0.0
    %2074 = vmatprep.subr.mxu0 0.0
    %2075 = vmatpush1.xpose.msra.mxu0 0.0
    %2076 = vmatprep.subr.mxu0 0.0
    %2077 = vmatpush1.xpose.msra.mxu0 0.0
    %2078 = vmatprep.subr.mxu0 0.0
    %2079 = vmatpush1.xpose.msra.mxu0 0.0
    %2080 = vmatprep.subr.mxu0 0.0
    %2081 = vmatpush1.xpose.msra.mxu0 0.0
    %2082 = vmatprep.subr.mxu0 0.0
    %2083 = vmatpush1.xpose.msra.mxu0 0.0
    %2084 = vmatprep.subr.mxu0 0.0
    %2085 = vmatpush1.xpose.msra.mxu0 0.0
    %2086 = vmatprep.subr.mxu0 0.0
    %2087 = vmatpush1.xpose.msra.mxu0 0.0
    %2088 = vmatprep.subr.mxu0 0.0
    %2089 = vmatpush1.xpose.msra.mxu0 0.0
    %2090 = vmatprep.subr.mxu0 0.0
    %2091 = vmatpush1.xpose.msra.mxu0 0.0
    %2092 = vmatprep.subr.mxu0 0.0
    %2093 = vmatpush1.xpose.msra.mxu0 0.0
    %2094 = vmatprep.subr.mxu0 0.0
    %2095 = vmatpush1.xpose.msra.mxu0 0.0
    %2096 = vmatprep.subr.mxu0 0.0
    %2097 = vmatpush1.xpose.msra.mxu0 0.0
    %2098 = vmatprep.subr.mxu0 0.0
    %2099 = vmatpush1.xpose.msra.mxu0 0.0
    %2100 = vmatprep.mubr.f32.mxu0 0.0
    %2101 = vmatmul.mubr.f32.gmra.mrb[0].mxu0 %v2032
    %v2102 = vpop.f32.mrb[0].mxu0
    %v2103 = vadd.f32 0.0, %v2102
    %v2104 = vpop.f32.mrb[0].mxu0
    %2105 = vdwg.mxu0
    %v2106 = vsel %vm237, %v2103, -inf
    %2107 = vmax.xlane.f32.xlu0 %v2106
    %v2108 = vpop.xlane.xlu0 %2107
    %v2109 = vsub.f32 %v2103, %v2108
    %v2110 = vmul.f32 %v2109, 1.442695
    %v2111 = vpow.pop %v2110
    %v2112 = vsel %vm237, %v2111, 0.0
    %2113 = vadd.xlane.f32.xlu0 %v2112
    %v2114 = vpop.xlane.xlu0 %2113
    %v2115 = vrcp.pop %v2114
    %v2116 = vmul.f32 %v2111, %v2115
    %2117 = vrot.lane.b32.xlu0 %v156, 52
    %v2118 = vpop.permute.xlu0 %2117
    %v2121 = vsel %vm237, %v2116, 0
    %2123 = vmatprep.subr.mxu0 0.0
    %2124 = vmatpush1.msra.mxu0 %v2118
    %2125 = vmatprep.subr.mxu0 0.0
    %2126 = vmatpush1.msra.mxu0 0.0
    %2127 = vmatprep.subr.mxu0 0.0
    %2128 = vmatpush1.msra.mxu0 0.0
    %2129 = vmatprep.subr.mxu0 0.0
    %2130 = vmatpush1.msra.mxu0 0.0
    %2131 = vmatprep.subr.mxu0 0.0
    %2132 = vmatpush1.msra.mxu0 0.0
    %2133 = vmatprep.subr.mxu0 0.0
    %2134 = vmatpush1.msra.mxu0 0.0
    %2135 = vmatprep.subr.mxu0 0.0
    %2136 = vmatpush1.msra.mxu0 0.0
    %2137 = vmatprep.subr.mxu0 0.0
    %2138 = vmatpush1.msra.mxu0 0.0
    %2139 = vmatprep.subr.mxu0 0.0
    %2140 = vmatpush1.msra.mxu0 0.0
    %2141 = vmatprep.subr.mxu0 0.0
    %2142 = vmatpush1.msra.mxu0 0.0
    %2143 = vmatprep.subr.mxu0 0.0
    %2144 = vmatpush1.msra.mxu0 0.0
    %2145 = vmatprep.subr.mxu0 0.0
    %2146 = vmatpush1.msra.mxu0 0.0
    %2147 = vmatprep.subr.mxu0 0.0
    %2148 = vmatpush1.msra.mxu0 0.0
    %2149 = vmatprep.subr.mxu0 0.0
    %2150 = vmatpush1.msra.mxu0 0.0
    %2151 = vmatprep.subr.mxu0 0.0
    %2152 = vmatpush1.msra.mxu0 0.0
    %2153 = vmatprep.subr.mxu0 0.0
    %2154 = vmatpush1.msra.mxu0 0.0
    %2155 = vmatprep.subr.mxu0 0.0
    %2156 = vmatpush1.msra.mxu0 0.0
    %2157 = vmatprep.subr.mxu0 0.0
    %2158 = vmatpush1.msra.mxu0 0.0
    %2159 = vmatprep.subr.mxu0 0.0
    %2160 = vmatpush1.msra.mxu0 0.0
    %2161 = vmatprep.subr.mxu0 0.0
    %2162 = vmatpush1.msra.mxu0 0.0
    %2163 = vmatprep.subr.mxu0 0.0
    %2164 = vmatpush1.msra.mxu0 0.0
    %2165 = vmatprep.subr.mxu0 0.0
    %2166 = vmatpush1.msra.mxu0 0.0
    %2167 = vmatprep.subr.mxu0 0.0
    %2168 = vmatpush1.msra.mxu0 0.0
    %2169 = vmatprep.subr.mxu0 0.0
    %2170 = vmatpush1.msra.mxu0 0.0
    %2171 = vmatprep.subr.mxu0 0.0
    %2172 = vmatpush1.msra.mxu0 0.0
    %2173 = vmatprep.subr.mxu0 0.0
    %2174 = vmatpush1.msra.mxu0 0.0
    %2175 = vmatprep.subr.mxu0 0.0
    %2176 = vmatpush1.msra.mxu0 0.0
    %2177 = vmatprep.subr.mxu0 0.0
    %2178 = vmatpush1.msra.mxu0 0.0
    %2179 = vmatprep.subr.mxu0 0.0
    %2180 = vmatpush1.msra.mxu0 0.0
    %2181 = vmatprep.subr.mxu0 0.0
    %2182 = vmatpush1.msra.mxu0 0.0
    %2183 = vmatprep.subr.mxu0 0.0
    %2184 = vmatpush1.msra.mxu0 0.0
    %2185 = vmatprep.subr.mxu0 0.0
    %2186 = vmatpush1.msra.mxu0 0.0
    %2187 = vmatprep.mubr.f32.mxu0 0.0
    %2188 = vmatmul.mubr.f32.gmra.mrb[0].mxu0 %v2121
    %v2189 = vpop.f32.mrb[0].mxu0
    %v2190 = vadd.f32 0.0, %v2189
    %v2191 = vpop.f32.mrb[0].mxu0
    %2192 = vdwg.mxu0
    %2194 = vrot.lane.b32.xlu0 %v2190, 12
    %v2195 = vpop.permute.xlu0 %2194
    %2197 = vst.msk [vmem:[#allocation2 + $0x8] sm:$0xff] %vm837, %v2195
    %2198 = vrot.lane.b32.xlu0 %v156, 112
    %v2199 = vpop.permute.xlu0 %2198
    %2200 = vrot.lane.b32.xlu0 %v156, 80
    %v2201 = vpop.permute.xlu0 %2200
    %v2202 = vsel %vm162, %v2199, 0
    %v2204 = vsel %vm162, %v2201, 0
    %2206 = vmatprep.subr.mxu0 0.0
    %2207 = vmatpush1.xpose.msra.mxu0 %v2204
    %2208 = vmatprep.subr.mxu0 0.0
    %2209 = vmatpush1.xpose.msra.mxu0 0.0
    %2210 = vmatprep.subr.mxu0 0.0
    %2211 = vmatpush1.xpose.msra.mxu0 0.0
    %2212 = vmatprep.subr.mxu0 0.0
    %2213 = vmatpush1.xpose.msra.mxu0 0.0
    %2214 = vmatprep.subr.mxu0 0.0
    %2215 = vmatpush1.xpose.msra.mxu0 0.0
    %2216 = vmatprep.subr.mxu0 0.0
    %2217 = vmatpush1.xpose.msra.mxu0 0.0
    %2218 = vmatprep.subr.mxu0 0.0
    %2219 = vmatpush1.xpose.msra.mxu0 0.0
    %2220 = vmatprep.subr.mxu0 0.0
    %2221 = vmatpush1.xpose.msra.mxu0 0.0
    %2222 = vmatprep.subr.mxu0 0.0
    %2223 = vmatpush1.xpose.msra.mxu0 0.0
    %2224 = vmatprep.subr.mxu0 0.0
    %2225 = vmatpush1.xpose.msra.mxu0 0.0
    %2226 = vmatprep.subr.mxu0 0.0
    %2227 = vmatpush1.xpose.msra.mxu0 0.0
    %2228 = vmatprep.subr.mxu0 0.0
    %2229 = vmatpush1.xpose.msra.mxu0 0.0
    %2230 = vmatprep.subr.mxu0 0.0
    %2231 = vmatpush1.xpose.msra.mxu0 0.0
    %2232 = vmatprep.subr.mxu0 0.0
    %2233 = vmatpush1.xpose.msra.mxu0 0.0
    %2234 = vmatprep.subr.mxu0 0.0
    %2235 = vmatpush1.xpose.msra.mxu0 0.0
    %2236 = vmatprep.subr.mxu0 0.0
    %2237 = vmatpush1.xpose.msra.mxu0 0.0
    %2238 = vmatprep.subr.mxu0 0.0
    %2239 = vmatpush1.xpose.msra.mxu0 0.0
    %2240 = vmatprep.subr.mxu0 0.0
    %2241 = vmatpush1.xpose.msra.mxu0 0.0
    %2242 = vmatprep.subr.mxu0 0.0
    %2243 = vmatpush1.xpose.msra.mxu0 0.0
    %2244 = vmatprep.subr.mxu0 0.0
    %2245 = vmatpush1.xpose.msra.mxu0 0.0
    %2246 = vmatprep.subr.mxu0 0.0
    %2247 = vmatpush1.xpose.msra.mxu0 0.0
    %2248 = vmatprep.subr.mxu0 0.0
    %2249 = vmatpush1.xpose.msra.mxu0 0.0
    %2250 = vmatprep.subr.mxu0 0.0
    %2251 = vmatpush1.xpose.msra.mxu0 0.0
    %2252 = vmatprep.subr.mxu0 0.0
    %2253 = vmatpush1.xpose.msra.mxu0 0.0
    %2254 = vmatprep.subr.mxu0 0.0
    %2255 = vmatpush1.xpose.msra.mxu0 0.0
    %2256 = vmatprep.subr.mxu0 0.0
    %2257 = vmatpush1.xpose.msra.mxu0 0.0
    %2258 = vmatprep.subr.mxu0 0.0
    %2259 = vmatpush1.xpose.msra.mxu0 0.0
    %2260 = vmatprep.subr.mxu0 0.0
    %2261 = vmatpush1.xpose.msra.mxu0 0.0
    %2262 = vmatprep.subr.mxu0 0.0
    %2263 = vmatpush1.xpose.msra.mxu0 0.0
    %2264 = vmatprep.subr.mxu0 0.0
    %2265 = vmatpush1.xpose.msra.mxu0 0.0
    %2266 = vmatprep.subr.mxu0 0.0
    %2267 = vmatpush1.xpose.msra.mxu0 0.0
    %2268 = vmatprep.subr.mxu0 0.0
    %2269 = vmatpush1.xpose.msra.mxu0 0.0
    %2270 = vmatprep.mubr.f32.mxu0 0.0
    %2271 = vmatmul.mubr.f32.gmra.mrb[0].mxu0 %v2202
    %v2272 = vpop.f32.mrb[0].mxu0
    %v2273 = vadd.f32 0.0, %v2272
    %v2274 = vpop.f32.mrb[0].mxu0
    %2275 = vdwg.mxu0
    %v2276 = vsel %vm237, %v2273, -inf
    %2277 = vmax.xlane.f32.xlu0 %v2276
    %v2278 = vpop.xlane.xlu0 %2277
    %v2279 = vsub.f32 %v2273, %v2278
    %v2280 = vmul.f32 %v2279, 1.442695
    %v2281 = vpow.pop %v2280
    %v2282 = vsel %vm237, %v2281, 0.0
    %2283 = vadd.xlane.f32.xlu0 %v2282
    %v2284 = vpop.xlane.xlu0 %2283
    %v2285 = vrcp.pop %v2284
    %v2286 = vmul.f32 %v2281, %v2285
    %2287 = vrot.lane.b32.xlu0 %v156, 48
    %v2288 = vpop.permute.xlu0 %2287
    %v2291 = vsel %vm237, %v2286, 0
    %2293 = vmatprep.subr.mxu0 0.0
    %2294 = vmatpush1.msra.mxu0 %v2288
    %2295 = vmatprep.subr.mxu0 0.0
    %2296 = vmatpush1.msra.mxu0 0.0
    %2297 = vmatprep.subr.mxu0 0.0
    %2298 = vmatpush1.msra.mxu0 0.0
    %2299 = vmatprep.subr.mxu0 0.0
    %2300 = vmatpush1.msra.mxu0 0.0
    %2301 = vmatprep.subr.mxu0 0.0
    %2302 = vmatpush1.msra.mxu0 0.0
    %2303 = vmatprep.subr.mxu0 0.0
    %2304 = vmatpush1.msra.mxu0 0.0
    %2305 = vmatprep.subr.mxu0 0.0
    %2306 = vmatpush1.msra.mxu0 0.0
    %2307 = vmatprep.subr.mxu0 0.0
    %2308 = vmatpush1.msra.mxu0 0.0
    %2309 = vmatprep.subr.mxu0 0.0
    %2310 = vmatpush1.msra.mxu0 0.0
    %2311 = vmatprep.subr.mxu0 0.0
    %2312 = vmatpush1.msra.mxu0 0.0
    %2313 = vmatprep.subr.mxu0 0.0
    %2314 = vmatpush1.msra.mxu0 0.0
    %2315 = vmatprep.subr.mxu0 0.0
    %2316 = vmatpush1.msra.mxu0 0.0
    %2317 = vmatprep.subr.mxu0 0.0
    %2318 = vmatpush1.msra.mxu0 0.0
    %2319 = vmatprep.subr.mxu0 0.0
    %2320 = vmatpush1.msra.mxu0 0.0
    %2321 = vmatprep.subr.mxu0 0.0
    %2322 = vmatpush1.msra.mxu0 0.0
    %2323 = vmatprep.subr.mxu0 0.0
    %2324 = vmatpush1.msra.mxu0 0.0
    %2325 = vmatprep.subr.mxu0 0.0
    %2326 = vmatpush1.msra.mxu0 0.0
    %2327 = vmatprep.subr.mxu0 0.0
    %2328 = vmatpush1.msra.mxu0 0.0
    %2329 = vmatprep.subr.mxu0 0.0
    %2330 = vmatpush1.msra.mxu0 0.0
    %2331 = vmatprep.subr.mxu0 0.0
    %2332 = vmatpush1.msra.mxu0 0.0
    %2333 = vmatprep.subr.mxu0 0.0
    %2334 = vmatpush1.msra.mxu0 0.0
    %2335 = vmatprep.subr.mxu0 0.0
    %2336 = vmatpush1.msra.mxu0 0.0
    %2337 = vmatprep.subr.mxu0 0.0
    %2338 = vmatpush1.msra.mxu0 0.0
    %2339 = vmatprep.subr.mxu0 0.0
    %2340 = vmatpush1.msra.mxu0 0.0
    %2341 = vmatprep.subr.mxu0 0.0
    %2342 = vmatpush1.msra.mxu0 0.0
    %2343 = vmatprep.subr.mxu0 0.0
    %2344 = vmatpush1.msra.mxu0 0.0
    %2345 = vmatprep.subr.mxu0 0.0
    %2346 = vmatpush1.msra.mxu0 0.0
    %2347 = vmatprep.subr.mxu0 0.0
    %2348 = vmatpush1.msra.mxu0 0.0
    %2349 = vmatprep.subr.mxu0 0.0
    %2350 = vmatpush1.msra.mxu0 0.0
    %2351 = vmatprep.subr.mxu0 0.0
    %2352 = vmatpush1.msra.mxu0 0.0
    %2353 = vmatprep.subr.mxu0 0.0
    %2354 = vmatpush1.msra.mxu0 0.0
    %2355 = vmatprep.subr.mxu0 0.0
    %2356 = vmatpush1.msra.mxu0 0.0
    %2357 = vmatprep.mubr.f32.mxu0 0.0
    %2358 = vmatmul.mubr.f32.gmra.mrb[0].mxu0 %v2291
    %v2359 = vpop.f32.mrb[0].mxu0
    %v2360 = vadd.f32 0.0, %v2359
    %v2361 = vpop.f32.mrb[0].mxu0
    %2362 = vdwg.mxu0
    %2364 = vrot.lane.b32.xlu0 %v2360, 16
    %v2365 = vpop.permute.xlu0 %2364
    %2367 = vst.msk [vmem:[#allocation2 + $0x8] sm:$0xff] %vm1008, %v2365
    %2368 = vrot.lane.b32.xlu0 %v156, 108
    %v2369 = vpop.permute.xlu0 %2368
    %2370 = vrot.lane.b32.xlu0 %v156, 76
    %v2371 = vpop.permute.xlu0 %2370
    %v2372 = vsel %vm162, %v2369, 0
    %v2374 = vsel %vm162, %v2371, 0
    %2376 = vmatprep.subr.mxu0 0.0
    %2377 = vmatpush1.xpose.msra.mxu0 %v2374
    %2378 = vmatprep.subr.mxu0 0.0
    %2379 = vmatpush1.xpose.msra.mxu0 0.0
    %2380 = vmatprep.subr.mxu0 0.0
    %2381 = vmatpush1.xpose.msra.mxu0 0.0
    %2382 = vmatprep.subr.mxu0 0.0
    %2383 = vmatpush1.xpose.msra.mxu0 0.0
    %2384 = vmatprep.subr.mxu0 0.0
    %2385 = vmatpush1.xpose.msra.mxu0 0.0
    %2386 = vmatprep.subr.mxu0 0.0
    %2387 = vmatpush1.xpose.msra.mxu0 0.0
    %2388 = vmatprep.subr.mxu0 0.0
    %2389 = vmatpush1.xpose.msra.mxu0 0.0
    %2390 = vmatprep.subr.mxu0 0.0
    %2391 = vmatpush1.xpose.msra.mxu0 0.0
    %2392 = vmatprep.subr.mxu0 0.0
    %2393 = vmatpush1.xpose.msra.mxu0 0.0
    %2394 = vmatprep.subr.mxu0 0.0
    %2395 = vmatpush1.xpose.msra.mxu0 0.0
    %2396 = vmatprep.subr.mxu0 0.0
    %2397 = vmatpush1.xpose.msra.mxu0 0.0
    %2398 = vmatprep.subr.mxu0 0.0
    %2399 = vmatpush1.xpose.msra.mxu0 0.0
    %2400 = vmatprep.subr.mxu0 0.0
    %2401 = vmatpush1.xpose.msra.mxu0 0.0
    %2402 = vmatprep.subr.mxu0 0.0
    %2403 = vmatpush1.xpose.msra.mxu0 0.0
    %2404 = vmatprep.subr.mxu0 0.0
    %2405 = vmatpush1.xpose.msra.mxu0 0.0
    %2406 = vmatprep.subr.mxu0 0.0
    %2407 = vmatpush1.xpose.msra.mxu0 0.0
    %2408 = vmatprep.subr.mxu0 0.0
    %2409 = vmatpush1.xpose.msra.mxu0 0.0
    %2410 = vmatprep.subr.mxu0 0.0
    %2411 = vmatpush1.xpose.msra.mxu0 0.0
    %2412 = vmatprep.subr.mxu0 0.0
    %2413 = vmatpush1.xpose.msra.mxu0 0.0
    %2414 = vmatprep.subr.mxu0 0.0
    %2415 = vmatpush1.xpose.msra.mxu0 0.0
    %2416 = vmatprep.subr.mxu0 0.0
    %2417 = vmatpush1.xpose.msra.mxu0 0.0
    %2418 = vmatprep.subr.mxu0 0.0
    %2419 = vmatpush1.xpose.msra.mxu0 0.0
    %2420 = vmatprep.subr.mxu0 0.0
    %2421 = vmatpush1.xpose.msra.mxu0 0.0
    %2422 = vmatprep.subr.mxu0 0.0
    %2423 = vmatpush1.xpose.msra.mxu0 0.0
    %2424 = vmatprep.subr.mxu0 0.0
    %2425 = vmatpush1.xpose.msra.mxu0 0.0
    %2426 = vmatprep.subr.mxu0 0.0
    %2427 = vmatpush1.xpose.msra.mxu0 0.0
    %2428 = vmatprep.subr.mxu0 0.0
    %2429 = vmatpush1.xpose.msra.mxu0 0.0
    %2430 = vmatprep.subr.mxu0 0.0
    %2431 = vmatpush1.xpose.msra.mxu0 0.0
    %2432 = vmatprep.subr.mxu0 0.0
    %2433 = vmatpush1.xpose.msra.mxu0 0.0
    %2434 = vmatprep.subr.mxu0 0.0
    %2435 = vmatpush1.xpose.msra.mxu0 0.0
    %2436 = vmatprep.subr.mxu0 0.0
    %2437 = vmatpush1.xpose.msra.mxu0 0.0
    %2438 = vmatprep.subr.mxu0 0.0
    %2439 = vmatpush1.xpose.msra.mxu0 0.0
    %2440 = vmatprep.mubr.f32.mxu0 0.0
    %2441 = vmatmul.mubr.f32.gmra.mrb[0].mxu0 %v2372
    %v2442 = vpop.f32.mrb[0].mxu0
    %v2443 = vadd.f32 0.0, %v2442
    %v2444 = vpop.f32.mrb[0].mxu0
    %2445 = vdwg.mxu0
    %v2446 = vsel %vm237, %v2443, -inf
    %2447 = vmax.xlane.f32.xlu0 %v2446
    %v2448 = vpop.xlane.xlu0 %2447
    %v2449 = vsub.f32 %v2443, %v2448
    %v2450 = vmul.f32 %v2449, 1.442695
    %v2451 = vpow.pop %v2450
    %v2452 = vsel %vm237, %v2451, 0.0
    %2453 = vadd.xlane.f32.xlu0 %v2452
    %v2454 = vpop.xlane.xlu0 %2453
    %v2455 = vrcp.pop %v2454
    %v2456 = vmul.f32 %v2451, %v2455
    %2457 = vrot.lane.b32.xlu0 %v156, 44
    %v2458 = vpop.permute.xlu0 %2457
    %v2461 = vsel %vm237, %v2456, 0
    %2463 = vmatprep.subr.mxu0 0.0
    %2464 = vmatpush1.msra.mxu0 %v2458
    %2465 = vmatprep.subr.mxu0 0.0
    %2466 = vmatpush1.msra.mxu0 0.0
    %2467 = vmatprep.subr.mxu0 0.0
    %2468 = vmatpush1.msra.mxu0 0.0
    %2469 = vmatprep.subr.mxu0 0.0
    %2470 = vmatpush1.msra.mxu0 0.0
    %2471 = vmatprep.subr.mxu0 0.0
    %2472 = vmatpush1.msra.mxu0 0.0
    %2473 = vmatprep.subr.mxu0 0.0
    %2474 = vmatpush1.msra.mxu0 0.0
    %2475 = vmatprep.subr.mxu0 0.0
    %2476 = vmatpush1.msra.mxu0 0.0
    %2477 = vmatprep.subr.mxu0 0.0
    %2478 = vmatpush1.msra.mxu0 0.0
    %2479 = vmatprep.subr.mxu0 0.0
    %2480 = vmatpush1.msra.mxu0 0.0
    %2481 = vmatprep.subr.mxu0 0.0
    %2482 = vmatpush1.msra.mxu0 0.0
    %2483 = vmatprep.subr.mxu0 0.0
    %2484 = vmatpush1.msra.mxu0 0.0
    %2485 = vmatprep.subr.mxu0 0.0
    %2486 = vmatpush1.msra.mxu0 0.0
    %2487 = vmatprep.subr.mxu0 0.0
    %2488 = vmatpush1.msra.mxu0 0.0
    %2489 = vmatprep.subr.mxu0 0.0
    %2490 = vmatpush1.msra.mxu0 0.0
    %2491 = vmatprep.subr.mxu0 0.0
    %2492 = vmatpush1.msra.mxu0 0.0
    %2493 = vmatprep.subr.mxu0 0.0
    %2494 = vmatpush1.msra.mxu0 0.0
    %2495 = vmatprep.subr.mxu0 0.0
    %2496 = vmatpush1.msra.mxu0 0.0
    %2497 = vmatprep.subr.mxu0 0.0
    %2498 = vmatpush1.msra.mxu0 0.0
    %2499 = vmatprep.subr.mxu0 0.0
    %2500 = vmatpush1.msra.mxu0 0.0
    %2501 = vmatprep.subr.mxu0 0.0
    %2502 = vmatpush1.msra.mxu0 0.0
    %2503 = vmatprep.subr.mxu0 0.0
    %2504 = vmatpush1.msra.mxu0 0.0
    %2505 = vmatprep.subr.mxu0 0.0
    %2506 = vmatpush1.msra.mxu0 0.0
    %2507 = vmatprep.subr.mxu0 0.0
    %2508 = vmatpush1.msra.mxu0 0.0
    %2509 = vmatprep.subr.mxu0 0.0
    %2510 = vmatpush1.msra.mxu0 0.0
    %2511 = vmatprep.subr.mxu0 0.0
    %2512 = vmatpush1.msra.mxu0 0.0
    %2513 = vmatprep.subr.mxu0 0.0
    %2514 = vmatpush1.msra.mxu0 0.0
    %2515 = vmatprep.subr.mxu0 0.0
    %2516 = vmatpush1.msra.mxu0 0.0
    %2517 = vmatprep.subr.mxu0 0.0
    %2518 = vmatpush1.msra.mxu0 0.0
    %2519 = vmatprep.subr.mxu0 0.0
    %2520 = vmatpush1.msra.mxu0 0.0
    %2521 = vmatprep.subr.mxu0 0.0
    %2522 = vmatpush1.msra.mxu0 0.0
    %2523 = vmatprep.subr.mxu0 0.0
    %2524 = vmatpush1.msra.mxu0 0.0
    %2525 = vmatprep.subr.mxu0 0.0
    %2526 = vmatpush1.msra.mxu0 0.0
    %2527 = vmatprep.mubr.f32.mxu0 0.0
    %2528 = vmatmul.mubr.f32.gmra.mrb[0].mxu0 %v2461
    %v2529 = vpop.f32.mrb[0].mxu0
    %v2530 = vadd.f32 0.0, %v2529
    %v2531 = vpop.f32.mrb[0].mxu0
    %2532 = vdwg.mxu0
    %2534 = vrot.lane.b32.xlu0 %v2530, 20
    %v2535 = vpop.permute.xlu0 %2534
    %2537 = vst.msk [vmem:[#allocation2 + $0x8] sm:$0xff] %vm1179, %v2535
    %2538 = vrot.lane.b32.xlu0 %v156, 104
    %v2539 = vpop.permute.xlu0 %2538
    %2540 = vrot.lane.b32.xlu0 %v156, 72
    %v2541 = vpop.permute.xlu0 %2540
    %v2542 = vsel %vm162, %v2539, 0
    %v2544 = vsel %vm162, %v2541, 0
    %2546 = vmatprep.subr.mxu0 0.0
    %2547 = vmatpush1.xpose.msra.mxu0 %v2544
    %2548 = vmatprep.subr.mxu0 0.0
    %2549 = vmatpush1.xpose.msra.mxu0 0.0
    %2550 = vmatprep.subr.mxu0 0.0
    %2551 = vmatpush1.xpose.msra.mxu0 0.0
    %2552 = vmatprep.subr.mxu0 0.0
    %2553 = vmatpush1.xpose.msra.mxu0 0.0
    %2554 = vmatprep.subr.mxu0 0.0
    %2555 = vmatpush1.xpose.msra.mxu0 0.0
    %2556 = vmatprep.subr.mxu0 0.0
    %2557 = vmatpush1.xpose.msra.mxu0 0.0
    %2558 = vmatprep.subr.mxu0 0.0
    %2559 = vmatpush1.xpose.msra.mxu0 0.0
    %2560 = vmatprep.subr.mxu0 0.0
    %2561 = vmatpush1.xpose.msra.mxu0 0.0
    %2562 = vmatprep.subr.mxu0 0.0
    %2563 = vmatpush1.xpose.msra.mxu0 0.0
    %2564 = vmatprep.subr.mxu0 0.0
    %2565 = vmatpush1.xpose.msra.mxu0 0.0
    %2566 = vmatprep.subr.mxu0 0.0
    %2567 = vmatpush1.xpose.msra.mxu0 0.0
    %2568 = vmatprep.subr.mxu0 0.0
    %2569 = vmatpush1.xpose.msra.mxu0 0.0
    %2570 = vmatprep.subr.mxu0 0.0
    %2571 = vmatpush1.xpose.msra.mxu0 0.0
    %2572 = vmatprep.subr.mxu0 0.0
    %2573 = vmatpush1.xpose.msra.mxu0 0.0
    %2574 = vmatprep.subr.mxu0 0.0
    %2575 = vmatpush1.xpose.msra.mxu0 0.0
    %2576 = vmatprep.subr.mxu0 0.0
    %2577 = vmatpush1.xpose.msra.mxu0 0.0
    %2578 = vmatprep.subr.mxu0 0.0
    %2579 = vmatpush1.xpose.msra.mxu0 0.0
    %2580 = vmatprep.subr.mxu0 0.0
    %2581 = vmatpush1.xpose.msra.mxu0 0.0
    %2582 = vmatprep.subr.mxu0 0.0
    %2583 = vmatpush1.xpose.msra.mxu0 0.0
    %2584 = vmatprep.subr.mxu0 0.0
    %2585 = vmatpush1.xpose.msra.mxu0 0.0
    %2586 = vmatprep.subr.mxu0 0.0
    %2587 = vmatpush1.xpose.msra.mxu0 0.0
    %2588 = vmatprep.subr.mxu0 0.0
    %2589 = vmatpush1.xpose.msra.mxu0 0.0
    %2590 = vmatprep.subr.mxu0 0.0
    %2591 = vmatpush1.xpose.msra.mxu0 0.0
    %2592 = vmatprep.subr.mxu0 0.0
    %2593 = vmatpush1.xpose.msra.mxu0 0.0
    %2594 = vmatprep.subr.mxu0 0.0
    %2595 = vmatpush1.xpose.msra.mxu0 0.0
    %2596 = vmatprep.subr.mxu0 0.0
    %2597 = vmatpush1.xpose.msra.mxu0 0.0
    %2598 = vmatprep.subr.mxu0 0.0
    %2599 = vmatpush1.xpose.msra.mxu0 0.0
    %2600 = vmatprep.subr.mxu0 0.0
    %2601 = vmatpush1.xpose.msra.mxu0 0.0
    %2602 = vmatprep.subr.mxu0 0.0
    %2603 = vmatpush1.xpose.msra.mxu0 0.0
    %2604 = vmatprep.subr.mxu0 0.0
    %2605 = vmatpush1.xpose.msra.mxu0 0.0
    %2606 = vmatprep.subr.mxu0 0.0
    %2607 = vmatpush1.xpose.msra.mxu0 0.0
    %2608 = vmatprep.subr.mxu0 0.0
    %2609 = vmatpush1.xpose.msra.mxu0 0.0
    %2610 = vmatprep.mubr.f32.mxu0 0.0
    %2611 = vmatmul.mubr.f32.gmra.mrb[0].mxu0 %v2542
    %v2612 = vpop.f32.mrb[0].mxu0
    %v2613 = vadd.f32 0.0, %v2612
    %v2614 = vpop.f32.mrb[0].mxu0
    %2615 = vdwg.mxu0
    %v2616 = vsel %vm237, %v2613, -inf
    %2617 = vmax.xlane.f32.xlu0 %v2616
    %v2618 = vpop.xlane.xlu0 %2617
    %v2619 = vsub.f32 %v2613, %v2618
    %v2620 = vmul.f32 %v2619, 1.442695
    %v2621 = vpow.pop %v2620
    %v2622 = vsel %vm237, %v2621, 0.0
    %2623 = vadd.xlane.f32.xlu0 %v2622
    %v2624 = vpop.xlane.xlu0 %2623
    %v2625 = vrcp.pop %v2624
    %v2626 = vmul.f32 %v2621, %v2625
    %2627 = vrot.lane.b32.xlu0 %v156, 40
    %v2628 = vpop.permute.xlu0 %2627
    %v2631 = vsel %vm237, %v2626, 0
    %2633 = vmatprep.subr.mxu0 0.0
    %2634 = vmatpush1.msra.mxu0 %v2628
    %2635 = vmatprep.subr.mxu0 0.0
    %2636 = vmatpush1.msra.mxu0 0.0
    %2637 = vmatprep.subr.mxu0 0.0
    %2638 = vmatpush1.msra.mxu0 0.0
    %2639 = vmatprep.subr.mxu0 0.0
    %2640 = vmatpush1.msra.mxu0 0.0
    %2641 = vmatprep.subr.mxu0 0.0
    %2642 = vmatpush1.msra.mxu0 0.0
    %2643 = vmatprep.subr.mxu0 0.0
    %2644 = vmatpush1.msra.mxu0 0.0
    %2645 = vmatprep.subr.mxu0 0.0
    %2646 = vmatpush1.msra.mxu0 0.0
    %2647 = vmatprep.subr.mxu0 0.0
    %2648 = vmatpush1.msra.mxu0 0.0
    %2649 = vmatprep.subr.mxu0 0.0
    %2650 = vmatpush1.msra.mxu0 0.0
    %2651 = vmatprep.subr.mxu0 0.0
    %2652 = vmatpush1.msra.mxu0 0.0
    %2653 = vmatprep.subr.mxu0 0.0
    %2654 = vmatpush1.msra.mxu0 0.0
    %2655 = vmatprep.subr.mxu0 0.0
    %2656 = vmatpush1.msra.mxu0 0.0
    %2657 = vmatprep.subr.mxu0 0.0
    %2658 = vmatpush1.msra.mxu0 0.0
    %2659 = vmatprep.subr.mxu0 0.0
    %2660 = vmatpush1.msra.mxu0 0.0
    %2661 = vmatprep.subr.mxu0 0.0
    %2662 = vmatpush1.msra.mxu0 0.0
    %2663 = vmatprep.subr.mxu0 0.0
    %2664 = vmatpush1.msra.mxu0 0.0
    %2665 = vmatprep.subr.mxu0 0.0
    %2666 = vmatpush1.msra.mxu0 0.0
    %2667 = vmatprep.subr.mxu0 0.0
    %2668 = vmatpush1.msra.mxu0 0.0
    %2669 = vmatprep.subr.mxu0 0.0
    %2670 = vmatpush1.msra.mxu0 0.0
    %2671 = vmatprep.subr.mxu0 0.0
    %2672 = vmatpush1.msra.mxu0 0.0
    %2673 = vmatprep.subr.mxu0 0.0
    %2674 = vmatpush1.msra.mxu0 0.0
    %2675 = vmatprep.subr.mxu0 0.0
    %2676 = vmatpush1.msra.mxu0 0.0
    %2677 = vmatprep.subr.mxu0 0.0
    %2678 = vmatpush1.msra.mxu0 0.0
    %2679 = vmatprep.subr.mxu0 0.0
    %2680 = vmatpush1.msra.mxu0 0.0
    %2681 = vmatprep.subr.mxu0 0.0
    %2682 = vmatpush1.msra.mxu0 0.0
    %2683 = vmatprep.subr.mxu0 0.0
    %2684 = vmatpush1.msra.mxu0 0.0
    %2685 = vmatprep.subr.mxu0 0.0
    %2686 = vmatpush1.msra.mxu0 0.0
    %2687 = vmatprep.subr.mxu0 0.0
    %2688 = vmatpush1.msra.mxu0 0.0
    %2689 = vmatprep.subr.mxu0 0.0
    %2690 = vmatpush1.msra.mxu0 0.0
    %2691 = vmatprep.subr.mxu0 0.0
    %2692 = vmatpush1.msra.mxu0 0.0
    %2693 = vmatprep.subr.mxu0 0.0
    %2694 = vmatpush1.msra.mxu0 0.0
    %2695 = vmatprep.subr.mxu0 0.0
    %2696 = vmatpush1.msra.mxu0 0.0
    %2697 = vmatprep.mubr.f32.mxu0 0.0
    %2698 = vmatmul.mubr.f32.gmra.mrb[0].mxu0 %v2631
    %v2699 = vpop.f32.mrb[0].mxu0
    %v2700 = vadd.f32 0.0, %v2699
    %v2701 = vpop.f32.mrb[0].mxu0
    %2702 = vdwg.mxu0
    %2704 = vrot.lane.b32.xlu0 %v2700, 24
    %v2705 = vpop.permute.xlu0 %2704
    %2707 = vst.msk [vmem:[#allocation2 + $0x8] sm:$0xff] %vm1350, %v2705
    %2708 = vrot.lane.b32.xlu0 %v156, 100
    %v2709 = vpop.permute.xlu0 %2708
    %2710 = vrot.lane.b32.xlu0 %v156, 68
    %v2711 = vpop.permute.xlu0 %2710
    %v2712 = vsel %vm162, %v2709, 0
    %v2714 = vsel %vm162, %v2711, 0
    %2716 = vmatprep.subr.mxu0 0.0
    %2717 = vmatpush1.xpose.msra.mxu0 %v2714
    %2718 = vmatprep.subr.mxu0 0.0
    %2719 = vmatpush1.xpose.msra.mxu0 0.0
    %2720 = vmatprep.subr.mxu0 0.0
    %2721 = vmatpush1.xpose.msra.mxu0 0.0
    %2722 = vmatprep.subr.mxu0 0.0
    %2723 = vmatpush1.xpose.msra.mxu0 0.0
    %2724 = vmatprep.subr.mxu0 0.0
    %2725 = vmatpush1.xpose.msra.mxu0 0.0
    %2726 = vmatprep.subr.mxu0 0.0
    %2727 = vmatpush1.xpose.msra.mxu0 0.0
    %2728 = vmatprep.subr.mxu0 0.0
    %2729 = vmatpush1.xpose.msra.mxu0 0.0
    %2730 = vmatprep.subr.mxu0 0.0
    %2731 = vmatpush1.xpose.msra.mxu0 0.0
    %2732 = vmatprep.subr.mxu0 0.0
    %2733 = vmatpush1.xpose.msra.mxu0 0.0
    %2734 = vmatprep.subr.mxu0 0.0
    %2735 = vmatpush1.xpose.msra.mxu0 0.0
    %2736 = vmatprep.subr.mxu0 0.0
    %2737 = vmatpush1.xpose.msra.mxu0 0.0
    %2738 = vmatprep.subr.mxu0 0.0
    %2739 = vmatpush1.xpose.msra.mxu0 0.0
    %2740 = vmatprep.subr.mxu0 0.0
    %2741 = vmatpush1.xpose.msra.mxu0 0.0
    %2742 = vmatprep.subr.mxu0 0.0
    %2743 = vmatpush1.xpose.msra.mxu0 0.0
    %2744 = vmatprep.subr.mxu0 0.0
    %2745 = vmatpush1.xpose.msra.mxu0 0.0
    %2746 = vmatprep.subr.mxu0 0.0
    %2747 = vmatpush1.xpose.msra.mxu0 0.0
    %2748 = vmatprep.subr.mxu0 0.0
    %2749 = vmatpush1.xpose.msra.mxu0 0.0
    %2750 = vmatprep.subr.mxu0 0.0
    %2751 = vmatpush1.xpose.msra.mxu0 0.0
    %2752 = vmatprep.subr.mxu0 0.0
    %2753 = vmatpush1.xpose.msra.mxu0 0.0
    %2754 = vmatprep.subr.mxu0 0.0
    %2755 = vmatpush1.xpose.msra.mxu0 0.0
    %2756 = vmatprep.subr.mxu0 0.0
    %2757 = vmatpush1.xpose.msra.mxu0 0.0
    %2758 = vmatprep.subr.mxu0 0.0
    %2759 = vmatpush1.xpose.msra.mxu0 0.0
    %2760 = vmatprep.subr.mxu0 0.0
    %2761 = vmatpush1.xpose.msra.mxu0 0.0
    %2762 = vmatprep.subr.mxu0 0.0
    %2763 = vmatpush1.xpose.msra.mxu0 0.0
    %2764 = vmatprep.subr.mxu0 0.0
    %2765 = vmatpush1.xpose.msra.mxu0 0.0
    %2766 = vmatprep.subr.mxu0 0.0
    %2767 = vmatpush1.xpose.msra.mxu0 0.0
    %2768 = vmatprep.subr.mxu0 0.0
    %2769 = vmatpush1.xpose.msra.mxu0 0.0
    %2770 = vmatprep.subr.mxu0 0.0
    %2771 = vmatpush1.xpose.msra.mxu0 0.0
    %2772 = vmatprep.subr.mxu0 0.0
    %2773 = vmatpush1.xpose.msra.mxu0 0.0
    %2774 = vmatprep.subr.mxu0 0.0
    %2775 = vmatpush1.xpose.msra.mxu0 0.0
    %2776 = vmatprep.subr.mxu0 0.0
    %2777 = vmatpush1.xpose.msra.mxu0 0.0
    %2778 = vmatprep.subr.mxu0 0.0
    %2779 = vmatpush1.xpose.msra.mxu0 0.0
    %2780 = vmatprep.mubr.f32.mxu0 0.0
    %2781 = vmatmul.mubr.f32.gmra.mrb[0].mxu0 %v2712
    %v2782 = vpop.f32.mrb[0].mxu0
    %v2783 = vadd.f32 0.0, %v2782
    %v2784 = vpop.f32.mrb[0].mxu0
    %2785 = vdwg.mxu0
    %v2786 = vsel %vm237, %v2783, -inf
    %2787 = vmax.xlane.f32.xlu0 %v2786
    %v2788 = vpop.xlane.xlu0 %2787
    %v2789 = vsub.f32 %v2783, %v2788
    %v2790 = vmul.f32 %v2789, 1.442695
    %v2791 = vpow.pop %v2790
    %v2792 = vsel %vm237, %v2791, 0.0
    %2793 = vadd.xlane.f32.xlu0 %v2792
    %v2794 = vpop.xlane.xlu0 %2793
    %v2795 = vrcp.pop %v2794
    %v2796 = vmul.f32 %v2791, %v2795
    %2797 = vrot.lane.b32.xlu0 %v156, 36
    %v2798 = vpop.permute.xlu0 %2797
    %v2801 = vsel %vm237, %v2796, 0
    %2803 = vmatprep.subr.mxu0 0.0
    %2804 = vmatpush1.msra.mxu0 %v2798
    %2805 = vmatprep.subr.mxu0 0.0
    %2806 = vmatpush1.msra.mxu0 0.0
    %2807 = vmatprep.subr.mxu0 0.0
    %2808 = vmatpush1.msra.mxu0 0.0
    %2809 = vmatprep.subr.mxu0 0.0
    %2810 = vmatpush1.msra.mxu0 0.0
    %2811 = vmatprep.subr.mxu0 0.0
    %2812 = vmatpush1.msra.mxu0 0.0
    %2813 = vmatprep.subr.mxu0 0.0
    %2814 = vmatpush1.msra.mxu0 0.0
    %2815 = vmatprep.subr.mxu0 0.0
    %2816 = vmatpush1.msra.mxu0 0.0
    %2817 = vmatprep.subr.mxu0 0.0
    %2818 = vmatpush1.msra.mxu0 0.0
    %2819 = vmatprep.subr.mxu0 0.0
    %2820 = vmatpush1.msra.mxu0 0.0
    %2821 = vmatprep.subr.mxu0 0.0
    %2822 = vmatpush1.msra.mxu0 0.0
    %2823 = vmatprep.subr.mxu0 0.0
    %2824 = vmatpush1.msra.mxu0 0.0
    %2825 = vmatprep.subr.mxu0 0.0
    %2826 = vmatpush1.msra.mxu0 0.0
    %2827 = vmatprep.subr.mxu0 0.0
    %2828 = vmatpush1.msra.mxu0 0.0
    %2829 = vmatprep.subr.mxu0 0.0
    %2830 = vmatpush1.msra.mxu0 0.0
    %2831 = vmatprep.subr.mxu0 0.0
    %2832 = vmatpush1.msra.mxu0 0.0
    %2833 = vmatprep.subr.mxu0 0.0
    %2834 = vmatpush1.msra.mxu0 0.0
    %2835 = vmatprep.subr.mxu0 0.0
    %2836 = vmatpush1.msra.mxu0 0.0
    %2837 = vmatprep.subr.mxu0 0.0
    %2838 = vmatpush1.msra.mxu0 0.0
    %2839 = vmatprep.subr.mxu0 0.0
    %2840 = vmatpush1.msra.mxu0 0.0
    %2841 = vmatprep.subr.mxu0 0.0
    %2842 = vmatpush1.msra.mxu0 0.0
    %2843 = vmatprep.subr.mxu0 0.0
    %2844 = vmatpush1.msra.mxu0 0.0
    %2845 = vmatprep.subr.mxu0 0.0
    %2846 = vmatpush1.msra.mxu0 0.0
    %2847 = vmatprep.subr.mxu0 0.0
    %2848 = vmatpush1.msra.mxu0 0.0
    %2849 = vmatprep.subr.mxu0 0.0
    %2850 = vmatpush1.msra.mxu0 0.0
    %2851 = vmatprep.subr.mxu0 0.0
    %2852 = vmatpush1.msra.mxu0 0.0
    %2853 = vmatprep.subr.mxu0 0.0
    %2854 = vmatpush1.msra.mxu0 0.0
    %2855 = vmatprep.subr.mxu0 0.0
    %2856 = vmatpush1.msra.mxu0 0.0
    %2857 = vmatprep.subr.mxu0 0.0
    %2858 = vmatpush1.msra.mxu0 0.0
    %2859 = vmatprep.subr.mxu0 0.0
    %2860 = vmatpush1.msra.mxu0 0.0
    %2861 = vmatprep.subr.mxu0 0.0
    %2862 = vmatpush1.msra.mxu0 0.0
    %2863 = vmatprep.subr.mxu0 0.0
    %2864 = vmatpush1.msra.mxu0 0.0
    %2865 = vmatprep.subr.mxu0 0.0
    %2866 = vmatpush1.msra.mxu0 0.0
    %2867 = vmatprep.mubr.f32.mxu0 0.0
    %2868 = vmatmul.mubr.f32.gmra.mrb[0].mxu0 %v2801
    %v2869 = vpop.f32.mrb[0].mxu0
    %v2870 = vadd.f32 0.0, %v2869
    %v2871 = vpop.f32.mrb[0].mxu0
    %2872 = vdwg.mxu0
    %2874 = vrot.lane.b32.xlu0 %v2870, 28
    %v2875 = vpop.permute.xlu0 %2874
    %2877 = vst.msk [vmem:[#allocation2 + $0x8] sm:$0xff] %vm1521, %v2875
    %v2878 = vld [vmem:[#allocation2] sm:$0xff]
    %v2879 = vld [vmem:[#allocation2 + $0x8] sm:$0xff]
    %v2880 = vld [vmem:[#allocation8] sm:$0xff]
    %v2881 = vld [vmem:[#allocation8 + $0x8] sm:$0xff]
    %v2882 = vld [vmem:[#allocation8 + $0x10] sm:$0xff]
    %v2883 = vld [vmem:[#allocation8 + $0x18] sm:$0xff]
    %v2884 = vld [vmem:[#allocation9] sm:$0x1]
    %v2886 = vlaneseq
    %v2887 = vshrl.u32 %v2886, 7
    %v2888 = vsub.s32 0, %v2887
    %v2889 = vrot.slane %v2884, %v2888
    %v2892 = vsel %vm77, %v2878, 0
    %v2895 = vsel %vm77, %v2879, 0
    %2897 = vmatprep.subr.mxu0 0.0
    %2898 = vmatpush1.msra.mxu0 %v2880
    %2899 = vmatprep.subr.mxu0 0.0
    %2900 = vmatpush1.msra.mxu0 %v2881
    %2901 = vmatprep.subr.mxu0 0.0
    %2902 = vmatpush1.msra.mxu0 %v2882
    %2903 = vmatprep.subr.mxu0 0.0
    %2904 = vmatpush1.msra.mxu0 %v2883
    %2905 = vmatprep.subr.mxu0 0.0
    %2906 = vmatpush1.msra.mxu0 0.0
    %2907 = vmatprep.subr.mxu0 0.0
    %2908 = vmatpush1.msra.mxu0 0.0
    %2909 = vmatprep.subr.mxu0 0.0
    %2910 = vmatpush1.msra.mxu0 0.0
    %2911 = vmatprep.subr.mxu0 0.0
    %2912 = vmatpush1.msra.mxu0 0.0
    %2913 = vmatprep.subr.mxu0 0.0
    %2914 = vmatpush1.msra.mxu0 0.0
    %2915 = vmatprep.subr.mxu0 0.0
    %2916 = vmatpush1.msra.mxu0 0.0
    %2917 = vmatprep.subr.mxu0 0.0
    %2918 = vmatpush1.msra.mxu0 0.0
    %2919 = vmatprep.subr.mxu0 0.0
    %2920 = vmatpush1.msra.mxu0 0.0
    %2921 = vmatprep.subr.mxu0 0.0
    %2922 = vmatpush1.msra.mxu0 0.0
    %2923 = vmatprep.subr.mxu0 0.0
    %2924 = vmatpush1.msra.mxu0 0.0
    %2925 = vmatprep.subr.mxu0 0.0
    %2926 = vmatpush1.msra.mxu0 0.0
    %2927 = vmatprep.subr.mxu0 0.0
    %2928 = vmatpush1.msra.mxu0 0.0
    %2929 = vmatprep.subr.mxu0 0.0
    %2930 = vmatpush1.msra.mxu0 0.0
    %2931 = vmatprep.subr.mxu0 0.0
    %2932 = vmatpush1.msra.mxu0 0.0
    %2933 = vmatprep.subr.mxu0 0.0
    %2934 = vmatpush1.msra.mxu0 0.0
    %2935 = vmatprep.subr.mxu0 0.0
    %2936 = vmatpush1.msra.mxu0 0.0
    %2937 = vmatprep.subr.mxu0 0.0
    %2938 = vmatpush1.msra.mxu0 0.0
    %2939 = vmatprep.subr.mxu0 0.0
    %2940 = vmatpush1.msra.mxu0 0.0
    %2941 = vmatprep.subr.mxu0 0.0
    %2942 = vmatpush1.msra.mxu0 0.0
    %2943 = vmatprep.subr.mxu0 0.0
    %2944 = vmatpush1.msra.mxu0 0.0
    %2945 = vmatprep.subr.mxu0 0.0
    %2946 = vmatpush1.msra.mxu0 0.0
    %2947 = vmatprep.subr.mxu0 0.0
    %2948 = vmatpush1.msra.mxu0 0.0
    %2949 = vmatprep.subr.mxu0 0.0
    %2950 = vmatpush1.msra.mxu0 0.0
    %2951 = vmatprep.subr.mxu0 0.0
    %2952 = vmatpush1.msra.mxu0 0.0
    %2953 = vmatprep.subr.mxu0 0.0
    %2954 = vmatpush1.msra.mxu0 0.0
    %2955 = vmatprep.subr.mxu0 0.0
    %2956 = vmatpush1.msra.mxu0 0.0
    %2957 = vmatprep.subr.mxu0 0.0
    %2958 = vmatpush1.msra.mxu0 0.0
    %2959 = vmatprep.subr.mxu0 0.0
    %2960 = vmatpush1.msra.mxu0 0.0
    %2961 = vmatprep.mubr.f32.mxu0 0.0
    %2962 = vmatmul.mubr.f32.gmra.mrb[0].mxu0 %v2892
    %v2963 = vpop.f32.mrb[0].mxu0
    %v2964 = vadd.f32 %v2889, %v2963
    %v2965 = vpop.f32.mrb[0].mxu0
    %2966 = vmatprep.mubr.f32.mxu0 0.0
    %2967 = vmatmul.mubr.f32.gmra.mrb[0].mxu0 %v2895
    %v2968 = vpop.f32.mrb[0].mxu0
    %v2969 = vadd.f32 %v2889, %v2968
    %v2970 = vpop.f32.mrb[0].mxu0
    %2971 = vdwg.mxu0
    %2972 = vst.msk [vmem:[#allocation11] sm:$0xff] %vm77, %v2964
    %2973 = vst.msk [vmem:[#allocation11 + $0x8] sm:$0xff] %vm77, %v2969
    // Predicated region
    $region34: #{tpu_custom_call.1} parent=1 // pred_check
      _
    $region35: #{tpu_custom_call.1} parent=1 // pred_check_branch
      %2975 = sbr.rel (0) target = $region37
    $region36: #{tpu_custom_call.1} parent=1 // pred_region
      %s2977 = ssub.s32 256, 256
      %2978 = vsyncadd [#allocation5], %s2977
      %s2979 = sshll.u32 [#allocation11], 4
      %s2980 = int_to_ptr.vmem [resolvable:$true] %s2979
      %2985 = dma.vmem_to_hbm [thread:$0]  %s2980, 256, %s4, [#allocation5], 128, 128, 8
    $region37: #{tpu_custom_call.1} parent=1 // pred_fallthru
      _
    // Predicated region
    $region38: #{tpu_custom_call.1} parent=1 // pred_check
      _
    $region39: #{tpu_custom_call.1} parent=1 // pred_check_branch
      %2987 = sbr.rel (0) target = $region41
    $region40: #{tpu_custom_call.1} parent=1 // pred_region
      %2988 = dma.done [#allocation5], 256
    $region41: #{tpu_custom_call.1} parent=1 // pred_fallthru
      _
    %2989 = vsyncpa [#allocation4], 1
    %2990 = vsyncpa [#allocation7], 1
    %2991 = vsyncpa [#allocation10], 1
    %2992 = vsyncpa [#allocation5], 1

</llo_original>
